<compile_context>
chip_gen: v6e
topology: v6e:2x2x1
jax: 0.10.0
libtpu: 0.0.40
codegen_flags: <defaults>
</compile_context>

<pallas_src>
import functools

import jax
import jax.numpy as jnp
from jax.experimental import pallas as pl
from jax.experimental.pallas import tpu as pltpu

LN_EPS = 1e-5  # torch.nn.LayerNorm default


def _gelu_tanh(x):
    # torch.nn.GELU(approximate='tanh'): tanh lowers to the EUP slot.
    # TODO(synk): swap back to an exact-erf GELU if a tighter accuracy budget
    # than ~1e-3 vs torch's exact GELU is ever required.
    c = 0.7978845608028654  # sqrt(2/pi)
    return 0.5 * x * (1.0 + jnp.tanh(c * (x + 0.044715 * (x * x * x))))


def _layer_norm(v, g, b):
    mu = jnp.mean(v, axis=-1, keepdims=True)
    var = jnp.mean(jnp.square(v - mu), axis=-1, keepdims=True)
    return (v - mu) * jax.lax.rsqrt(var + LN_EPS) * g + b


def transformer_block_kernel(x_ref, ln1g_ref, ln1b_ref, wqkv_ref,
                             wproj_ref, bproj_ref, ln2g_ref, ln2b_ref,
                             w1_ref, b1_ref, w2_ref, b2_ref,
                             o_ref, *, num_heads, head_dim):
    """One batch element per grid step.  LN / softmax / GELU / residuals in f32,
    every matmul fed with bf16 operands and accumulated in f32 on the MXU."""
    x = x_ref[0]                       # (N, C) float32
    N = x.shape[0]
    H, Dh = num_heads, head_dim
    C = H * Dh

    # ---- LayerNorm 1 (f32) ----
    xn = _layer_norm(x, ln1g_ref[0], ln1b_ref[0])

    # ---- QKV projection: one big bf16 MXU matmul, f32 accumulate ----
    # (1/sqrt(Dh) is already folded into the Q columns of wqkv.)
    qkv = jnp.dot(xn.astype(jnp.bfloat16), wqkv_ref[...],
                  preferred_element_type=jnp.float32)          # (N, 3C) f32
    qkv = qkv.astype(jnp.bfloat16).reshape(N, 3 * H, Dh)       # single relayout

    def heads(t):                                              # (N, H, Dh) -> (H, N, Dh)
        return t.transpose(1, 0, 2)

    qh = heads(qkv[:, 0 * H:1 * H])
    kh = heads(qkv[:, 1 * H:2 * H])
    vh = heads(qkv[:, 2 * H:3 * H])

    # ---- head-batched attention: one batched dot_general per stage ----
    s = jnp.einsum('hqd,hkd->hqk', qh, kh,
                   preferred_element_type=jnp.float32)         # (H, N, N) f32
    m = jnp.max(s, axis=-1, keepdims=True)
    p = jnp.exp(s - m)
    l = jnp.sum(p, axis=-1, keepdims=True)                     # (H, N, 1)
    o_un = jnp.einsum('hqk,hkd->hqd', p.astype(jnp.bfloat16), vh,
                      preferred_element_type=jnp.float32)      # (H, N, Dh)
    o_h = o_un * pl.reciprocal(l, approx=True)                 # deferred norm (EUP)

    # merge heads back to token-major (N, C): one transpose + reshape
    attn = o_h.transpose(1, 0, 2).reshape(N, C)

    y = jnp.dot(attn.astype(jnp.bfloat16), wproj_ref[...],
                preferred_element_type=jnp.float32) + bproj_ref[0]
    x1 = x + y                                                 # residual in f32

    # ---- LayerNorm 2 + MLP (Linear -> tanh GELU -> Linear) + residual ----
    xn2 = _layer_norm(x1, ln2g_ref[0], ln2b_ref[0])
    hdn = jnp.dot(xn2.astype(jnp.bfloat16), w1_ref[...],
                  preferred_element_type=jnp.float32) + b1_ref[0]
    hdn = _gelu_tanh(hdn)
    y2 = jnp.dot(hdn.astype(jnp.bfloat16), w2_ref[...],
                 preferred_element_type=jnp.float32) + b2_ref[0]

    o_ref[0] = x1 + y2


def prepare_params(params, num_heads):
    """One-time parameter prep (do this OUTSIDE the per-call forward):
    fold the 1/sqrt(Dh) attention scale into the Q columns of w_qkv and cast the
    matmul weights to bf16 so each forward pays zero weight-conversion HBM traffic."""
    C = params["w_qkv"].shape[0]
    Dh = C // num_heads
    scale = Dh ** (-0.5)
    w_qkv = params["w_qkv"].at[:, :C].multiply(scale)   # scale only the Q block
    prepped = dict(params)
    prepped["w_qkv"] = w_qkv.astype(jnp.bfloat16)
    prepped["w_proj"] = params["w_proj"].astype(jnp.bfloat16)
    prepped["w1"] = params["w1"].astype(jnp.bfloat16)
    prepped["w2"] = params["w2"].astype(jnp.bfloat16)
    return prepped


def _vmem_limit_bytes(N, C, H, hidden, weight_buffers):
    try:
        cap = int(pltpu.get_tpu_info().vmem_capacity_bytes)
    except Exception:
        cap = 64 << 20   # conservative (v7x-class) fallback
    w_bytes = weight_buffers * 2 * (C * 3 * C + C * C + 2 * C * hidden)   # bf16 weights
    io_bytes = 2 * 2 * N * C * 4                                          # x/out, double-buffered
    act_bytes = 4 * (3 * N * 3 * C + 2 * H * N * N + 2 * N * hidden + 4 * N * C)
    small_bytes = 2 * 4 * (6 * C + hidden)
    budget = w_bytes + io_bytes + act_bytes + small_bytes + (4 << 20)
    return int(min(int(0.9 * cap), max(32 << 20, budget)))


def _make_call(B, N, C, hidden, out_dtype, kernel, single_buffer_weights, vmem_limit):
    def whole(shape):
        # grid-invariant parameter: same full block every grid step
        idx = lambda b: (0,) * len(shape)
        if single_buffer_weights:
            return pl.BlockSpec(shape, idx, pipeline_mode=pl.Buffered(1))
        return pl.BlockSpec(shape, idx)

    in_specs = [
        pl.BlockSpec((1, N, C), lambda b: (b, 0, 0)),   # x
        whole((1, C)), whole((1, C)),                   # ln1 gamma/beta (f32)
        whole((C, 3 * C)),                              # qkv weight (bf16, Q pre-scaled)
        whole((C, C)), whole((1, C)),                   # proj weight (bf16) / bias (f32)
        whole((1, C)), whole((1, C)),                   # ln2 gamma/beta (f32)
        whole((C, hidden)), whole((1, hidden)),         # mlp fc1 weight (bf16) / bias (f32)
        whole((hidden, C)), whole((1, C)),              # mlp fc2 weight (bf16) / bias (f32)
    ]
    return pl.pallas_call(
        kernel,
        out_shape=jax.ShapeDtypeStruct((B, N, C), out_dtype),
        grid=(B,),
        in_specs=in_specs,
        out_specs=pl.BlockSpec((1, N, C), lambda b: (b, 0, 0)),
        compiler_params=pltpu.CompilerParams(
            dimension_semantics=("parallel",),
            vmem_limit_bytes=vmem_limit),
    )


def transformer_forward(x, prepped, num_heads):
    """Forward pass.  `prepped` must come from prepare_params()."""
    B, N, C = x.shape
    assert C % num_heads == 0
    head_dim = C // num_heads
    hidden = prepped["w1"].shape[1]

    kernel = functools.partial(transformer_block_kernel,
                               num_heads=num_heads, head_dim=head_dim)

    args = (x, prepped["ln1_g"], prepped["ln1_b"], prepped["w_qkv"],
            prepped["w_proj"], prepped["b_proj"], prepped["ln2_g"], prepped["ln2_b"],
            prepped["w1"], prepped["b1"], prepped["w2"], prepped["b2"])

    try:
        call = _make_call(B, N, C, hidden, x.dtype, kernel, True,
                          _vmem_limit_bytes(N, C, num_heads, hidden, 1))
        return jax.block_until_ready(call(*args))
    except Exception:
        # TODO(synk): drop this fallback once pl.Buffered(1) single-buffering is
        # guaranteed available on the deployed jax version.
        call = _make_call(B, N, C, hidden, x.dtype, kernel, False,
                          _vmem_limit_bytes(N, C, num_heads, hidden, 2))
        return call(*args)


def reference_forward_mirror(x, prepped, num_heads):
    """Pure-JAX reference mirroring the kernel's exact cast points (bf16 matmul
    inputs, f32 accumulation, scale folded into w_qkv, tanh GELU)."""
    B, N, C = x.shape
    H = num_heads
    Dh = C // H

    def ln(v, g, b):
        mu = v.mean(-1, keepdims=True)
        var = ((v - mu) ** 2).mean(-1, keepdims=True)
        return (v - mu) / jnp.sqrt(var + LN_EPS) * g[0] + b[0]

    xn = ln(x, prepped["ln1_g"], prepped["ln1_b"])
    qkv = jnp.einsum('bnc,ck->bnk', xn.astype(jnp.bfloat16), prepped["w_qkv"],
                     preferred_element_type=jnp.float32)
    qkv = qkv.astype(jnp.bfloat16).reshape(B, N, 3, H, Dh)
    q, k, v = qkv[:, :, 0], qkv[:, :, 1], qkv[:, :, 2]          # (B,N,H,Dh)
    s = jnp.einsum('bqhd,bkhd->bhqk', q, k, preferred_element_type=jnp.float32)
    m = s.max(-1, keepdims=True)
    p = jnp.exp(s - m)
    l = p.sum(-1, keepdims=True)
    o = jnp.einsum('bhqk,bkhd->bhqd', p.astype(jnp.bfloat16), v,
                   preferred_element_type=jnp.float32) / l
    o = o.transpose(0, 2, 1, 3).reshape(B, N, C)
    o = jnp.einsum('bnc,cd->bnd', o.astype(jnp.bfloat16), prepped["w_proj"],
                   preferred_element_type=jnp.float32) + prepped["b_proj"][0]
    x1 = x + o

    xn2 = ln(x1, prepped["ln2_g"], prepped["ln2_b"])
    h1 = jnp.einsum('bnc,ch->bnh', xn2.astype(jnp.bfloat16), prepped["w1"],
                    preferred_element_type=jnp.float32) + prepped["b1"][0]
    h1 = _gelu_tanh(h1)
    y = jnp.einsum('bnh,hc->bnc', h1.astype(jnp.bfloat16), prepped["w2"],
                   preferred_element_type=jnp.float32) + prepped["b2"][0]
    return x1 + y


def reference_forward_f32(x, params, num_heads):
    """Faithful f32 torch-semantics reference (exact GELU, f32 matmuls)."""
    B, N, C = x.shape
    H = num_heads
    Dh = C // H
    scale = Dh ** (-0.5)

    def ln(v, g, b):
        mu = v.mean(-1, keepdims=True)
        var = ((v - mu) ** 2).mean(-1, keepdims=True)
        return (v - mu) / jnp.sqrt(var + LN_EPS) * g[0] + b[0]

    xn = ln(x, params["ln1_g"], params["ln1_b"])
    qkv = jnp.einsum('bnc,ck->bnk', xn, params["w_qkv"])         # (B,N,3C)
    qkv = qkv.reshape(B, N, 3, H, Dh).transpose(2, 0, 3, 1, 4)   # (3,B,H,N,Dh)
    q, k, v = qkv[0] * scale, qkv[1], qkv[2]
    s = jnp.einsum('bhqd,bhkd->bhqk', q, k)
    p = jax.nn.softmax(s, axis=-1)
    o = jnp.einsum('bhqk,bhkd->bhqd', p, v)
    o = o.transpose(0, 2, 1, 3).reshape(B, N, C)
    o = jnp.einsum('bnc,cd->bnd', o, params["w_proj"]) + params["b_proj"][0]
    x1 = x + o

    xn2 = ln(x1, params["ln2_g"], params["ln2_b"])
    h1 = jnp.einsum('bnc,ch->bnh', xn2, params["w1"]) + params["b1"][0]
    h1 = jax.nn.gelu(h1, approximate=False)
    y = jnp.einsum('bnh,hc->bnc', h1, params["w2"]) + params["b2"][0]
    return x1 + y


def init_params(key, dim, num_heads, mlp_ratio=4.0):
    hidden = int(dim * mlp_ratio)
    ks = jax.random.split(key, 4)
    std = 0.02
    return {
        "ln1_g": jnp.ones((1, dim), jnp.float32),
        "ln1_b": jnp.zeros((1, dim), jnp.float32),
        "w_qkv": std * jax.random.normal(ks[0], (dim, 3 * dim), jnp.float32),
        "w_proj": std * jax.random.normal(ks[1], (dim, dim), jnp.float32),
        "b_proj": jnp.zeros((1, dim), jnp.float32),
        "ln2_g": jnp.ones((1, dim), jnp.float32),
        "ln2_b": jnp.zeros((1, dim), jnp.float32),
        "w1": std * jax.random.normal(ks[2], (dim, hidden), jnp.float32),
        "b1": jnp.zeros((1, hidden), jnp.float32),
        "w2": std * jax.random.normal(ks[3], (hidden, dim), jnp.float32),
        "b2": jnp.zeros((1, dim), jnp.float32),
    }


if __name__ == "__main__":
    B, N, dim, num_heads = 2, 8, 32, 4   # head_dim = 8, mlp hidden = 128

    key = jax.random.PRNGKey(0)
    k_x, k_p = jax.random.split(key)
    x = jax.random.normal(k_x, (B, N, dim), jnp.float32)
    params = init_params(k_p, dim, num_heads)
    prepped = prepare_params(params, num_heads)   # one-time bf16 cast + scale fold

    out = transformer_forward(x, prepped, num_heads)
    out = jax.block_until_ready(out)
    assert out.shape == (B, N, dim)

    # Tight check vs a reference that mirrors the kernel's bf16/tanh-GELU numerics.
    ref_mirror = reference_forward_mirror(x, prepped, num_heads)
    d1 = float(jnp.max(jnp.abs(out - ref_mirror)))
    assert jnp.allclose(out, ref_mirror, atol=1e-3, rtol=1e-3), f"mirror-ref max abs diff {d1}"

    # Loose check vs the faithful f32 (torch-semantics) reference.
    ref_f32 = reference_forward_f32(x, params, num_heads)
    d2 = float(jnp.max(jnp.abs(out - ref_f32)))
    assert jnp.allclose(out, ref_f32, atol=2e-2, rtol=2e-2), f"f32-ref max abs diff {d2}"

    print("KERNEL_OK")
</pallas_src>

<mosaic_0001>
module attributes {stable_mosaic.version = 11 : i64} {
  func.func @transformer_block_kernel(%arg0: i32, %arg1: memref<1x8x32xf32, #tpu.memory_space<vmem>>, %arg2: memref<1x32xf32, #tpu.memory_space<vmem>>, %arg3: memref<1x32xf32, #tpu.memory_space<vmem>>, %arg4: memref<32x96xbf16, #tpu.memory_space<vmem>>, %arg5: memref<32x32xbf16, #tpu.memory_space<vmem>>, %arg6: memref<1x32xf32, #tpu.memory_space<vmem>>, %arg7: memref<1x32xf32, #tpu.memory_space<vmem>>, %arg8: memref<1x32xf32, #tpu.memory_space<vmem>>, %arg9: memref<32x128xbf16, #tpu.memory_space<vmem>>, %arg10: memref<1x128xf32, #tpu.memory_space<vmem>>, %arg11: memref<128x32xbf16, #tpu.memory_space<vmem>>, %arg12: memref<1x32xf32, #tpu.memory_space<vmem>>, %arg13: memref<1x8x32xf32, #tpu.memory_space<vmem>>) attributes {dimension_semantics = [#tpu.dimension_semantics<parallel>], iteration_bounds = array<i64: 2>, scalar_prefetch = 0 : i64, scratch_operands = 0 : i64, tpu.core_type = #tpu.core_type<tc>, window_params = [{transform_indices = @transform_0, window_bounds = array<i64: 1, 8, 32>}, {pipeline_mode = #tpu.pipeline_mode<synchronous>, transform_indices = @transform_1, window_bounds = array<i64: 1, 32>}, {pipeline_mode = #tpu.pipeline_mode<synchronous>, transform_indices = @transform_2, window_bounds = array<i64: 1, 32>}, {pipeline_mode = #tpu.pipeline_mode<synchronous>, transform_indices = @transform_3, window_bounds = array<i64: 32, 96>}, {pipeline_mode = #tpu.pipeline_mode<synchronous>, transform_indices = @transform_4, window_bounds = array<i64: 32, 32>}, {pipeline_mode = #tpu.pipeline_mode<synchronous>, transform_indices = @transform_5, window_bounds = array<i64: 1, 32>}, {pipeline_mode = #tpu.pipeline_mode<synchronous>, transform_indices = @transform_6, window_bounds = array<i64: 1, 32>}, {pipeline_mode = #tpu.pipeline_mode<synchronous>, transform_indices = @transform_7, window_bounds = array<i64: 1, 32>}, {pipeline_mode = #tpu.pipeline_mode<synchronous>, transform_indices = @transform_8, window_bounds = array<i64: 32, 128>}, {pipeline_mode = #tpu.pipeline_mode<synchronous>, transform_indices = @transform_9, window_bounds = array<i64: 1, 128>}, {pipeline_mode = #tpu.pipeline_mode<synchronous>, transform_indices = @transform_10, window_bounds = array<i64: 128, 32>}, {pipeline_mode = #tpu.pipeline_mode<synchronous>, transform_indices = @transform_11, window_bounds = array<i64: 1, 32>}, {transform_indices = @transform_12, window_bounds = array<i64: 1, 8, 32>}]} {
    %c0 = arith.constant 0 : index
    %c0_0 = arith.constant 0 : index
    %c0_1 = arith.constant 0 : index
    %0 = vector.load %arg1[%c0, %c0_0, %c0_1] : memref<1x8x32xf32, #tpu.memory_space<vmem>>, vector<1x8x32xf32>
    %1 = vector.shape_cast %0 : vector<1x8x32xf32> to vector<8x32xf32>
    %c0_2 = arith.constant 0 : index
    %c0_3 = arith.constant 0 : index
    %2 = vector.load %arg2[%c0_2, %c0_3] : memref<1x32xf32, #tpu.memory_space<vmem>>, vector<1x32xf32>
    %3 = vector.shape_cast %2 : vector<1x32xf32> to vector<32xf32>
    %c0_4 = arith.constant 0 : index
    %c0_5 = arith.constant 0 : index
    %4 = vector.load %arg3[%c0_4, %c0_5] : memref<1x32xf32, #tpu.memory_space<vmem>>, vector<1x32xf32>
    %5 = vector.shape_cast %4 : vector<1x32xf32> to vector<32xf32>
    %cst = arith.constant dense<0.000000e+00> : vector<8xf32>
    %6 = vector.multi_reduction <add>, %1, %cst [1] : vector<8x32xf32> to vector<8xf32>
    %7 = vector.shape_cast %6 : vector<8xf32> to vector<8x1xf32>
    %cst_6 = arith.constant 3.200000e+01 : f32
    %8 = vector.broadcast %cst_6 : f32 to vector<8x1xf32>
    %9 = arith.divf %7, %8 : vector<8x1xf32>
    %10 = vector.broadcast %9 : vector<8x1xf32> to vector<8x32xf32>
    %11 = arith.subf %1, %10 : vector<8x32xf32>
    %12 = arith.mulf %11, %11 : vector<8x32xf32>
    %cst_7 = arith.constant dense<0.000000e+00> : vector<8xf32>
    %13 = vector.multi_reduction <add>, %12, %cst_7 [1] : vector<8x32xf32> to vector<8xf32>
    %14 = vector.shape_cast %13 : vector<8xf32> to vector<8x1xf32>
    %cst_8 = arith.constant 3.200000e+01 : f32
    %15 = vector.broadcast %cst_8 : f32 to vector<8x1xf32>
    %16 = arith.divf %14, %15 : vector<8x1xf32>
    %17 = vector.broadcast %9 : vector<8x1xf32> to vector<8x32xf32>
    %18 = arith.subf %1, %17 : vector<8x32xf32>
    %cst_9 = arith.constant 9.99999974E-6 : f32
    %19 = vector.broadcast %cst_9 : f32 to vector<8x1xf32>
    %20 = arith.addf %16, %19 : vector<8x1xf32>
    %21 = math.rsqrt %20 : vector<8x1xf32>
    %22 = vector.broadcast %21 : vector<8x1xf32> to vector<8x32xf32>
    %23 = arith.mulf %18, %22 : vector<8x32xf32>
    %24 = vector.shape_cast %3 : vector<32xf32> to vector<1x32xf32>
    %25 = vector.broadcast %24 : vector<1x32xf32> to vector<8x32xf32>
    %26 = arith.mulf %23, %25 : vector<8x32xf32>
    %27 = vector.shape_cast %5 : vector<32xf32> to vector<1x32xf32>
    %28 = vector.broadcast %27 : vector<1x32xf32> to vector<8x32xf32>
    %29 = arith.addf %26, %28 : vector<8x32xf32>
    %30 = arith.truncf %29 : vector<8x32xf32> to vector<8x32xbf16>
    %c0_10 = arith.constant 0 : index
    %c0_11 = arith.constant 0 : index
    %31 = vector.load %arg4[%c0_10, %c0_11] : memref<32x96xbf16, #tpu.memory_space<vmem>>, vector<32x96xbf16>
    %cst_12 = arith.constant dense<0.000000e+00> : vector<8x96xf32>
    %32 = tpu.matmul %30, %31, %cst_12 {dimension_numbers = #tpu.dot_dimension_numbers<[1], [0], [0], [1], [0, 0, 1, 1], [], []>} : vector<8x32xbf16>, vector<32x96xbf16>, vector<8x96xf32> -> vector<8x96xf32>
    %33 = arith.truncf %32 : vector<8x96xf32> to vector<8x96xbf16>
    %34 = vector.shape_cast %33 : vector<8x96xbf16> to vector<8x12x8xbf16>
    %35 = vector.extract_strided_slice %34 {offsets = [0, 0, 0], sizes = [8, 4, 8], strides = [1, 1, 1]} : vector<8x12x8xbf16> to vector<8x4x8xbf16>
    %36 = tpu.transpose %35, [1, 0, 2] : vector<8x4x8xbf16> -> vector<4x8x8xbf16>
    %37 = vector.extract_strided_slice %34 {offsets = [0, 4, 0], sizes = [8, 4, 8], strides = [1, 1, 1]} : vector<8x12x8xbf16> to vector<8x4x8xbf16>
    %38 = tpu.transpose %37, [1, 0, 2] : vector<8x4x8xbf16> -> vector<4x8x8xbf16>
    %39 = vector.extract_strided_slice %34 {offsets = [0, 8, 0], sizes = [8, 4, 8], strides = [1, 1, 1]} : vector<8x12x8xbf16> to vector<8x4x8xbf16>
    %40 = tpu.transpose %39, [1, 0, 2] : vector<8x4x8xbf16> -> vector<4x8x8xbf16>
    "tpu.trace_start"() <{level = 10 : i32, message = "hqd,hkd->hqk"}> : () -> ()
    %cst_13 = arith.constant dense<0.000000e+00> : vector<4x8x8xf32>
    %41 = tpu.matmul %36, %38, %cst_13 {dimension_numbers = #tpu.dot_dimension_numbers<[2], [2], [1], [1], [0, 0, 0, 1, 1, 1], [0], [0]>} : vector<4x8x8xbf16>, vector<4x8x8xbf16>, vector<4x8x8xf32> -> vector<4x8x8xf32>
    "tpu.trace_stop"() : () -> ()
    %cst_14 = arith.constant dense<0xFF800000> : vector<4x8xf32>
    %42 = vector.multi_reduction <maximumf>, %41, %cst_14 [2] : vector<4x8x8xf32> to vector<4x8xf32>
    %43 = vector.shape_cast %42 : vector<4x8xf32> to vector<4x8x1xf32>
    %44 = vector.broadcast %43 : vector<4x8x1xf32> to vector<4x8x8xf32>
    %45 = arith.subf %41, %44 : vector<4x8x8xf32>
    %46 = math.exp %45 : vector<4x8x8xf32>
    %cst_15 = arith.constant dense<0.000000e+00> : vector<4x8xf32>
    %47 = vector.multi_reduction <add>, %46, %cst_15 [2] : vector<4x8x8xf32> to vector<4x8xf32>
    %48 = vector.shape_cast %47 : vector<4x8xf32> to vector<4x8x1xf32>
    %49 = arith.truncf %46 : vector<4x8x8xf32> to vector<4x8x8xbf16>
    "tpu.trace_start"() <{level = 10 : i32, message = "hqk,hkd->hqd"}> : () -> ()
    %cst_16 = arith.constant dense<0.000000e+00> : vector<4x8x8xf32>
    %50 = tpu.matmul %49, %40, %cst_16 {dimension_numbers = #tpu.dot_dimension_numbers<[2], [1], [1], [2], [0, 0, 0, 1, 1, 2], [0], [0]>} : vector<4x8x8xbf16>, vector<4x8x8xbf16>, vector<4x8x8xf32> -> vector<4x8x8xf32>
    "tpu.trace_stop"() : () -> ()
    %51 = tpu.reciprocal %48 {approx = true} : vector<4x8x1xf32> -> vector<4x8x1xf32>
    %52 = vector.broadcast %51 : vector<4x8x1xf32> to vector<4x8x8xf32>
    %53 = arith.mulf %50, %52 : vector<4x8x8xf32>
    %54 = tpu.transpose %53, [1, 0, 2] : vector<4x8x8xf32> -> vector<8x4x8xf32>
    %55 = vector.shape_cast %54 : vector<8x4x8xf32> to vector<8x32xf32>
    %56 = arith.truncf %55 : vector<8x32xf32> to vector<8x32xbf16>
    %c0_17 = arith.constant 0 : index
    %c0_18 = arith.constant 0 : index
    %57 = vector.load %arg5[%c0_17, %c0_18] : memref<32x32xbf16, #tpu.memory_space<vmem>>, vector<32x32xbf16>
    %cst_19 = arith.constant dense<0.000000e+00> : vector<8x32xf32>
    %58 = tpu.matmul %56, %57, %cst_19 {dimension_numbers = #tpu.dot_dimension_numbers<[1], [0], [0], [1], [0, 0, 1, 1], [], []>} : vector<8x32xbf16>, vector<32x32xbf16>, vector<8x32xf32> -> vector<8x32xf32>
    %c0_20 = arith.constant 0 : index
    %c0_21 = arith.constant 0 : index
    %59 = vector.load %arg6[%c0_20, %c0_21] : memref<1x32xf32, #tpu.memory_space<vmem>>, vector<1x32xf32>
    %60 = vector.shape_cast %59 : vector<1x32xf32> to vector<32xf32>
    %61 = vector.shape_cast %60 : vector<32xf32> to vector<1x32xf32>
    %62 = vector.broadcast %61 : vector<1x32xf32> to vector<8x32xf32>
    %63 = arith.addf %58, %62 : vector<8x32xf32>
    %64 = arith.addf %1, %63 : vector<8x32xf32>
    %c0_22 = arith.constant 0 : index
    %c0_23 = arith.constant 0 : index
    %65 = vector.load %arg7[%c0_22, %c0_23] : memref<1x32xf32, #tpu.memory_space<vmem>>, vector<1x32xf32>
    %66 = vector.shape_cast %65 : vector<1x32xf32> to vector<32xf32>
    %c0_24 = arith.constant 0 : index
    %c0_25 = arith.constant 0 : index
    %67 = vector.load %arg8[%c0_24, %c0_25] : memref<1x32xf32, #tpu.memory_space<vmem>>, vector<1x32xf32>
    %68 = vector.shape_cast %67 : vector<1x32xf32> to vector<32xf32>
    %cst_26 = arith.constant dense<0.000000e+00> : vector<8xf32>
    %69 = vector.multi_reduction <add>, %64, %cst_26 [1] : vector<8x32xf32> to vector<8xf32>
    %70 = vector.shape_cast %69 : vector<8xf32> to vector<8x1xf32>
    %cst_27 = arith.constant 3.200000e+01 : f32
    %71 = vector.broadcast %cst_27 : f32 to vector<8x1xf32>
    %72 = arith.divf %70, %71 : vector<8x1xf32>
    %73 = vector.broadcast %72 : vector<8x1xf32> to vector<8x32xf32>
    %74 = arith.subf %64, %73 : vector<8x32xf32>
    %75 = arith.mulf %74, %74 : vector<8x32xf32>
    %cst_28 = arith.constant dense<0.000000e+00> : vector<8xf32>
    %76 = vector.multi_reduction <add>, %75, %cst_28 [1] : vector<8x32xf32> to vector<8xf32>
    %77 = vector.shape_cast %76 : vector<8xf32> to vector<8x1xf32>
    %cst_29 = arith.constant 3.200000e+01 : f32
    %78 = vector.broadcast %cst_29 : f32 to vector<8x1xf32>
    %79 = arith.divf %77, %78 : vector<8x1xf32>
    %80 = vector.broadcast %72 : vector<8x1xf32> to vector<8x32xf32>
    %81 = arith.subf %64, %80 : vector<8x32xf32>
    %cst_30 = arith.constant 9.99999974E-6 : f32
    %82 = vector.broadcast %cst_30 : f32 to vector<8x1xf32>
    %83 = arith.addf %79, %82 : vector<8x1xf32>
    %84 = math.rsqrt %83 : vector<8x1xf32>
    %85 = vector.broadcast %84 : vector<8x1xf32> to vector<8x32xf32>
    %86 = arith.mulf %81, %85 : vector<8x32xf32>
    %87 = vector.shape_cast %66 : vector<32xf32> to vector<1x32xf32>
    %88 = vector.broadcast %87 : vector<1x32xf32> to vector<8x32xf32>
    %89 = arith.mulf %86, %88 : vector<8x32xf32>
    %90 = vector.shape_cast %68 : vector<32xf32> to vector<1x32xf32>
    %91 = vector.broadcast %90 : vector<1x32xf32> to vector<8x32xf32>
    %92 = arith.addf %89, %91 : vector<8x32xf32>
    %93 = arith.truncf %92 : vector<8x32xf32> to vector<8x32xbf16>
    %c0_31 = arith.constant 0 : index
    %c0_32 = arith.constant 0 : index
    %94 = vector.load %arg9[%c0_31, %c0_32] : memref<32x128xbf16, #tpu.memory_space<vmem>>, vector<32x128xbf16>
    %cst_33 = arith.constant dense<0.000000e+00> : vector<8x128xf32>
    %95 = tpu.matmul %93, %94, %cst_33 {dimension_numbers = #tpu.dot_dimension_numbers<[1], [0], [0], [1], [0, 0, 1, 1], [], []>} : vector<8x32xbf16>, vector<32x128xbf16>, vector<8x128xf32> -> vector<8x128xf32>
    %c0_34 = arith.constant 0 : index
    %c0_35 = arith.constant 0 : index
    %96 = vector.load %arg10[%c0_34, %c0_35] : memref<1x128xf32, #tpu.memory_space<vmem>>, vector<1x128xf32>
    %97 = vector.shape_cast %96 : vector<1x128xf32> to vector<128xf32>
    %98 = vector.shape_cast %97 : vector<128xf32> to vector<1x128xf32>
    %99 = vector.broadcast %98 : vector<1x128xf32> to vector<8x128xf32>
    %100 = arith.addf %95, %99 : vector<8x128xf32>
    %cst_36 = arith.constant 5.000000e-01 : f32
    %101 = vector.broadcast %cst_36 : f32 to vector<8x128xf32>
    %102 = arith.mulf %101, %100 : vector<8x128xf32>
    %103 = arith.mulf %100, %100 : vector<8x128xf32>
    %104 = arith.mulf %103, %100 : vector<8x128xf32>
    %cst_37 = arith.constant 4.471500e-02 : f32
    %105 = vector.broadcast %cst_37 : f32 to vector<8x128xf32>
    %106 = arith.mulf %105, %104 : vector<8x128xf32>
    %107 = arith.addf %100, %106 : vector<8x128xf32>
    %cst_38 = arith.constant 0.797884583 : f32
    %108 = vector.broadcast %cst_38 : f32 to vector<8x128xf32>
    %109 = arith.mulf %108, %107 : vector<8x128xf32>
    %110 = math.tanh %109 : vector<8x128xf32>
    %cst_39 = arith.constant 1.000000e+00 : f32
    %111 = vector.broadcast %cst_39 : f32 to vector<8x128xf32>
    %112 = arith.addf %111, %110 : vector<8x128xf32>
    %113 = arith.mulf %102, %112 : vector<8x128xf32>
    %114 = arith.truncf %113 : vector<8x128xf32> to vector<8x128xbf16>
    %c0_40 = arith.constant 0 : index
    %c0_41 = arith.constant 0 : index
    %115 = vector.load %arg11[%c0_40, %c0_41] : memref<128x32xbf16, #tpu.memory_space<vmem>>, vector<128x32xbf16>
    %cst_42 = arith.constant dense<0.000000e+00> : vector<8x32xf32>
    %116 = tpu.matmul %114, %115, %cst_42 {dimension_numbers = #tpu.dot_dimension_numbers<[1], [0], [0], [1], [0, 0, 1, 1], [], []>} : vector<8x128xbf16>, vector<128x32xbf16>, vector<8x32xf32> -> vector<8x32xf32>
    %c0_43 = arith.constant 0 : index
    %c0_44 = arith.constant 0 : index
    %117 = vector.load %arg12[%c0_43, %c0_44] : memref<1x32xf32, #tpu.memory_space<vmem>>, vector<1x32xf32>
    %118 = vector.shape_cast %117 : vector<1x32xf32> to vector<32xf32>
    %119 = vector.shape_cast %118 : vector<32xf32> to vector<1x32xf32>
    %120 = vector.broadcast %119 : vector<1x32xf32> to vector<8x32xf32>
    %121 = arith.addf %116, %120 : vector<8x32xf32>
    %122 = arith.addf %64, %121 : vector<8x32xf32>
    %c0_45 = arith.constant 0 : index
    %c0_46 = arith.constant 0 : index
    %c0_47 = arith.constant 0 : index
    %123 = vector.load %arg13[%c0_45, %c0_46, %c0_47] : memref<1x8x32xf32, #tpu.memory_space<vmem>>, vector<1x8x32xf32>
    %124 = vector.shape_cast %123 : vector<1x8x32xf32> to vector<8x32xf32>
    %125 = vector.shape_cast %122 : vector<8x32xf32> to vector<1x8x32xf32>
    tpu.vector_store %arg13[%c0_45, %c0_46, %c0_47], %125 {strides = array<i32>} : memref<1x8x32xf32, #tpu.memory_space<vmem>>, vector<1x8x32xf32>,
    return
  }
  func.func @transform_0(%arg0: i32) -> (i32, i32, i32) {
    %c0_i32 = arith.constant 0 : i32
    %c0_i32_0 = arith.constant 0 : i32
    %c0_i32_1 = arith.constant 0 : i32
    return %arg0, %c0_i32, %c0_i32_0 : i32, i32, i32
  }
  func.func @transform_1(%arg0: i32) -> (i32, i32) {
    %c0_i32 = arith.constant 0 : i32
    %c0_i32_0 = arith.constant 0 : i32
    %c0_i32_1 = arith.constant 0 : i32
    return %c0_i32, %c0_i32_0 : i32, i32
  }
  func.func @transform_2(%arg0: i32) -> (i32, i32) {
    %c0_i32 = arith.constant 0 : i32
    %c0_i32_0 = arith.constant 0 : i32
    %c0_i32_1 = arith.constant 0 : i32
    return %c0_i32, %c0_i32_0 : i32, i32
  }
  func.func @transform_3(%arg0: i32) -> (i32, i32) {
    %c0_i32 = arith.constant 0 : i32
    %c0_i32_0 = arith.constant 0 : i32
    %c0_i32_1 = arith.constant 0 : i32
    return %c0_i32, %c0_i32_0 : i32, i32
  }
  func.func @transform_4(%arg0: i32) -> (i32, i32) {
    %c0_i32 = arith.constant 0 : i32
    %c0_i32_0 = arith.constant 0 : i32
    %c0_i32_1 = arith.constant 0 : i32
    return %c0_i32, %c0_i32_0 : i32, i32
  }
  func.func @transform_5(%arg0: i32) -> (i32, i32) {
    %c0_i32 = arith.constant 0 : i32
    %c0_i32_0 = arith.constant 0 : i32
    %c0_i32_1 = arith.constant 0 : i32
    return %c0_i32, %c0_i32_0 : i32, i32
  }
  func.func @transform_6(%arg0: i32) -> (i32, i32) {
    %c0_i32 = arith.constant 0 : i32
    %c0_i32_0 = arith.constant 0 : i32
    %c0_i32_1 = arith.constant 0 : i32
    return %c0_i32, %c0_i32_0 : i32, i32
  }
  func.func @transform_7(%arg0: i32) -> (i32, i32) {
    %c0_i32 = arith.constant 0 : i32
    %c0_i32_0 = arith.constant 0 : i32
    %c0_i32_1 = arith.constant 0 : i32
    return %c0_i32, %c0_i32_0 : i32, i32
  }
  func.func @transform_8(%arg0: i32) -> (i32, i32) {
    %c0_i32 = arith.constant 0 : i32
    %c0_i32_0 = arith.constant 0 : i32
    %c0_i32_1 = arith.constant 0 : i32
    return %c0_i32, %c0_i32_0 : i32, i32
  }
  func.func @transform_9(%arg0: i32) -> (i32, i32) {
    %c0_i32 = arith.constant 0 : i32
    %c0_i32_0 = arith.constant 0 : i32
    %c0_i32_1 = arith.constant 0 : i32
    return %c0_i32, %c0_i32_0 : i32, i32
  }
  func.func @transform_10(%arg0: i32) -> (i32, i32) {
    %c0_i32 = arith.constant 0 : i32
    %c0_i32_0 = arith.constant 0 : i32
    %c0_i32_1 = arith.constant 0 : i32
    return %c0_i32, %c0_i32_0 : i32, i32
  }
  func.func @transform_11(%arg0: i32) -> (i32, i32) {
    %c0_i32 = arith.constant 0 : i32
    %c0_i32_0 = arith.constant 0 : i32
    %c0_i32_1 = arith.constant 0 : i32
    return %c0_i32, %c0_i32_0 : i32, i32
  }
  func.func @transform_12(%arg0: i32) -> (i32, i32, i32) {
    %c0_i32 = arith.constant 0 : i32
    %c0_i32_0 = arith.constant 0 : i32
    %c0_i32_1 = arith.constant 0 : i32
    return %arg0, %c0_i32, %c0_i32_0 : i32, i32, i32
  }
}

module attributes {stable_mosaic.version = 11 : i64} {
  func.func @transformer_block_kernel(%arg0: i32, %arg1: memref<1x8x32xf32, #tpu.memory_space<vmem>>, %arg2: memref<1x32xf32, #tpu.memory_space<vmem>>, %arg3: memref<1x32xf32, #tpu.memory_space<vmem>>, %arg4: memref<32x96xbf16, #tpu.memory_space<vmem>>, %arg5: memref<32x32xbf16, #tpu.memory_space<vmem>>, %arg6: memref<1x32xf32, #tpu.memory_space<vmem>>, %arg7: memref<1x32xf32, #tpu.memory_space<vmem>>, %arg8: memref<1x32xf32, #tpu.memory_space<vmem>>, %arg9: memref<32x128xbf16, #tpu.memory_space<vmem>>, %arg10: memref<1x128xf32, #tpu.memory_space<vmem>>, %arg11: memref<128x32xbf16, #tpu.memory_space<vmem>>, %arg12: memref<1x32xf32, #tpu.memory_space<vmem>>, %arg13: memref<1x8x32xf32, #tpu.memory_space<vmem>>) attributes {dimension_semantics = [#tpu.dimension_semantics<parallel>], iteration_bounds = array<i64: 2>, scalar_prefetch = 0 : i64, scratch_operands = 0 : i64, tpu.core_type = #tpu.core_type<tc>, window_params = [{transform_indices = @transform_0, window_bounds = array<i64: 1, 8, 32>}, {pipeline_mode = #tpu.pipeline_mode<synchronous>, transform_indices = @transform_1, window_bounds = array<i64: 1, 32>}, {pipeline_mode = #tpu.pipeline_mode<synchronous>, transform_indices = @transform_2, window_bounds = array<i64: 1, 32>}, {pipeline_mode = #tpu.pipeline_mode<synchronous>, transform_indices = @transform_3, window_bounds = array<i64: 32, 96>}, {pipeline_mode = #tpu.pipeline_mode<synchronous>, transform_indices = @transform_4, window_bounds = array<i64: 32, 32>}, {pipeline_mode = #tpu.pipeline_mode<synchronous>, transform_indices = @transform_5, window_bounds = array<i64: 1, 32>}, {pipeline_mode = #tpu.pipeline_mode<synchronous>, transform_indices = @transform_6, window_bounds = array<i64: 1, 32>}, {pipeline_mode = #tpu.pipeline_mode<synchronous>, transform_indices = @transform_7, window_bounds = array<i64: 1, 32>}, {pipeline_mode = #tpu.pipeline_mode<synchronous>, transform_indices = @transform_8, window_bounds = array<i64: 32, 128>}, {pipeline_mode = #tpu.pipeline_mode<synchronous>, transform_indices = @transform_9, window_bounds = array<i64: 1, 128>}, {pipeline_mode = #tpu.pipeline_mode<synchronous>, transform_indices = @transform_10, window_bounds = array<i64: 128, 32>}, {pipeline_mode = #tpu.pipeline_mode<synchronous>, transform_indices = @transform_11, window_bounds = array<i64: 1, 32>}, {transform_indices = @transform_12, window_bounds = array<i64: 1, 8, 32>}]} {
    %c0 = arith.constant 0 : index
    %c0_0 = arith.constant 0 : index
    %c0_1 = arith.constant 0 : index
    %0 = vector.load %arg1[%c0, %c0_0, %c0_1] : memref<1x8x32xf32, #tpu.memory_space<vmem>>, vector<1x8x32xf32>
    %1 = vector.shape_cast %0 : vector<1x8x32xf32> to vector<8x32xf32>
    %c0_2 = arith.constant 0 : index
    %c0_3 = arith.constant 0 : index
    %2 = vector.load %arg2[%c0_2, %c0_3] : memref<1x32xf32, #tpu.memory_space<vmem>>, vector<1x32xf32>
    %3 = vector.shape_cast %2 : vector<1x32xf32> to vector<32xf32>
    %c0_4 = arith.constant 0 : index
    %c0_5 = arith.constant 0 : index
    %4 = vector.load %arg3[%c0_4, %c0_5] : memref<1x32xf32, #tpu.memory_space<vmem>>, vector<1x32xf32>
    %5 = vector.shape_cast %4 : vector<1x32xf32> to vector<32xf32>
    %cst = arith.constant dense<0.000000e+00> : vector<8xf32>
    %6 = vector.multi_reduction <add>, %1, %cst [1] : vector<8x32xf32> to vector<8xf32>
    %7 = vector.shape_cast %6 : vector<8xf32> to vector<8x1xf32>
    %cst_6 = arith.constant 3.200000e+01 : f32
    %8 = vector.broadcast %cst_6 : f32 to vector<8x1xf32>
    %9 = arith.divf %7, %8 : vector<8x1xf32>
    %10 = vector.broadcast %9 : vector<8x1xf32> to vector<8x32xf32>
    %11 = arith.subf %1, %10 : vector<8x32xf32>
    %12 = arith.mulf %11, %11 : vector<8x32xf32>
    %cst_7 = arith.constant dense<0.000000e+00> : vector<8xf32>
    %13 = vector.multi_reduction <add>, %12, %cst_7 [1] : vector<8x32xf32> to vector<8xf32>
    %14 = vector.shape_cast %13 : vector<8xf32> to vector<8x1xf32>
    %cst_8 = arith.constant 3.200000e+01 : f32
    %15 = vector.broadcast %cst_8 : f32 to vector<8x1xf32>
    %16 = arith.divf %14, %15 : vector<8x1xf32>
    %17 = vector.broadcast %9 : vector<8x1xf32> to vector<8x32xf32>
    %18 = arith.subf %1, %17 : vector<8x32xf32>
    %cst_9 = arith.constant 9.99999974E-6 : f32
    %19 = vector.broadcast %cst_9 : f32 to vector<8x1xf32>
    %20 = arith.addf %16, %19 : vector<8x1xf32>
    %21 = math.rsqrt %20 : vector<8x1xf32>
    %22 = vector.broadcast %21 : vector<8x1xf32> to vector<8x32xf32>
    %23 = arith.mulf %18, %22 : vector<8x32xf32>
    %24 = vector.shape_cast %3 : vector<32xf32> to vector<1x32xf32>
    %25 = vector.broadcast %24 : vector<1x32xf32> to vector<8x32xf32>
    %26 = arith.mulf %23, %25 : vector<8x32xf32>
    %27 = vector.shape_cast %5 : vector<32xf32> to vector<1x32xf32>
    %28 = vector.broadcast %27 : vector<1x32xf32> to vector<8x32xf32>
    %29 = arith.addf %26, %28 : vector<8x32xf32>
    %30 = arith.truncf %29 : vector<8x32xf32> to vector<8x32xbf16>
    %c0_10 = arith.constant 0 : index
    %c0_11 = arith.constant 0 : index
    %31 = vector.load %arg4[%c0_10, %c0_11] : memref<32x96xbf16, #tpu.memory_space<vmem>>, vector<32x96xbf16>
    %cst_12 = arith.constant dense<0.000000e+00> : vector<8x96xf32>
    %32 = tpu.matmul %30, %31, %cst_12 {dimension_numbers = #tpu.dot_dimension_numbers<[1], [0], [0], [1], [0, 0, 1, 1], [], []>} : vector<8x32xbf16>, vector<32x96xbf16>, vector<8x96xf32> -> vector<8x96xf32>
    %33 = arith.truncf %32 : vector<8x96xf32> to vector<8x96xbf16>
    %34 = vector.shape_cast %33 : vector<8x96xbf16> to vector<8x12x8xbf16>
    %35 = vector.extract_strided_slice %34 {offsets = [0, 0, 0], sizes = [8, 4, 8], strides = [1, 1, 1]} : vector<8x12x8xbf16> to vector<8x4x8xbf16>
    %36 = tpu.transpose %35, [1, 0, 2] : vector<8x4x8xbf16> -> vector<4x8x8xbf16>
    %37 = vector.extract_strided_slice %34 {offsets = [0, 4, 0], sizes = [8, 4, 8], strides = [1, 1, 1]} : vector<8x12x8xbf16> to vector<8x4x8xbf16>
    %38 = tpu.transpose %37, [1, 0, 2] : vector<8x4x8xbf16> -> vector<4x8x8xbf16>
    %39 = vector.extract_strided_slice %34 {offsets = [0, 8, 0], sizes = [8, 4, 8], strides = [1, 1, 1]} : vector<8x12x8xbf16> to vector<8x4x8xbf16>
    %40 = tpu.transpose %39, [1, 0, 2] : vector<8x4x8xbf16> -> vector<4x8x8xbf16>
    "tpu.trace_start"() <{level = 10 : i32, message = "hqd,hkd->hqk"}> : () -> ()
    %cst_13 = arith.constant dense<0.000000e+00> : vector<4x8x8xf32>
    %41 = tpu.matmul %36, %38, %cst_13 {dimension_numbers = #tpu.dot_dimension_numbers<[2], [2], [1], [1], [0, 0, 0, 1, 1, 1], [0], [0]>} : vector<4x8x8xbf16>, vector<4x8x8xbf16>, vector<4x8x8xf32> -> vector<4x8x8xf32>
    "tpu.trace_stop"() : () -> ()
    %cst_14 = arith.constant dense<0xFF800000> : vector<4x8xf32>
    %42 = vector.multi_reduction <maximumf>, %41, %cst_14 [2] : vector<4x8x8xf32> to vector<4x8xf32>
    %43 = vector.shape_cast %42 : vector<4x8xf32> to vector<4x8x1xf32>
    %44 = vector.broadcast %43 : vector<4x8x1xf32> to vector<4x8x8xf32>
    %45 = arith.subf %41, %44 : vector<4x8x8xf32>
    %46 = math.exp %45 : vector<4x8x8xf32>
    %cst_15 = arith.constant dense<0.000000e+00> : vector<4x8xf32>
    %47 = vector.multi_reduction <add>, %46, %cst_15 [2] : vector<4x8x8xf32> to vector<4x8xf32>
    %48 = vector.shape_cast %47 : vector<4x8xf32> to vector<4x8x1xf32>
    %49 = arith.truncf %46 : vector<4x8x8xf32> to vector<4x8x8xbf16>
    "tpu.trace_start"() <{level = 10 : i32, message = "hqk,hkd->hqd"}> : () -> ()
    %cst_16 = arith.constant dense<0.000000e+00> : vector<4x8x8xf32>
    %50 = tpu.matmul %49, %40, %cst_16 {dimension_numbers = #tpu.dot_dimension_numbers<[2], [1], [1], [2], [0, 0, 0, 1, 1, 2], [0], [0]>} : vector<4x8x8xbf16>, vector<4x8x8xbf16>, vector<4x8x8xf32> -> vector<4x8x8xf32>
    "tpu.trace_stop"() : () -> ()
    %51 = tpu.reciprocal %48 {approx = true} : vector<4x8x1xf32> -> vector<4x8x1xf32>
    %52 = vector.broadcast %51 : vector<4x8x1xf32> to vector<4x8x8xf32>
    %53 = arith.mulf %50, %52 : vector<4x8x8xf32>
    %54 = tpu.transpose %53, [1, 0, 2] : vector<4x8x8xf32> -> vector<8x4x8xf32>
    %55 = vector.shape_cast %54 : vector<8x4x8xf32> to vector<8x32xf32>
    %56 = arith.truncf %55 : vector<8x32xf32> to vector<8x32xbf16>
    %c0_17 = arith.constant 0 : index
    %c0_18 = arith.constant 0 : index
    %57 = vector.load %arg5[%c0_17, %c0_18] : memref<32x32xbf16, #tpu.memory_space<vmem>>, vector<32x32xbf16>
    %cst_19 = arith.constant dense<0.000000e+00> : vector<8x32xf32>
    %58 = tpu.matmul %56, %57, %cst_19 {dimension_numbers = #tpu.dot_dimension_numbers<[1], [0], [0], [1], [0, 0, 1, 1], [], []>} : vector<8x32xbf16>, vector<32x32xbf16>, vector<8x32xf32> -> vector<8x32xf32>
    %c0_20 = arith.constant 0 : index
    %c0_21 = arith.constant 0 : index
    %59 = vector.load %arg6[%c0_20, %c0_21] : memref<1x32xf32, #tpu.memory_space<vmem>>, vector<1x32xf32>
    %60 = vector.shape_cast %59 : vector<1x32xf32> to vector<32xf32>
    %61 = vector.shape_cast %60 : vector<32xf32> to vector<1x32xf32>
    %62 = vector.broadcast %61 : vector<1x32xf32> to vector<8x32xf32>
    %63 = arith.addf %58, %62 : vector<8x32xf32>
    %64 = arith.addf %1, %63 : vector<8x32xf32>
    %c0_22 = arith.constant 0 : index
    %c0_23 = arith.constant 0 : index
    %65 = vector.load %arg7[%c0_22, %c0_23] : memref<1x32xf32, #tpu.memory_space<vmem>>, vector<1x32xf32>
    %66 = vector.shape_cast %65 : vector<1x32xf32> to vector<32xf32>
    %c0_24 = arith.constant 0 : index
    %c0_25 = arith.constant 0 : index
    %67 = vector.load %arg8[%c0_24, %c0_25] : memref<1x32xf32, #tpu.memory_space<vmem>>, vector<1x32xf32>
    %68 = vector.shape_cast %67 : vector<1x32xf32> to vector<32xf32>
    %cst_26 = arith.constant dense<0.000000e+00> : vector<8xf32>
    %69 = vector.multi_reduction <add>, %64, %cst_26 [1] : vector<8x32xf32> to vector<8xf32>
    %70 = vector.shape_cast %69 : vector<8xf32> to vector<8x1xf32>
    %cst_27 = arith.constant 3.200000e+01 : f32
    %71 = vector.broadcast %cst_27 : f32 to vector<8x1xf32>
    %72 = arith.divf %70, %71 : vector<8x1xf32>
    %73 = vector.broadcast %72 : vector<8x1xf32> to vector<8x32xf32>
    %74 = arith.subf %64, %73 : vector<8x32xf32>
    %75 = arith.mulf %74, %74 : vector<8x32xf32>
    %cst_28 = arith.constant dense<0.000000e+00> : vector<8xf32>
    %76 = vector.multi_reduction <add>, %75, %cst_28 [1] : vector<8x32xf32> to vector<8xf32>
    %77 = vector.shape_cast %76 : vector<8xf32> to vector<8x1xf32>
    %cst_29 = arith.constant 3.200000e+01 : f32
    %78 = vector.broadcast %cst_29 : f32 to vector<8x1xf32>
    %79 = arith.divf %77, %78 : vector<8x1xf32>
    %80 = vector.broadcast %72 : vector<8x1xf32> to vector<8x32xf32>
    %81 = arith.subf %64, %80 : vector<8x32xf32>
    %cst_30 = arith.constant 9.99999974E-6 : f32
    %82 = vector.broadcast %cst_30 : f32 to vector<8x1xf32>
    %83 = arith.addf %79, %82 : vector<8x1xf32>
    %84 = math.rsqrt %83 : vector<8x1xf32>
    %85 = vector.broadcast %84 : vector<8x1xf32> to vector<8x32xf32>
    %86 = arith.mulf %81, %85 : vector<8x32xf32>
    %87 = vector.shape_cast %66 : vector<32xf32> to vector<1x32xf32>
    %88 = vector.broadcast %87 : vector<1x32xf32> to vector<8x32xf32>
    %89 = arith.mulf %86, %88 : vector<8x32xf32>
    %90 = vector.shape_cast %68 : vector<32xf32> to vector<1x32xf32>
    %91 = vector.broadcast %90 : vector<1x32xf32> to vector<8x32xf32>
    %92 = arith.addf %89, %91 : vector<8x32xf32>
    %93 = arith.truncf %92 : vector<8x32xf32> to vector<8x32xbf16>
    %c0_31 = arith.constant 0 : index
    %c0_32 = arith.constant 0 : index
    %94 = vector.load %arg9[%c0_31, %c0_32] : memref<32x128xbf16, #tpu.memory_space<vmem>>, vector<32x128xbf16>
    %cst_33 = arith.constant dense<0.000000e+00> : vector<8x128xf32>
    %95 = tpu.matmul %93, %94, %cst_33 {dimension_numbers = #tpu.dot_dimension_numbers<[1], [0], [0], [1], [0, 0, 1, 1], [], []>} : vector<8x32xbf16>, vector<32x128xbf16>, vector<8x128xf32> -> vector<8x128xf32>
    %c0_34 = arith.constant 0 : index
    %c0_35 = arith.constant 0 : index
    %96 = vector.load %arg10[%c0_34, %c0_35] : memref<1x128xf32, #tpu.memory_space<vmem>>, vector<1x128xf32>
    %97 = vector.shape_cast %96 : vector<1x128xf32> to vector<128xf32>
    %98 = vector.shape_cast %97 : vector<128xf32> to vector<1x128xf32>
    %99 = vector.broadcast %98 : vector<1x128xf32> to vector<8x128xf32>
    %100 = arith.addf %95, %99 : vector<8x128xf32>
    %cst_36 = arith.constant 5.000000e-01 : f32
    %101 = vector.broadcast %cst_36 : f32 to vector<8x128xf32>
    %102 = arith.mulf %101, %100 : vector<8x128xf32>
    %103 = arith.mulf %100, %100 : vector<8x128xf32>
    %104 = arith.mulf %103, %100 : vector<8x128xf32>
    %cst_37 = arith.constant 4.471500e-02 : f32
    %105 = vector.broadcast %cst_37 : f32 to vector<8x128xf32>
    %106 = arith.mulf %105, %104 : vector<8x128xf32>
    %107 = arith.addf %100, %106 : vector<8x128xf32>
    %cst_38 = arith.constant 0.797884583 : f32
    %108 = vector.broadcast %cst_38 : f32 to vector<8x128xf32>
    %109 = arith.mulf %108, %107 : vector<8x128xf32>
    %110 = math.tanh %109 : vector<8x128xf32>
    %cst_39 = arith.constant 1.000000e+00 : f32
    %111 = vector.broadcast %cst_39 : f32 to vector<8x128xf32>
    %112 = arith.addf %111, %110 : vector<8x128xf32>
    %113 = arith.mulf %102, %112 : vector<8x128xf32>
    %114 = arith.truncf %113 : vector<8x128xf32> to vector<8x128xbf16>
    %c0_40 = arith.constant 0 : index
    %c0_41 = arith.constant 0 : index
    %115 = vector.load %arg11[%c0_40, %c0_41] : memref<128x32xbf16, #tpu.memory_space<vmem>>, vector<128x32xbf16>
    %cst_42 = arith.constant dense<0.000000e+00> : vector<8x32xf32>
    %116 = tpu.matmul %114, %115, %cst_42 {dimension_numbers = #tpu.dot_dimension_numbers<[1], [0], [0], [1], [0, 0, 1, 1], [], []>} : vector<8x128xbf16>, vector<128x32xbf16>, vector<8x32xf32> -> vector<8x32xf32>
    %c0_43 = arith.constant 0 : index
    %c0_44 = arith.constant 0 : index
    %117 = vector.load %arg12[%c0_43, %c0_44] : memref<1x32xf32, #tpu.memory_space<vmem>>, vector<1x32xf32>
    %118 = vector.shape_cast %117 : vector<1x32xf32> to vector<32xf32>
    %119 = vector.shape_cast %118 : vector<32xf32> to vector<1x32xf32>
    %120 = vector.broadcast %119 : vector<1x32xf32> to vector<8x32xf32>
    %121 = arith.addf %116, %120 : vector<8x32xf32>
    %122 = arith.addf %64, %121 : vector<8x32xf32>
    %c0_45 = arith.constant 0 : index
    %c0_46 = arith.constant 0 : index
    %c0_47 = arith.constant 0 : index
    %123 = vector.load %arg13[%c0_45, %c0_46, %c0_47] : memref<1x8x32xf32, #tpu.memory_space<vmem>>, vector<1x8x32xf32>
    %124 = vector.shape_cast %123 : vector<1x8x32xf32> to vector<8x32xf32>
    %125 = vector.shape_cast %122 : vector<8x32xf32> to vector<1x8x32xf32>
    tpu.vector_store %arg13[%c0_45, %c0_46, %c0_47], %125 {strides = array<i32>} : memref<1x8x32xf32, #tpu.memory_space<vmem>>, vector<1x8x32xf32>,
    return
  }
  func.func @transform_0(%arg0: i32) -> (i32, i32, i32) {
    %c0_i32 = arith.constant 0 : i32
    %c0_i32_0 = arith.constant 0 : i32
    %c0_i32_1 = arith.constant 0 : i32
    return %arg0, %c0_i32, %c0_i32_0 : i32, i32, i32
  }
  func.func @transform_1(%arg0: i32) -> (i32, i32) {
    %c0_i32 = arith.constant 0 : i32
    %c0_i32_0 = arith.constant 0 : i32
    %c0_i32_1 = arith.constant 0 : i32
    return %c0_i32, %c0_i32_0 : i32, i32
  }
  func.func @transform_2(%arg0: i32) -> (i32, i32) {
    %c0_i32 = arith.constant 0 : i32
    %c0_i32_0 = arith.constant 0 : i32
    %c0_i32_1 = arith.constant 0 : i32
    return %c0_i32, %c0_i32_0 : i32, i32
  }
  func.func @transform_3(%arg0: i32) -> (i32, i32) {
    %c0_i32 = arith.constant 0 : i32
    %c0_i32_0 = arith.constant 0 : i32
    %c0_i32_1 = arith.constant 0 : i32
    return %c0_i32, %c0_i32_0 : i32, i32
  }
  func.func @transform_4(%arg0: i32) -> (i32, i32) {
    %c0_i32 = arith.constant 0 : i32
    %c0_i32_0 = arith.constant 0 : i32
    %c0_i32_1 = arith.constant 0 : i32
    return %c0_i32, %c0_i32_0 : i32, i32
  }
  func.func @transform_5(%arg0: i32) -> (i32, i32) {
    %c0_i32 = arith.constant 0 : i32
    %c0_i32_0 = arith.constant 0 : i32
    %c0_i32_1 = arith.constant 0 : i32
    return %c0_i32, %c0_i32_0 : i32, i32
  }
  func.func @transform_6(%arg0: i32) -> (i32, i32) {
    %c0_i32 = arith.constant 0 : i32
    %c0_i32_0 = arith.constant 0 : i32
    %c0_i32_1 = arith.constant 0 : i32
    return %c0_i32, %c0_i32_0 : i32, i32
  }
  func.func @transform_7(%arg0: i32) -> (i32, i32) {
    %c0_i32 = arith.constant 0 : i32
    %c0_i32_0 = arith.constant 0 : i32
    %c0_i32_1 = arith.constant 0 : i32
    return %c0_i32, %c0_i32_0 : i32, i32
  }
  func.func @transform_8(%arg0: i32) -> (i32, i32) {
    %c0_i32 = arith.constant 0 : i32
    %c0_i32_0 = arith.constant 0 : i32
    %c0_i32_1 = arith.constant 0 : i32
    return %c0_i32, %c0_i32_0 : i32, i32
  }
  func.func @transform_9(%arg0: i32) -> (i32, i32) {
    %c0_i32 = arith.constant 0 : i32
    %c0_i32_0 = arith.constant 0 : i32
    %c0_i32_1 = arith.constant 0 : i32
    return %c0_i32, %c0_i32_0 : i32, i32
  }
  func.func @transform_10(%arg0: i32) -> (i32, i32) {
    %c0_i32 = arith.constant 0 : i32
    %c0_i32_0 = arith.constant 0 : i32
    %c0_i32_1 = arith.constant 0 : i32
    return %c0_i32, %c0_i32_0 : i32, i32
  }
  func.func @transform_11(%arg0: i32) -> (i32, i32) {
    %c0_i32 = arith.constant 0 : i32
    %c0_i32_0 = arith.constant 0 : i32
    %c0_i32_1 = arith.constant 0 : i32
    return %c0_i32, %c0_i32_0 : i32, i32
  }
  func.func @transform_12(%arg0: i32) -> (i32, i32, i32) {
    %c0_i32 = arith.constant 0 : i32
    %c0_i32_0 = arith.constant 0 : i32
    %c0_i32_1 = arith.constant 0 : i32
    return %arg0, %c0_i32, %c0_i32_0 : i32, i32, i32
  }
}

</mosaic_0001>

<llo_original>
// kernel: tpu_custom_call.1
$region0: #{tpu_custom_call.1}
  #allocation0 [shape = 'u32[]', space=smem, size = 0x4, offset = 0x4, fixed_abs, tag = 'smem constant byte address 0x4 - core index']
  #allocation1 [shape = 'u32[144,128]{1,0:T(1,128)}', space=vmem, size = 0x12000, scoped, tag = 'internal scratch']
  %s0 = inlined_call_operand.vmem [shape: f32[2,8,32], index: 0, kind: input, shape index: {}]
  %s1 = inlined_call_operand.vmem [shape: f32[1,32], index: 1, kind: input, shape index: {}]
  %s2 = inlined_call_operand.vmem [shape: f32[1,32], index: 2, kind: input, shape index: {}]
  %s3 = inlined_call_operand.vmem [shape: bf16[32,96], index: 3, kind: input, shape index: {}]
  %s4 = inlined_call_operand.vmem [shape: bf16[32,32], index: 4, kind: input, shape index: {}]
  %s5 = inlined_call_operand.vmem [shape: f32[1,32], index: 5, kind: input, shape index: {}]
  %s6 = inlined_call_operand.vmem [shape: f32[1,32], index: 6, kind: input, shape index: {}]
  %s7 = inlined_call_operand.vmem [shape: f32[1,32], index: 7, kind: input, shape index: {}]
  %s8 = inlined_call_operand.vmem [shape: bf16[32,128], index: 8, kind: input, shape index: {}]
  %s9 = inlined_call_operand.vmem [shape: f32[1,128], index: 9, kind: input, shape index: {}]
  %s10 = inlined_call_operand.vmem [shape: bf16[128,32], index: 10, kind: input, shape index: {}]
  %s11 = inlined_call_operand.vmem [shape: f32[1,32], index: 11, kind: input, shape index: {}]
  %s12 = inlined_call_operand.hbm [shape: f32[2,8,32], index: 12, kind: output, shape index: {}]
  %s13 = sld [smem:[#allocation0]]
  $region81: #{tpu_custom_call.1} parent=0
    _
  %s15 = ssub.s32 1, %s13
  %s16 = scalar_select 0, %s15, %s13
  $region1: #{tpu_custom_call.1} parent=0
    #allocation2 [shape = 'u8[8192]{0}', space=vmem, size = 0x2000, scoped, tag = 'output window, operand 0']
    #allocation3 [shape = 's32[2]{0}', space=sflag, size = 0x8, scoped, tag = 'scoped memory for tpu_custom_call.1']
    %17 = vsyncpa [#allocation3], 0
    %s18 = scalar_lea.sflag [#allocation3], 1
    %19 = vsyncpa %s18, 0
    loop: start=0, step=1, limit=4
    $region2: #{tpu_custom_call.1} parent=1 // loop_pre_header
      _
    $region3: #{tpu_custom_call.1} parent=1 // loop_header
      %s21 = sphi 0, %s25
      %p22 = scmp.ge.s32.totalorder %s21, 4
      %s31 = sphi 0, %s33
      %s34 = sphi 0, %s31
      %s35 = sphi 0, %s34
      %s51 = sphi 0, %s35
      %s55 = sphi 0, %s55
      %s57 = sphi 0, %s55
      %s58 = sphi 0, %s57
      %s72 = sphi 0, %s58
      %s76 = sphi 0, %s76
      %s78 = sphi 0, %s76
      %s79 = sphi 0, %s78
      %s93 = sphi 0, %s79
      %s97 = sphi 0, %s97
      %s99 = sphi 0, %s97
      %s100 = sphi 0, %s99
      %s114 = sphi 0, %s100
      %s118 = sphi 0, %s118
      %s120 = sphi 0, %s118
      %s121 = sphi 0, %s120
      %s135 = sphi 0, %s121
      %s139 = sphi 0, %s139
      %s141 = sphi 0, %s139
      %s142 = sphi 0, %s141
      %s156 = sphi 0, %s142
      %s160 = sphi 0, %s160
      %s162 = sphi 0, %s160
      %s163 = sphi 0, %s162
      %s177 = sphi 0, %s163
      %s181 = sphi 0, %s181
      %s183 = sphi 0, %s181
      %s184 = sphi 0, %s183
      %s198 = sphi 0, %s184
      %s202 = sphi 0, %s202
      %s204 = sphi 0, %s202
      %s205 = sphi 0, %s204
      %s219 = sphi 0, %s205
      %s223 = sphi 0, %s223
      %s225 = sphi 0, %s223
      %s226 = sphi 0, %s225
      %s240 = sphi 0, %s226
      %s244 = sphi 0, %s244
      %s246 = sphi 0, %s244
      %s247 = sphi 0, %s246
      %s261 = sphi 0, %s247
      %s265 = sphi 0, %s265
      %s267 = sphi 0, %s265
      %s268 = sphi 0, %s267
      %s282 = sphi 0, %s268
      %s288 = sphi 0, %s290
      %s291 = sphi 0, %s288
      %s292 = sphi 0, %s291
      %s308 = sphi 0, %s292
    $region4: #{tpu_custom_call.1} parent=1 // loop_header_branch
      %24 = sbr.rel (%p22) target = $region8
    $region5: #{tpu_custom_call.1} parent=1 // loop_body
      %s26 = ssub.s32 %s21, 1
      %s27 = ssub.s32 %s21, 2
      %s28 = sadd.s32 %s21, 1
      %s29 = ssub.s32 %s21, %s28
      %p30 = scmp.eq.s32.totalorder %s29, 0
      %s32 = sadd.s32 %s31, 1
      %s33 = scalar_select %p30, %s31, %s32
      %p36 = pneg %p30
      %p37 = scmp.eq.s32.totalorder %s21, 1
      %p38 = por %p36, %p37
      %p39 = scmp.ne.s32.totalorder %s31, %s34
      %p40 = scmp.eq.s32.totalorder %s21, 0
      %p41 = por %p39, %p40
      %p42 = scmp.ne.s32.totalorder %s31, %s34
      %p43 = scmp.eq.s32.totalorder %s26, 1
      %p44 = por %p42, %p43
      %p45 = scmp.ne.s32.totalorder %s34, %s35
      %p46 = scmp.eq.s32.totalorder %s26, 0
      %p47 = por %p45, %p46
      %p48 = scmp.ne.s32.totalorder %s34, %s35
      %p49 = scmp.eq.s32.totalorder %s27, 1
      %p50 = por %p48, %p49
      %p52 = scmp.ne.s32.totalorder %s35, %s51
      %p53 = scmp.eq.s32.totalorder %s27, 0
      %p54 = por %p52, %p53
      %s56 = sadd.s32 %s55, 1
      %p59 = scmp.eq.s32.totalorder %s21, 1
      %p60 = scmp.ne.s32.totalorder %s55, %s57
      %p61 = scmp.eq.s32.totalorder %s21, 0
      %p62 = por %p60, %p61
      %p63 = scmp.ne.s32.totalorder %s55, %s57
      %p64 = scmp.eq.s32.totalorder %s26, 1
      %p65 = por %p63, %p64
      %p66 = scmp.ne.s32.totalorder %s57, %s58
      %p67 = scmp.eq.s32.totalorder %s26, 0
      %p68 = por %p66, %p67
      %p69 = scmp.ne.s32.totalorder %s57, %s58
      %p70 = scmp.eq.s32.totalorder %s27, 1
      %p71 = por %p69, %p70
      %p73 = scmp.ne.s32.totalorder %s58, %s72
      %p74 = scmp.eq.s32.totalorder %s27, 0
      %p75 = por %p73, %p74
      %s77 = sadd.s32 %s76, 1
      %p80 = scmp.eq.s32.totalorder %s21, 1
      %p81 = scmp.ne.s32.totalorder %s76, %s78
      %p82 = scmp.eq.s32.totalorder %s21, 0
      %p83 = por %p81, %p82
      %p84 = scmp.ne.s32.totalorder %s76, %s78
      %p85 = scmp.eq.s32.totalorder %s26, 1
      %p86 = por %p84, %p85
      %p87 = scmp.ne.s32.totalorder %s78, %s79
      %p88 = scmp.eq.s32.totalorder %s26, 0
      %p89 = por %p87, %p88
      %p90 = scmp.ne.s32.totalorder %s78, %s79
      %p91 = scmp.eq.s32.totalorder %s27, 1
      %p92 = por %p90, %p91
      %p94 = scmp.ne.s32.totalorder %s79, %s93
      %p95 = scmp.eq.s32.totalorder %s27, 0
      %p96 = por %p94, %p95
      %s98 = sadd.s32 %s97, 1
      %p101 = scmp.eq.s32.totalorder %s21, 1
      %p102 = scmp.ne.s32.totalorder %s97, %s99
      %p103 = scmp.eq.s32.totalorder %s21, 0
      %p104 = por %p102, %p103
      %p105 = scmp.ne.s32.totalorder %s97, %s99
      %p106 = scmp.eq.s32.totalorder %s26, 1
      %p107 = por %p105, %p106
      %p108 = scmp.ne.s32.totalorder %s99, %s100
      %p109 = scmp.eq.s32.totalorder %s26, 0
      %p110 = por %p108, %p109
      %p111 = scmp.ne.s32.totalorder %s99, %s100
      %p112 = scmp.eq.s32.totalorder %s27, 1
      %p113 = por %p111, %p112
      %p115 = scmp.ne.s32.totalorder %s100, %s114
      %p116 = scmp.eq.s32.totalorder %s27, 0
      %p117 = por %p115, %p116
      %s119 = sadd.s32 %s118, 1
      %p122 = scmp.eq.s32.totalorder %s21, 1
      %p123 = scmp.ne.s32.totalorder %s118, %s120
      %p124 = scmp.eq.s32.totalorder %s21, 0
      %p125 = por %p123, %p124
      %p126 = scmp.ne.s32.totalorder %s118, %s120
      %p127 = scmp.eq.s32.totalorder %s26, 1
      %p128 = por %p126, %p127
      %p129 = scmp.ne.s32.totalorder %s120, %s121
      %p130 = scmp.eq.s32.totalorder %s26, 0
      %p131 = por %p129, %p130
      %p132 = scmp.ne.s32.totalorder %s120, %s121
      %p133 = scmp.eq.s32.totalorder %s27, 1
      %p134 = por %p132, %p133
      %p136 = scmp.ne.s32.totalorder %s121, %s135
      %p137 = scmp.eq.s32.totalorder %s27, 0
      %p138 = por %p136, %p137
      %s140 = sadd.s32 %s139, 1
      %p143 = scmp.eq.s32.totalorder %s21, 1
      %p144 = scmp.ne.s32.totalorder %s139, %s141
      %p145 = scmp.eq.s32.totalorder %s21, 0
      %p146 = por %p144, %p145
      %p147 = scmp.ne.s32.totalorder %s139, %s141
      %p148 = scmp.eq.s32.totalorder %s26, 1
      %p149 = por %p147, %p148
      %p150 = scmp.ne.s32.totalorder %s141, %s142
      %p151 = scmp.eq.s32.totalorder %s26, 0
      %p152 = por %p150, %p151
      %p153 = scmp.ne.s32.totalorder %s141, %s142
      %p154 = scmp.eq.s32.totalorder %s27, 1
      %p155 = por %p153, %p154
      %p157 = scmp.ne.s32.totalorder %s142, %s156
      %p158 = scmp.eq.s32.totalorder %s27, 0
      %p159 = por %p157, %p158
      %s161 = sadd.s32 %s160, 1
      %p164 = scmp.eq.s32.totalorder %s21, 1
      %p165 = scmp.ne.s32.totalorder %s160, %s162
      %p166 = scmp.eq.s32.totalorder %s21, 0
      %p167 = por %p165, %p166
      %p168 = scmp.ne.s32.totalorder %s160, %s162
      %p169 = scmp.eq.s32.totalorder %s26, 1
      %p170 = por %p168, %p169
      %p171 = scmp.ne.s32.totalorder %s162, %s163
      %p172 = scmp.eq.s32.totalorder %s26, 0
      %p173 = por %p171, %p172
      %p174 = scmp.ne.s32.totalorder %s162, %s163
      %p175 = scmp.eq.s32.totalorder %s27, 1
      %p176 = por %p174, %p175
      %p178 = scmp.ne.s32.totalorder %s163, %s177
      %p179 = scmp.eq.s32.totalorder %s27, 0
      %p180 = por %p178, %p179
      %s182 = sadd.s32 %s181, 1
      %p185 = scmp.eq.s32.totalorder %s21, 1
      %p186 = scmp.ne.s32.totalorder %s181, %s183
      %p187 = scmp.eq.s32.totalorder %s21, 0
      %p188 = por %p186, %p187
      %p189 = scmp.ne.s32.totalorder %s181, %s183
      %p190 = scmp.eq.s32.totalorder %s26, 1
      %p191 = por %p189, %p190
      %p192 = scmp.ne.s32.totalorder %s183, %s184
      %p193 = scmp.eq.s32.totalorder %s26, 0
      %p194 = por %p192, %p193
      %p195 = scmp.ne.s32.totalorder %s183, %s184
      %p196 = scmp.eq.s32.totalorder %s27, 1
      %p197 = por %p195, %p196
      %p199 = scmp.ne.s32.totalorder %s184, %s198
      %p200 = scmp.eq.s32.totalorder %s27, 0
      %p201 = por %p199, %p200
      %s203 = sadd.s32 %s202, 1
      %p206 = scmp.eq.s32.totalorder %s21, 1
      %p207 = scmp.ne.s32.totalorder %s202, %s204
      %p208 = scmp.eq.s32.totalorder %s21, 0
      %p209 = por %p207, %p208
      %p210 = scmp.ne.s32.totalorder %s202, %s204
      %p211 = scmp.eq.s32.totalorder %s26, 1
      %p212 = por %p210, %p211
      %p213 = scmp.ne.s32.totalorder %s204, %s205
      %p214 = scmp.eq.s32.totalorder %s26, 0
      %p215 = por %p213, %p214
      %p216 = scmp.ne.s32.totalorder %s204, %s205
      %p217 = scmp.eq.s32.totalorder %s27, 1
      %p218 = por %p216, %p217
      %p220 = scmp.ne.s32.totalorder %s205, %s219
      %p221 = scmp.eq.s32.totalorder %s27, 0
      %p222 = por %p220, %p221
      %s224 = sadd.s32 %s223, 1
      %p227 = scmp.eq.s32.totalorder %s21, 1
      %p228 = scmp.ne.s32.totalorder %s223, %s225
      %p229 = scmp.eq.s32.totalorder %s21, 0
      %p230 = por %p228, %p229
      %p231 = scmp.ne.s32.totalorder %s223, %s225
      %p232 = scmp.eq.s32.totalorder %s26, 1
      %p233 = por %p231, %p232
      %p234 = scmp.ne.s32.totalorder %s225, %s226
      %p235 = scmp.eq.s32.totalorder %s26, 0
      %p236 = por %p234, %p235
      %p237 = scmp.ne.s32.totalorder %s225, %s226
      %p238 = scmp.eq.s32.totalorder %s27, 1
      %p239 = por %p237, %p238
      %p241 = scmp.ne.s32.totalorder %s226, %s240
      %p242 = scmp.eq.s32.totalorder %s27, 0
      %p243 = por %p241, %p242
      %s245 = sadd.s32 %s244, 1
      %p248 = scmp.eq.s32.totalorder %s21, 1
      %p249 = scmp.ne.s32.totalorder %s244, %s246
      %p250 = scmp.eq.s32.totalorder %s21, 0
      %p251 = por %p249, %p250
      %p252 = scmp.ne.s32.totalorder %s244, %s246
      %p253 = scmp.eq.s32.totalorder %s26, 1
      %p254 = por %p252, %p253
      %p255 = scmp.ne.s32.totalorder %s246, %s247
      %p256 = scmp.eq.s32.totalorder %s26, 0
      %p257 = por %p255, %p256
      %p258 = scmp.ne.s32.totalorder %s246, %s247
      %p259 = scmp.eq.s32.totalorder %s27, 1
      %p260 = por %p258, %p259
      %p262 = scmp.ne.s32.totalorder %s247, %s261
      %p263 = scmp.eq.s32.totalorder %s27, 0
      %p264 = por %p262, %p263
      %s266 = sadd.s32 %s265, 1
      %p269 = scmp.eq.s32.totalorder %s21, 1
      %p270 = scmp.ne.s32.totalorder %s265, %s267
      %p271 = scmp.eq.s32.totalorder %s21, 0
      %p272 = por %p270, %p271
      %p273 = scmp.ne.s32.totalorder %s265, %s267
      %p274 = scmp.eq.s32.totalorder %s26, 1
      %p275 = por %p273, %p274
      %p276 = scmp.ne.s32.totalorder %s267, %s268
      %p277 = scmp.eq.s32.totalorder %s26, 0
      %p278 = por %p276, %p277
      %p279 = scmp.ne.s32.totalorder %s267, %s268
      %p280 = scmp.eq.s32.totalorder %s27, 1
      %p281 = por %p279, %p280
      %p283 = scmp.ne.s32.totalorder %s268, %s282
      %p284 = scmp.eq.s32.totalorder %s27, 0
      %p285 = por %p283, %p284
      %s286 = ssub.s32 %s21, %s28
      %p287 = scmp.eq.s32.totalorder %s286, 0
      %s289 = sadd.s32 %s288, 1
      %s290 = scalar_select %p287, %s288, %s289
      %p293 = pneg %p287
      %p294 = scmp.eq.s32.totalorder %s21, 1
      %p295 = por %p293, %p294
      %p296 = scmp.ne.s32.totalorder %s288, %s291
      %p297 = scmp.eq.s32.totalorder %s21, 0
      %p298 = por %p296, %p297
      %p299 = scmp.ne.s32.totalorder %s288, %s291
      %p300 = scmp.eq.s32.totalorder %s26, 1
      %p301 = por %p299, %p300
      %p302 = scmp.ne.s32.totalorder %s291, %s292
      %p303 = scmp.eq.s32.totalorder %s26, 0
      %p304 = por %p302, %p303
      %p305 = scmp.ne.s32.totalorder %s291, %s292
      %p306 = scmp.eq.s32.totalorder %s27, 1
      %p307 = por %p305, %p306
      %p309 = scmp.ne.s32.totalorder %s292, %s308
      %p310 = scmp.eq.s32.totalorder %s27, 0
      %p311 = por %p309, %p310
      %p312 = scmp.le.s32.totalorder 1, %s21
      %p313 = scmp.lt.s32.totalorder %s21, 3
      %p314 = pnand %p312, %p313
      %p315 = pneg %p314
      // Predicated region
      $region9: #{tpu_custom_call.1} parent=5 // pred_check
        _
      $region10: #{tpu_custom_call.1} parent=5 // pred_check_branch
        %317 = sbr.rel (%p314) target = $region12
      $region11: #{tpu_custom_call.1} parent=5 // pred_region
        %s318 = ssub.s32 %s21, 1
        // Predicated region
        $region13: #{tpu_custom_call.1} parent=11 // pred_check
          %p319 = pneg %p68
        $region14: #{tpu_custom_call.1} parent=11 // pred_check_branch
          %321 = sbr.rel (%p319) target = $region16
        $region15: #{tpu_custom_call.1} parent=11 // pred_region
          _
        $region16: #{tpu_custom_call.1} parent=11 // pred_fallthru
          _
        // Predicated region
        $region17: #{tpu_custom_call.1} parent=11 // pred_check
          %p322 = pneg %p89
        $region18: #{tpu_custom_call.1} parent=11 // pred_check_branch
          %324 = sbr.rel (%p322) target = $region20
        $region19: #{tpu_custom_call.1} parent=11 // pred_region
          _
        $region20: #{tpu_custom_call.1} parent=11 // pred_fallthru
          _
        // Predicated region
        $region21: #{tpu_custom_call.1} parent=11 // pred_check
          %p325 = pneg %p110
        $region22: #{tpu_custom_call.1} parent=11 // pred_check_branch
          %327 = sbr.rel (%p325) target = $region24
        $region23: #{tpu_custom_call.1} parent=11 // pred_region
          _
        $region24: #{tpu_custom_call.1} parent=11 // pred_fallthru
          _
        // Predicated region
        $region25: #{tpu_custom_call.1} parent=11 // pred_check
          %p328 = pneg %p131
        $region26: #{tpu_custom_call.1} parent=11 // pred_check_branch
          %330 = sbr.rel (%p328) target = $region28
        $region27: #{tpu_custom_call.1} parent=11 // pred_region
          _
        $region28: #{tpu_custom_call.1} parent=11 // pred_fallthru
          _
        // Predicated region
        $region29: #{tpu_custom_call.1} parent=11 // pred_check
          %p331 = pneg %p152
        $region30: #{tpu_custom_call.1} parent=11 // pred_check_branch
          %333 = sbr.rel (%p331) target = $region32
        $region31: #{tpu_custom_call.1} parent=11 // pred_region
          _
        $region32: #{tpu_custom_call.1} parent=11 // pred_fallthru
          _
        // Predicated region
        $region33: #{tpu_custom_call.1} parent=11 // pred_check
          %p334 = pneg %p173
        $region34: #{tpu_custom_call.1} parent=11 // pred_check_branch
          %336 = sbr.rel (%p334) target = $region36
        $region35: #{tpu_custom_call.1} parent=11 // pred_region
          _
        $region36: #{tpu_custom_call.1} parent=11 // pred_fallthru
          _
        // Predicated region
        $region37: #{tpu_custom_call.1} parent=11 // pred_check
          %p337 = pneg %p194
        $region38: #{tpu_custom_call.1} parent=11 // pred_check_branch
          %339 = sbr.rel (%p337) target = $region40
        $region39: #{tpu_custom_call.1} parent=11 // pred_region
          _
        $region40: #{tpu_custom_call.1} parent=11 // pred_fallthru
          _
        // Predicated region
        $region41: #{tpu_custom_call.1} parent=11 // pred_check
          %p340 = pneg %p215
        $region42: #{tpu_custom_call.1} parent=11 // pred_check_branch
          %342 = sbr.rel (%p340) target = $region44
        $region43: #{tpu_custom_call.1} parent=11 // pred_region
          _
        $region44: #{tpu_custom_call.1} parent=11 // pred_fallthru
          _
        // Predicated region
        $region45: #{tpu_custom_call.1} parent=11 // pred_check
          %p343 = pneg %p236
        $region46: #{tpu_custom_call.1} parent=11 // pred_check_branch
          %345 = sbr.rel (%p343) target = $region48
        $region47: #{tpu_custom_call.1} parent=11 // pred_region
          _
        $region48: #{tpu_custom_call.1} parent=11 // pred_fallthru
          _
        // Predicated region
        $region49: #{tpu_custom_call.1} parent=11 // pred_check
          %p346 = pneg %p257
        $region50: #{tpu_custom_call.1} parent=11 // pred_check_branch
          %348 = sbr.rel (%p346) target = $region52
        $region51: #{tpu_custom_call.1} parent=11 // pred_region
          _
        $region52: #{tpu_custom_call.1} parent=11 // pred_fallthru
          _
        // Predicated region
        $region53: #{tpu_custom_call.1} parent=11 // pred_check
          %p349 = pneg %p278
        $region54: #{tpu_custom_call.1} parent=11 // pred_check_branch
          %351 = sbr.rel (%p349) target = $region56
        $region55: #{tpu_custom_call.1} parent=11 // pred_region
          _
        $region56: #{tpu_custom_call.1} parent=11 // pred_fallthru
          _
      $region12: #{tpu_custom_call.1} parent=5 // pred_fallthru
        _
      %p352 = scmp.lt.s32.totalorder %s21, 2
      // Predicated region
      $region57: #{tpu_custom_call.1} parent=5 // pred_check
        %p353 = pneg %p352
      $region58: #{tpu_custom_call.1} parent=5 // pred_check_branch
        %355 = sbr.rel (%p353) target = $region60
      $region59: #{tpu_custom_call.1} parent=5 // pred_region
        // Predicated region
        $region61: #{tpu_custom_call.1} parent=59 // pred_check
          %p356 = pneg %p41
        $region62: #{tpu_custom_call.1} parent=59 // pred_check_branch
          %358 = sbr.rel (%p356) target = $region64
        $region63: #{tpu_custom_call.1} parent=59 // pred_region
          %p359 = scmp.lt.s32.totalorder %s21, 1
          %s360 = scalar_select %p359, %s21, 1
          %s361 = smul.addr %s360, 8
          %s362 = scalar_lea.vmem %s0, %s361
        $region64: #{tpu_custom_call.1} parent=59 // pred_fallthru
          _
      $region60: #{tpu_custom_call.1} parent=5 // pred_fallthru
        _
      %p363 = scmp.le.s32.totalorder 1, %s21
      %p364 = scmp.lt.s32.totalorder %s21, 3
      %p365 = pnand %p363, %p364
      %p366 = pneg %p365
      // Predicated region
      $region65: #{tpu_custom_call.1} parent=5 // pred_check
        _
      $region66: #{tpu_custom_call.1} parent=5 // pred_check_branch
        %368 = sbr.rel (%p365) target = $region68
      $region67: #{tpu_custom_call.1} parent=5 // pred_region
        %s369 = ssub.s32 %s21, 1
        %p370 = scmp.lt.s32.totalorder %s26, 1
        %s371 = scalar_select %p370, %s26, 1
        %s372 = smul.addr %s371, 8
        %s373 = scalar_lea.vmem %s0, %s372
        %p374 = pneg %p47
        %p375 = pneg %p44
        %p376 = pneg %p68
        %p377 = pneg %p65
        %p378 = pneg %p89
        %p379 = pneg %p86
        %p380 = pneg %p110
        %p381 = pneg %p107
        %p382 = pneg %p131
        %p383 = pneg %p128
        %p384 = pneg %p152
        %p385 = pneg %p149
        %p386 = pneg %p173
        %p387 = pneg %p170
        %p388 = pneg %p194
        %p389 = pneg %p191
        %p390 = pneg %p215
        %p391 = pneg %p212
        %p392 = pneg %p236
        %p393 = pneg %p233
        %p394 = pneg %p257
        %p395 = pneg %p254
        %p396 = pneg %p278
        %p397 = pneg %p275
        %p398 = pneg %p304
        %p399 = pneg %p301
        %s400 = sand.u32 %s291, 1
        %s401 = scalar_lea.sflag [#allocation3], %s400
        %s402 = sand.u32 %s291, 1
        %s403 = smul.addr %s402, 8
        %s404 = scalar_lea.vmem [#allocation2], %s403
        %p405 = scmp.lt.s32.totalorder %s26, 1
        %s406 = scalar_select %p405, %s26, 1
        %s407 = smul.addr %s406, 8
        %s408 = scalar_lea.vmem %s0, %s407
        %v410 = vld [vmem:[%s408] sm:$0xff]
        %v411 = vld [vmem:[%s1] sm:$0x1]
        %v412 = vld [vmem:[%s2] sm:$0x1]
        %vm413 = vcmask 261120
        %v414 = vsel %vm413, %v410, 0.0
        %415 = vadd.xlane.f32.xlu0 %v414
        %v416 = vpop.xlane.xlu0 %415
        %v417 = vrcp.pop 32.0
        %v418 = vmul.f32 %v416, %v417
        %v419 = vsub.f32 %v410, %v418
        %v420 = vmul.f32 %v419, %v419
        %v421 = vsel %vm413, %v420, 0.0
        %422 = vadd.xlane.f32.xlu0 %v421
        %v423 = vpop.xlane.xlu0 %422
        %v424 = vmul.f32 %v423, %v417
        %v425 = vadd.f32 %v424, 1e-05
        %v426 = vrsqrt.pop %v425
        %v427 = vmul.f32 %v419, %v426
        %v429 = vlaneseq
        %v430 = vshrl.u32 %v429, 7
        %v431 = vsub.s32 0, %v430
        %v432 = vrot.slane %v411, %v431
        %v434 = vmul.f32 %v427, %v432
        %v436 = vlaneseq
        %v437 = vshrl.u32 %v436, 7
        %v438 = vsub.s32 0, %v437
        %v439 = vrot.slane %v412, %v438
        %v441 = vadd.f32 %v434, %v439
        %v442 = vpack.c.bf16 %v441, %v441
        %v443 = vld [vmem:[%s3] sm:$0xf]
        %v444 = vld [vmem:[%s3 + $0x4] sm:$0xf]
        %v445 = vld [vmem:[%s3 + $0x8] sm:$0xf]
        %v446 = vld [vmem:[%s3 + $0xc] sm:$0xf]
        %v451 = vunpack.c.l.b16 %v443
        %v452 = vunpack.c.l.b16 %v444
        %v453 = vunpack.c.l.b16 %v445
        %v454 = vunpack.c.l.b16 %v446
        %v455 = vpack.c.b16 %v452, %v451
        %v456 = vpack.c.b16 %v454, %v453
        %v460 = vsel %vm413, %v442, 0
        %462 = vmatprep.subr.bf16.mxu0 0
        %463 = vmatpush1.bf16.msra.mxu0 0
        %464 = vmatprep.subr.bf16.mxu0 0
        %465 = vmatpush1.bf16.msra.mxu0 0
        %466 = vmatprep.subr.bf16.mxu0 0
        %467 = vmatpush1.bf16.msra.mxu0 0
        %468 = vmatprep.subr.bf16.mxu0 0
        %469 = vmatpush1.bf16.msra.mxu0 0
        %470 = vmatprep.subr.bf16.mxu0 0
        %471 = vmatpush1.bf16.msra.mxu0 0
        %472 = vmatprep.subr.bf16.mxu0 0
        %473 = vmatpush1.bf16.msra.mxu0 0
        %474 = vmatprep.subr.bf16.mxu0 0
        %475 = vmatpush1.bf16.msra.mxu0 %v456
        %476 = vmatprep.subr.bf16.mxu0 0
        %477 = vmatpush1.bf16.msra.mxu0 %v455
        %478 = vmatprep.subr.bf16.mxu0 0
        %479 = vmatpush2.bf16.msra.mxu0 0
        %480 = vmatprep.subr.bf16.mxu0 0
        %481 = vmatpush2.bf16.msra.mxu0 0
        %482 = vmatprep.subr.bf16.mxu0 0
        %483 = vmatpush2.bf16.msra.mxu0 0
        %484 = vmatprep.subr.bf16.mxu0 0
        %485 = vmatpush2.bf16.msra.mxu0 0
        %486 = vmatprep.subr.bf16.mxu0 0
        %487 = vmatpush2.bf16.msra.mxu0 0
        %488 = vmatprep.subr.bf16.mxu0 0
        %489 = vmatpush2.bf16.msra.mxu0 0
        %490 = vmatprep.subr.bf16.mxu0 0
        %491 = vmatpush2.bf16.msra.mxu0 0
        %492 = vmatprep.subr.bf16.mxu0 0
        %493 = vmatpush2.bf16.msra.mxu0 0
        %494 = vmatprep.mubr.bf16.mxu0 0
        %495 = vmatmul.mubr.bf16.gmra.mxu0 %v460
        %v496 = vpop.f32.mrf.mxu0
        %v497 = vadd.f32 0.0, %v496
        %v498 = vpop.f32.mrf.mxu0
        %v499 = vpop.f32.mrf.mxu0
        %v500 = vpop.f32.mrf.mxu0
        %501 = vdwg.mxu0
        %v502 = vpack.c.bf16 %v497, %v497
        %504 = vrot.lane.b32.xlu0 %v502, 120
        %v505 = vpop.permute.xlu0 %504
        %507 = vrot.lane.b32.xlu0 %v502, 112
        %v508 = vpop.permute.xlu0 %507
        %510 = vrot.lane.b32.xlu0 %v502, 104
        %v511 = vpop.permute.xlu0 %510
        %513 = vrot.lane.b32.xlu0 %v502, 96
        %v514 = vpop.permute.xlu0 %513
        %516 = vrot.lane.b32.xlu0 %v502, 88
        %v517 = vpop.permute.xlu0 %516
        %519 = vrot.lane.b32.xlu0 %v502, 80
        %v520 = vpop.permute.xlu0 %519
        %522 = vrot.lane.b32.xlu0 %v502, 72
        %v523 = vpop.permute.xlu0 %522
        %525 = vrot.lane.b32.xlu0 %v502, 64
        %v526 = vpop.permute.xlu0 %525
        %527 = vrot.lane.b32.xlu0 %v502, 56
        %v528 = vpop.permute.xlu0 %527
        %529 = vrot.lane.b32.xlu0 %v502, 48
        %v530 = vpop.permute.xlu0 %529
        %531 = vrot.lane.b32.xlu0 %v502, 40
        %v532 = vpop.permute.xlu0 %531
        %v533 = vcombine.low %v502, %v514
        %v535 = vunpack.c.l.s4 1983009808
        %v536 = vunpack.c.0.s8 %v535
        %v537 = vlaneseq
        %v538 = vshrl.u32 %v537, 7
        %v539 = vsub.s32 %v536, %v538
        %v540 = vrot.slane %v533, %v539
        %v541 = vcombine.low %v508, %v520
        %v543 = vunpack.c.l.s4 1983009808
        %v544 = vunpack.c.0.s8 %v543
        %v545 = vlaneseq
        %v546 = vshrl.u32 %v545, 7
        %v547 = vsub.s32 %v544, %v546
        %v548 = vrot.slane %v541, %v547
        %v551 = vunpack.c.l.s4 1983009808
        %v552 = vunpack.c.0.s8 %v551
        %v553 = vlaneseq
        %v554 = vshrl.u32 %v553, 7
        %v555 = vsub.s32 %v552, %v554
        %v556 = vrot.slane %v526, %v555
        %v559 = vunpack.c.l.s4 1983009808
        %v560 = vunpack.c.0.s8 %v559
        %v561 = vlaneseq
        %v562 = vshrl.u32 %v561, 7
        %v563 = vsub.s32 %v560, %v562
        %v564 = vrot.slane %v530, %v563
        %v565 = vcombine.low %v540, %v548
        %v566 = vcombine.high %v540, %v548
        %v568 = vunpack.c.l.s4 1934713408
        %v569 = vunpack.c.0.s8 %v568
        %v570 = vlaneseq
        %v571 = vshrl.u32 %v570, 7
        %v572 = vsub.s32 %v569, %v571
        %v573 = vrot.slane %v565, %v572
        %v575 = vunpack.c.l.s4 1934713408
        %v576 = vunpack.c.0.s8 %v575
        %v577 = vlaneseq
        %v578 = vshrl.u32 %v577, 7
        %v579 = vsub.s32 %v576, %v578
        %v580 = vrot.slane %v566, %v579
        %v581 = vcombine.low %v556, %v564
        %v582 = vcombine.high %v556, %v564
        %v584 = vunpack.c.l.s4 1934713408
        %v585 = vunpack.c.0.s8 %v584
        %v586 = vlaneseq
        %v587 = vshrl.u32 %v586, 7
        %v588 = vsub.s32 %v585, %v587
        %v589 = vrot.slane %v581, %v588
        %v591 = vunpack.c.l.s4 1934713408
        %v592 = vunpack.c.0.s8 %v591
        %v593 = vlaneseq
        %v594 = vshrl.u32 %v593, 7
        %v595 = vsub.s32 %v592, %v594
        %v596 = vrot.slane %v582, %v595
        %v597 = vcombine.low %v573, %v589
        %v598 = vcombine.high %v573, %v589
        %v599 = vcombine.low %v580, %v596
        %v600 = vcombine.high %v580, %v596
        %v601 = vcombine.low %v505, %v517
        %v603 = vunpack.c.l.s4 1983009808
        %v604 = vunpack.c.0.s8 %v603
        %v605 = vlaneseq
        %v606 = vshrl.u32 %v605, 7
        %v607 = vsub.s32 %v604, %v606
        %v608 = vrot.slane %v601, %v607
        %v609 = vcombine.low %v511, %v523
        %v611 = vunpack.c.l.s4 1983009808
        %v612 = vunpack.c.0.s8 %v611
        %v613 = vlaneseq
        %v614 = vshrl.u32 %v613, 7
        %v615 = vsub.s32 %v612, %v614
        %v616 = vrot.slane %v609, %v615
        %v619 = vunpack.c.l.s4 1983009808
        %v620 = vunpack.c.0.s8 %v619
        %v621 = vlaneseq
        %v622 = vshrl.u32 %v621, 7
        %v623 = vsub.s32 %v620, %v622
        %v624 = vrot.slane %v528, %v623
        %v627 = vunpack.c.l.s4 1983009808
        %v628 = vunpack.c.0.s8 %v627
        %v629 = vlaneseq
        %v630 = vshrl.u32 %v629, 7
        %v631 = vsub.s32 %v628, %v630
        %v632 = vrot.slane %v532, %v631
        %v633 = vcombine.low %v608, %v616
        %v634 = vcombine.high %v608, %v616
        %v636 = vunpack.c.l.s4 1934713408
        %v637 = vunpack.c.0.s8 %v636
        %v638 = vlaneseq
        %v639 = vshrl.u32 %v638, 7
        %v640 = vsub.s32 %v637, %v639
        %v641 = vrot.slane %v633, %v640
        %v643 = vunpack.c.l.s4 1934713408
        %v644 = vunpack.c.0.s8 %v643
        %v645 = vlaneseq
        %v646 = vshrl.u32 %v645, 7
        %v647 = vsub.s32 %v644, %v646
        %v648 = vrot.slane %v634, %v647
        %v649 = vcombine.low %v624, %v632
        %v650 = vcombine.high %v624, %v632
        %v652 = vunpack.c.l.s4 1934713408
        %v653 = vunpack.c.0.s8 %v652
        %v654 = vlaneseq
        %v655 = vshrl.u32 %v654, 7
        %v656 = vsub.s32 %v653, %v655
        %v657 = vrot.slane %v649, %v656
        %v659 = vunpack.c.l.s4 1934713408
        %v660 = vunpack.c.0.s8 %v659
        %v661 = vlaneseq
        %v662 = vshrl.u32 %v661, 7
        %v663 = vsub.s32 %v660, %v662
        %v664 = vrot.slane %v650, %v663
        %v665 = vcombine.low %v641, %v657
        %v666 = vcombine.high %v641, %v657
        %v667 = vcombine.low %v648, %v664
        %v668 = vcombine.high %v648, %v664
        %v671 = vpack.i.b16 %v665, %v597
        %v673 = vshrl.u32 %v597, 16
        %v674 = vshrl.u32 %v665, 16
        %v675 = vpack.i.b16 %v674, %v673
        %v679 = vpack.i.b16 %v666, %v598
        %v681 = vshrl.u32 %v598, 16
        %v682 = vshrl.u32 %v666, 16
        %v683 = vpack.i.b16 %v682, %v681
        %v687 = vpack.i.b16 %v667, %v599
        %v689 = vshrl.u32 %v599, 16
        %v690 = vshrl.u32 %v667, 16
        %v691 = vpack.i.b16 %v690, %v689
        %v695 = vpack.i.b16 %v668, %v600
        %v697 = vshrl.u32 %v600, 16
        %v698 = vshrl.u32 %v668, 16
        %v699 = vpack.i.b16 %v698, %v697
        %v701 = vcombine.low %v671, %v687
        %v703 = vunpack.c.l.s4 1983009808
        %v704 = vunpack.c.0.s8 %v703
        %v705 = vlaneseq
        %v706 = vshrl.u32 %v705, 7
        %v707 = vsub.s32 %v704, %v706
        %v708 = vrot.slane %v701, %v707
        %v709 = vcombine.low %v679, %v695
        %v711 = vunpack.c.l.s4 1983009808
        %v712 = vunpack.c.0.s8 %v711
        %v713 = vlaneseq
        %v714 = vshrl.u32 %v713, 7
        %v715 = vsub.s32 %v712, %v714
        %v716 = vrot.slane %v709, %v715
        %v717 = vcombine.low %v708, %v716
        %v719 = vunpack.c.l.s4 1934713408
        %v720 = vunpack.c.0.s8 %v719
        %v721 = vlaneseq
        %v722 = vshrl.u32 %v721, 7
        %v723 = vsub.s32 %v720, %v722
        %v724 = vrot.slane %v717, %v723
        %v725 = vcombine.high %v724, 0
        %v726 = vcombine.low %v675, %v691
        %v728 = vunpack.c.l.s4 1983009808
        %v729 = vunpack.c.0.s8 %v728
        %v730 = vlaneseq
        %v731 = vshrl.u32 %v730, 7
        %v732 = vsub.s32 %v729, %v731
        %v733 = vrot.slane %v726, %v732
        %v734 = vcombine.low %v683, %v699
        %v736 = vunpack.c.l.s4 1983009808
        %v737 = vunpack.c.0.s8 %v736
        %v738 = vlaneseq
        %v739 = vshrl.u32 %v738, 7
        %v740 = vsub.s32 %v737, %v739
        %v741 = vrot.slane %v734, %v740
        %v742 = vcombine.low %v733, %v741
        %v744 = vunpack.c.l.s4 1934713408
        %v745 = vunpack.c.0.s8 %v744
        %v746 = vlaneseq
        %v747 = vshrl.u32 %v746, 7
        %v748 = vsub.s32 %v745, %v747
        %v749 = vrot.slane %v742, %v748
        %v750 = vcombine.high %v749, 0
        %v753 = vpack.i.b16 %v749, %v724
        %v754 = vshrl.u32 %v724, 16
        %v755 = vshrl.u32 %v749, 16
        %v756 = vpack.i.b16 %v755, %v754
        %v759 = vpack.i.b16 %v750, %v725
        %v760 = vshrl.u32 %v725, 16
        %v761 = vshrl.u32 %v750, 16
        %v762 = vpack.i.b16 %v761, %v760
        %v763 = vrot.slane %v671, 2
        %v764 = vrot.slane %v675, 2
        %v765 = vrot.slane %v679, 2
        %v766 = vrot.slane %v683, 2
        %v767 = vrot.slane %v687, 2
        %v768 = vrot.slane %v691, 2
        %v769 = vrot.slane %v695, 2
        %v770 = vrot.slane %v699, 2
        %v779 = vcombine.low %v763, %v767
        %v781 = vunpack.c.l.s4 1983009808
        %v782 = vunpack.c.0.s8 %v781
        %v783 = vlaneseq
        %v784 = vshrl.u32 %v783, 7
        %v785 = vsub.s32 %v782, %v784
        %v786 = vrot.slane %v779, %v785
        %v787 = vcombine.low %v765, %v769
        %v789 = vunpack.c.l.s4 1983009808
        %v790 = vunpack.c.0.s8 %v789
        %v791 = vlaneseq
        %v792 = vshrl.u32 %v791, 7
        %v793 = vsub.s32 %v790, %v792
        %v794 = vrot.slane %v787, %v793
        %v795 = vcombine.low %v786, %v794
        %v797 = vunpack.c.l.s4 1934713408
        %v798 = vunpack.c.0.s8 %v797
        %v799 = vlaneseq
        %v800 = vshrl.u32 %v799, 7
        %v801 = vsub.s32 %v798, %v800
        %v802 = vrot.slane %v795, %v801
        %v803 = vcombine.high %v802, 0
        %v804 = vcombine.low %v764, %v768
        %v806 = vunpack.c.l.s4 1983009808
        %v807 = vunpack.c.0.s8 %v806
        %v808 = vlaneseq
        %v809 = vshrl.u32 %v808, 7
        %v810 = vsub.s32 %v807, %v809
        %v811 = vrot.slane %v804, %v810
        %v812 = vcombine.low %v766, %v770
        %v814 = vunpack.c.l.s4 1983009808
        %v815 = vunpack.c.0.s8 %v814
        %v816 = vlaneseq
        %v817 = vshrl.u32 %v816, 7
        %v818 = vsub.s32 %v815, %v817
        %v819 = vrot.slane %v812, %v818
        %v820 = vcombine.low %v811, %v819
        %v822 = vunpack.c.l.s4 1934713408
        %v823 = vunpack.c.0.s8 %v822
        %v824 = vlaneseq
        %v825 = vshrl.u32 %v824, 7
        %v826 = vsub.s32 %v823, %v825
        %v827 = vrot.slane %v820, %v826
        %v828 = vcombine.high %v827, 0
        %v831 = vpack.i.b16 %v827, %v802
        %v832 = vshrl.u32 %v802, 16
        %v833 = vshrl.u32 %v827, 16
        %v834 = vpack.i.b16 %v833, %v832
        %v837 = vpack.i.b16 %v828, %v803
        %v838 = vshrl.u32 %v803, 16
        %v839 = vshrl.u32 %v828, 16
        %v840 = vpack.i.b16 %v839, %v838
        %v841 = vrot.slane %v671, 4
        %v842 = vrot.slane %v675, 4
        %v843 = vrot.slane %v679, 4
        %v844 = vrot.slane %v683, 4
        %v845 = vrot.slane %v687, 4
        %v846 = vrot.slane %v691, 4
        %v847 = vrot.slane %v695, 4
        %v848 = vrot.slane %v699, 4
        %v857 = vcombine.low %v841, %v845
        %v859 = vunpack.c.l.s4 1983009808
        %v860 = vunpack.c.0.s8 %v859
        %v861 = vlaneseq
        %v862 = vshrl.u32 %v861, 7
        %v863 = vsub.s32 %v860, %v862
        %v864 = vrot.slane %v857, %v863
        %v865 = vcombine.low %v843, %v847
        %v867 = vunpack.c.l.s4 1983009808
        %v868 = vunpack.c.0.s8 %v867
        %v869 = vlaneseq
        %v870 = vshrl.u32 %v869, 7
        %v871 = vsub.s32 %v868, %v870
        %v872 = vrot.slane %v865, %v871
        %v873 = vcombine.low %v864, %v872
        %v875 = vunpack.c.l.s4 1934713408
        %v876 = vunpack.c.0.s8 %v875
        %v877 = vlaneseq
        %v878 = vshrl.u32 %v877, 7
        %v879 = vsub.s32 %v876, %v878
        %v880 = vrot.slane %v873, %v879
        %v881 = vcombine.high %v880, 0
        %v882 = vcombine.low %v842, %v846
        %v884 = vunpack.c.l.s4 1983009808
        %v885 = vunpack.c.0.s8 %v884
        %v886 = vlaneseq
        %v887 = vshrl.u32 %v886, 7
        %v888 = vsub.s32 %v885, %v887
        %v889 = vrot.slane %v882, %v888
        %v890 = vcombine.low %v844, %v848
        %v892 = vunpack.c.l.s4 1983009808
        %v893 = vunpack.c.0.s8 %v892
        %v894 = vlaneseq
        %v895 = vshrl.u32 %v894, 7
        %v896 = vsub.s32 %v893, %v895
        %v897 = vrot.slane %v890, %v896
        %v898 = vcombine.low %v889, %v897
        %v900 = vunpack.c.l.s4 1934713408
        %v901 = vunpack.c.0.s8 %v900
        %v902 = vlaneseq
        %v903 = vshrl.u32 %v902, 7
        %v904 = vsub.s32 %v901, %v903
        %v905 = vrot.slane %v898, %v904
        %v906 = vcombine.high %v905, 0
        %v909 = vpack.i.b16 %v905, %v880
        %v910 = vshrl.u32 %v880, 16
        %v911 = vshrl.u32 %v905, 16
        %v912 = vpack.i.b16 %v911, %v910
        %v915 = vpack.i.b16 %v906, %v881
        %v916 = vshrl.u32 %v881, 16
        %v917 = vshrl.u32 %v906, 16
        %v918 = vpack.i.b16 %v917, %v916
        %vm919 = vcmask 64512
        %v921 = vsel %vm919, %v753, 0
        %v924 = vsel %vm919, %v831, 0
        %926 = vmatprep.subr.bf16.mxu0 0
        %927 = vmatpush1.bf16.xpose.msra.mxu0 0
        %928 = vmatprep.subr.bf16.mxu0 0
        %929 = vmatpush1.bf16.xpose.msra.mxu0 0
        %930 = vmatprep.subr.bf16.mxu0 0
        %931 = vmatpush1.bf16.xpose.msra.mxu0 0
        %932 = vmatprep.subr.bf16.mxu0 0
        %933 = vmatpush1.bf16.xpose.msra.mxu0 0
        %934 = vmatprep.subr.bf16.mxu0 0
        %935 = vmatpush1.bf16.xpose.msra.mxu0 0
        %936 = vmatprep.subr.bf16.mxu0 0
        %937 = vmatpush1.bf16.xpose.msra.mxu0 0
        %938 = vmatprep.subr.bf16.mxu0 0
        %939 = vmatpush1.bf16.xpose.msra.mxu0 0
        %940 = vmatprep.subr.bf16.mxu0 0
        %941 = vmatpush1.bf16.xpose.msra.mxu0 %v924
        %942 = vmatprep.subr.bf16.mxu0 0
        %943 = vmatpush2.bf16.xpose.msra.mxu0 0
        %944 = vmatprep.subr.bf16.mxu0 0
        %945 = vmatpush2.bf16.xpose.msra.mxu0 0
        %946 = vmatprep.subr.bf16.mxu0 0
        %947 = vmatpush2.bf16.xpose.msra.mxu0 0
        %948 = vmatprep.subr.bf16.mxu0 0
        %949 = vmatpush2.bf16.xpose.msra.mxu0 0
        %950 = vmatprep.subr.bf16.mxu0 0
        %951 = vmatpush2.bf16.xpose.msra.mxu0 0
        %952 = vmatprep.subr.bf16.mxu0 0
        %953 = vmatpush2.bf16.xpose.msra.mxu0 0
        %954 = vmatprep.subr.bf16.mxu0 0
        %955 = vmatpush2.bf16.xpose.msra.mxu0 0
        %956 = vmatprep.subr.bf16.mxu0 0
        %957 = vmatpush2.bf16.xpose.msra.mxu0 0
        %958 = vmatprep.mubr.bf16.mxu0 0
        %959 = vmatmul.mubr.bf16.gmra.mxu0 %v921
        %v960 = vpop.f32.mrf.mxu0
        %v961 = vadd.f32 0.0, %v960
        %v962 = vpop.f32.mrf.mxu0
        %v963 = vpop.f32.mrf.mxu0
        %v964 = vpop.f32.mrf.mxu0
        %965 = vdwg.mxu0
        %v967 = vsel %vm919, %v756, 0
        %v970 = vsel %vm919, %v834, 0
        %972 = vmatprep.subr.bf16.mxu0 0
        %973 = vmatpush1.bf16.xpose.msra.mxu0 0
        %974 = vmatprep.subr.bf16.mxu0 0
        %975 = vmatpush1.bf16.xpose.msra.mxu0 0
        %976 = vmatprep.subr.bf16.mxu0 0
        %977 = vmatpush1.bf16.xpose.msra.mxu0 0
        %978 = vmatprep.subr.bf16.mxu0 0
        %979 = vmatpush1.bf16.xpose.msra.mxu0 0
        %980 = vmatprep.subr.bf16.mxu0 0
        %981 = vmatpush1.bf16.xpose.msra.mxu0 0
        %982 = vmatprep.subr.bf16.mxu0 0
        %983 = vmatpush1.bf16.xpose.msra.mxu0 0
        %984 = vmatprep.subr.bf16.mxu0 0
        %985 = vmatpush1.bf16.xpose.msra.mxu0 0
        %986 = vmatprep.subr.bf16.mxu0 0
        %987 = vmatpush1.bf16.xpose.msra.mxu0 %v970
        %988 = vmatprep.subr.bf16.mxu0 0
        %989 = vmatpush2.bf16.xpose.msra.mxu0 0
        %990 = vmatprep.subr.bf16.mxu0 0
        %991 = vmatpush2.bf16.xpose.msra.mxu0 0
        %992 = vmatprep.subr.bf16.mxu0 0
        %993 = vmatpush2.bf16.xpose.msra.mxu0 0
        %994 = vmatprep.subr.bf16.mxu0 0
        %995 = vmatpush2.bf16.xpose.msra.mxu0 0
        %996 = vmatprep.subr.bf16.mxu0 0
        %997 = vmatpush2.bf16.xpose.msra.mxu0 0
        %998 = vmatprep.subr.bf16.mxu0 0
        %999 = vmatpush2.bf16.xpose.msra.mxu0 0
        %1000 = vmatprep.subr.bf16.mxu0 0
        %1001 = vmatpush2.bf16.xpose.msra.mxu0 0
        %1002 = vmatprep.subr.bf16.mxu0 0
        %1003 = vmatpush2.bf16.xpose.msra.mxu0 0
        %1004 = vmatprep.mubr.bf16.mxu0 0
        %1005 = vmatmul.mubr.bf16.gmra.mxu0 %v967
        %v1006 = vpop.f32.mrf.mxu0
        %v1007 = vadd.f32 0.0, %v1006
        %v1008 = vpop.f32.mrf.mxu0
        %v1009 = vpop.f32.mrf.mxu0
        %v1010 = vpop.f32.mrf.mxu0
        %1011 = vdwg.mxu0
        %v1013 = vsel %vm919, %v759, 0
        %v1016 = vsel %vm919, %v837, 0
        %1018 = vmatprep.subr.bf16.mxu0 0
        %1019 = vmatpush1.bf16.xpose.msra.mxu0 0
        %1020 = vmatprep.subr.bf16.mxu0 0
        %1021 = vmatpush1.bf16.xpose.msra.mxu0 0
        %1022 = vmatprep.subr.bf16.mxu0 0
        %1023 = vmatpush1.bf16.xpose.msra.mxu0 0
        %1024 = vmatprep.subr.bf16.mxu0 0
        %1025 = vmatpush1.bf16.xpose.msra.mxu0 0
        %1026 = vmatprep.subr.bf16.mxu0 0
        %1027 = vmatpush1.bf16.xpose.msra.mxu0 0
        %1028 = vmatprep.subr.bf16.mxu0 0
        %1029 = vmatpush1.bf16.xpose.msra.mxu0 0
        %1030 = vmatprep.subr.bf16.mxu0 0
        %1031 = vmatpush1.bf16.xpose.msra.mxu0 0
        %1032 = vmatprep.subr.bf16.mxu0 0
        %1033 = vmatpush1.bf16.xpose.msra.mxu0 %v1016
        %1034 = vmatprep.subr.bf16.mxu0 0
        %1035 = vmatpush2.bf16.xpose.msra.mxu0 0
        %1036 = vmatprep.subr.bf16.mxu0 0
        %1037 = vmatpush2.bf16.xpose.msra.mxu0 0
        %1038 = vmatprep.subr.bf16.mxu0 0
        %1039 = vmatpush2.bf16.xpose.msra.mxu0 0
        %1040 = vmatprep.subr.bf16.mxu0 0
        %1041 = vmatpush2.bf16.xpose.msra.mxu0 0
        %1042 = vmatprep.subr.bf16.mxu0 0
        %1043 = vmatpush2.bf16.xpose.msra.mxu0 0
        %1044 = vmatprep.subr.bf16.mxu0 0
        %1045 = vmatpush2.bf16.xpose.msra.mxu0 0
        %1046 = vmatprep.subr.bf16.mxu0 0
        %1047 = vmatpush2.bf16.xpose.msra.mxu0 0
        %1048 = vmatprep.subr.bf16.mxu0 0
        %1049 = vmatpush2.bf16.xpose.msra.mxu0 0
        %1050 = vmatprep.mubr.bf16.mxu0 0
        %1051 = vmatmul.mubr.bf16.gmra.mxu0 %v1013
        %v1052 = vpop.f32.mrf.mxu0
        %v1053 = vadd.f32 0.0, %v1052
        %v1054 = vpop.f32.mrf.mxu0
        %v1055 = vpop.f32.mrf.mxu0
        %v1056 = vpop.f32.mrf.mxu0
        %1057 = vdwg.mxu0
        %v1059 = vsel %vm919, %v762, 0
        %v1062 = vsel %vm919, %v840, 0
        %1064 = vmatprep.subr.bf16.mxu0 0
        %1065 = vmatpush1.bf16.xpose.msra.mxu0 0
        %1066 = vmatprep.subr.bf16.mxu0 0
        %1067 = vmatpush1.bf16.xpose.msra.mxu0 0
        %1068 = vmatprep.subr.bf16.mxu0 0
        %1069 = vmatpush1.bf16.xpose.msra.mxu0 0
        %1070 = vmatprep.subr.bf16.mxu0 0
        %1071 = vmatpush1.bf16.xpose.msra.mxu0 0
        %1072 = vmatprep.subr.bf16.mxu0 0
        %1073 = vmatpush1.bf16.xpose.msra.mxu0 0
        %1074 = vmatprep.subr.bf16.mxu0 0
        %1075 = vmatpush1.bf16.xpose.msra.mxu0 0
        %1076 = vmatprep.subr.bf16.mxu0 0
        %1077 = vmatpush1.bf16.xpose.msra.mxu0 0
        %1078 = vmatprep.subr.bf16.mxu0 0
        %1079 = vmatpush1.bf16.xpose.msra.mxu0 %v1062
        %1080 = vmatprep.subr.bf16.mxu0 0
        %1081 = vmatpush2.bf16.xpose.msra.mxu0 0
        %1082 = vmatprep.subr.bf16.mxu0 0
        %1083 = vmatpush2.bf16.xpose.msra.mxu0 0
        %1084 = vmatprep.subr.bf16.mxu0 0
        %1085 = vmatpush2.bf16.xpose.msra.mxu0 0
        %1086 = vmatprep.subr.bf16.mxu0 0
        %1087 = vmatpush2.bf16.xpose.msra.mxu0 0
        %1088 = vmatprep.subr.bf16.mxu0 0
        %1089 = vmatpush2.bf16.xpose.msra.mxu0 0
        %1090 = vmatprep.subr.bf16.mxu0 0
        %1091 = vmatpush2.bf16.xpose.msra.mxu0 0
        %1092 = vmatprep.subr.bf16.mxu0 0
        %1093 = vmatpush2.bf16.xpose.msra.mxu0 0
        %1094 = vmatprep.subr.bf16.mxu0 0
        %1095 = vmatpush2.bf16.xpose.msra.mxu0 0
        %1096 = vmatprep.mubr.bf16.mxu0 0
        %1097 = vmatmul.mubr.bf16.gmra.mxu0 %v1059
        %v1098 = vpop.f32.mrf.mxu0
        %v1099 = vadd.f32 0.0, %v1098
        %v1100 = vpop.f32.mrf.mxu0
        %v1101 = vpop.f32.mrf.mxu0
        %v1102 = vpop.f32.mrf.mxu0
        %1103 = vdwg.mxu0
        %v1104 = vsel %vm919, %v961, -inf
        %1105 = vmax.xlane.f32.xlu0 %v1104
        %v1106 = vpop.xlane.xlu0 %1105
        %v1107 = vsel %vm919, %v1007, -inf
        %1108 = vmax.xlane.f32.xlu0 %v1107
        %v1109 = vpop.xlane.xlu0 %1108
        %v1110 = vsel %vm919, %v1053, -inf
        %1111 = vmax.xlane.f32.xlu0 %v1110
        %v1112 = vpop.xlane.xlu0 %1111
        %v1113 = vsel %vm919, %v1099, -inf
        %1114 = vmax.xlane.f32.xlu0 %v1113
        %v1115 = vpop.xlane.xlu0 %1114
        %v1116 = vsub.f32 %v961, %v1106
        %v1117 = vsub.f32 %v1007, %v1109
        %v1118 = vsub.f32 %v1053, %v1112
        %v1119 = vsub.f32 %v1099, %v1115
        %v1120 = vmul.f32 %v1116, 1.442695
        %v1121 = vpow.pop %v1120
        %v1122 = vmul.f32 %v1117, 1.442695
        %v1123 = vpow.pop %v1122
        %v1124 = vmul.f32 %v1118, 1.442695
        %v1125 = vpow.pop %v1124
        %v1126 = vmul.f32 %v1119, 1.442695
        %v1127 = vpow.pop %v1126
        %v1128 = vsel %vm919, %v1121, 0.0
        %1129 = vadd.xlane.f32.xlu0 %v1128
        %v1130 = vpop.xlane.xlu0 %1129
        %v1131 = vsel %vm919, %v1123, 0.0
        %1132 = vadd.xlane.f32.xlu0 %v1131
        %v1133 = vpop.xlane.xlu0 %1132
        %v1134 = vsel %vm919, %v1125, 0.0
        %1135 = vadd.xlane.f32.xlu0 %v1134
        %v1136 = vpop.xlane.xlu0 %1135
        %v1137 = vsel %vm919, %v1127, 0.0
        %1138 = vadd.xlane.f32.xlu0 %v1137
        %v1139 = vpop.xlane.xlu0 %1138
        %v1140 = vpack.c.bf16 %v1121, %v1121
        %v1141 = vpack.c.bf16 %v1123, %v1123
        %v1142 = vpack.c.bf16 %v1125, %v1125
        %v1143 = vpack.c.bf16 %v1127, %v1127
        %v1145 = vsel %vm919, %v1140, 0
        %vm1147 = vcmask 1043456
        %v1149 = vsel %vm1147, %v909, 0
        %1151 = vmatprep.subr.bf16.mxu0 0
        %1152 = vmatpush1.bf16.msra.mxu0 0
        %1153 = vmatprep.subr.bf16.mxu0 0
        %1154 = vmatpush1.bf16.msra.mxu0 0
        %1155 = vmatprep.subr.bf16.mxu0 0
        %1156 = vmatpush1.bf16.msra.mxu0 0
        %1157 = vmatprep.subr.bf16.mxu0 0
        %1158 = vmatpush1.bf16.msra.mxu0 0
        %1159 = vmatprep.subr.bf16.mxu0 0
        %1160 = vmatpush1.bf16.msra.mxu0 0
        %1161 = vmatprep.subr.bf16.mxu0 0
        %1162 = vmatpush1.bf16.msra.mxu0 0
        %1163 = vmatprep.subr.bf16.mxu0 0
        %1164 = vmatpush1.bf16.msra.mxu0 0
        %1165 = vmatprep.subr.bf16.mxu0 0
        %1166 = vmatpush1.bf16.msra.mxu0 %v1149
        %1167 = vmatprep.subr.bf16.mxu0 0
        %1168 = vmatpush2.bf16.msra.mxu0 0
        %1169 = vmatprep.subr.bf16.mxu0 0
        %1170 = vmatpush2.bf16.msra.mxu0 0
        %1171 = vmatprep.subr.bf16.mxu0 0
        %1172 = vmatpush2.bf16.msra.mxu0 0
        %1173 = vmatprep.subr.bf16.mxu0 0
        %1174 = vmatpush2.bf16.msra.mxu0 0
        %1175 = vmatprep.subr.bf16.mxu0 0
        %1176 = vmatpush2.bf16.msra.mxu0 0
        %1177 = vmatprep.subr.bf16.mxu0 0
        %1178 = vmatpush2.bf16.msra.mxu0 0
        %1179 = vmatprep.subr.bf16.mxu0 0
        %1180 = vmatpush2.bf16.msra.mxu0 0
        %1181 = vmatprep.subr.bf16.mxu0 0
        %1182 = vmatpush2.bf16.msra.mxu0 0
        %1183 = vmatprep.mubr.bf16.mxu0 0
        %1184 = vmatmul.mubr.bf16.gmra.mxu0 %v1145
        %v1185 = vpop.f32.mrf.mxu0
        %v1186 = vadd.f32 0.0, %v1185
        %v1187 = vpop.f32.mrf.mxu0
        %v1188 = vpop.f32.mrf.mxu0
        %v1189 = vpop.f32.mrf.mxu0
        %1190 = vdwg.mxu0
        %v1192 = vsel %vm919, %v1141, 0
        %v1195 = vsel %vm1147, %v912, 0
        %1197 = vmatprep.subr.bf16.mxu0 0
        %1198 = vmatpush1.bf16.msra.mxu0 0
        %1199 = vmatprep.subr.bf16.mxu0 0
        %1200 = vmatpush1.bf16.msra.mxu0 0
        %1201 = vmatprep.subr.bf16.mxu0 0
        %1202 = vmatpush1.bf16.msra.mxu0 0
        %1203 = vmatprep.subr.bf16.mxu0 0
        %1204 = vmatpush1.bf16.msra.mxu0 0
        %1205 = vmatprep.subr.bf16.mxu0 0
        %1206 = vmatpush1.bf16.msra.mxu0 0
        %1207 = vmatprep.subr.bf16.mxu0 0
        %1208 = vmatpush1.bf16.msra.mxu0 0
        %1209 = vmatprep.subr.bf16.mxu0 0
        %1210 = vmatpush1.bf16.msra.mxu0 0
        %1211 = vmatprep.subr.bf16.mxu0 0
        %1212 = vmatpush1.bf16.msra.mxu0 %v1195
        %1213 = vmatprep.subr.bf16.mxu0 0
        %1214 = vmatpush2.bf16.msra.mxu0 0
        %1215 = vmatprep.subr.bf16.mxu0 0
        %1216 = vmatpush2.bf16.msra.mxu0 0
        %1217 = vmatprep.subr.bf16.mxu0 0
        %1218 = vmatpush2.bf16.msra.mxu0 0
        %1219 = vmatprep.subr.bf16.mxu0 0
        %1220 = vmatpush2.bf16.msra.mxu0 0
        %1221 = vmatprep.subr.bf16.mxu0 0
        %1222 = vmatpush2.bf16.msra.mxu0 0
        %1223 = vmatprep.subr.bf16.mxu0 0
        %1224 = vmatpush2.bf16.msra.mxu0 0
        %1225 = vmatprep.subr.bf16.mxu0 0
        %1226 = vmatpush2.bf16.msra.mxu0 0
        %1227 = vmatprep.subr.bf16.mxu0 0
        %1228 = vmatpush2.bf16.msra.mxu0 0
        %1229 = vmatprep.mubr.bf16.mxu0 0
        %1230 = vmatmul.mubr.bf16.gmra.mxu0 %v1192
        %v1231 = vpop.f32.mrf.mxu0
        %v1232 = vadd.f32 0.0, %v1231
        %v1233 = vpop.f32.mrf.mxu0
        %v1234 = vpop.f32.mrf.mxu0
        %v1235 = vpop.f32.mrf.mxu0
        %1236 = vdwg.mxu0
        %v1238 = vsel %vm919, %v1142, 0
        %v1241 = vsel %vm1147, %v915, 0
        %1243 = vmatprep.subr.bf16.mxu0 0
        %1244 = vmatpush1.bf16.msra.mxu0 0
        %1245 = vmatprep.subr.bf16.mxu0 0
        %1246 = vmatpush1.bf16.msra.mxu0 0
        %1247 = vmatprep.subr.bf16.mxu0 0
        %1248 = vmatpush1.bf16.msra.mxu0 0
        %1249 = vmatprep.subr.bf16.mxu0 0
        %1250 = vmatpush1.bf16.msra.mxu0 0
        %1251 = vmatprep.subr.bf16.mxu0 0
        %1252 = vmatpush1.bf16.msra.mxu0 0
        %1253 = vmatprep.subr.bf16.mxu0 0
        %1254 = vmatpush1.bf16.msra.mxu0 0
        %1255 = vmatprep.subr.bf16.mxu0 0
        %1256 = vmatpush1.bf16.msra.mxu0 0
        %1257 = vmatprep.subr.bf16.mxu0 0
        %1258 = vmatpush1.bf16.msra.mxu0 %v1241
        %1259 = vmatprep.subr.bf16.mxu0 0
        %1260 = vmatpush2.bf16.msra.mxu0 0
        %1261 = vmatprep.subr.bf16.mxu0 0
        %1262 = vmatpush2.bf16.msra.mxu0 0
        %1263 = vmatprep.subr.bf16.mxu0 0
        %1264 = vmatpush2.bf16.msra.mxu0 0
        %1265 = vmatprep.subr.bf16.mxu0 0
        %1266 = vmatpush2.bf16.msra.mxu0 0
        %1267 = vmatprep.subr.bf16.mxu0 0
        %1268 = vmatpush2.bf16.msra.mxu0 0
        %1269 = vmatprep.subr.bf16.mxu0 0
        %1270 = vmatpush2.bf16.msra.mxu0 0
        %1271 = vmatprep.subr.bf16.mxu0 0
        %1272 = vmatpush2.bf16.msra.mxu0 0
        %1273 = vmatprep.subr.bf16.mxu0 0
        %1274 = vmatpush2.bf16.msra.mxu0 0
        %1275 = vmatprep.mubr.bf16.mxu0 0
        %1276 = vmatmul.mubr.bf16.gmra.mxu0 %v1238
        %v1277 = vpop.f32.mrf.mxu0
        %v1278 = vadd.f32 0.0, %v1277
        %v1279 = vpop.f32.mrf.mxu0
        %v1280 = vpop.f32.mrf.mxu0
        %v1281 = vpop.f32.mrf.mxu0
        %1282 = vdwg.mxu0
        %v1284 = vsel %vm919, %v1143, 0
        %v1287 = vsel %vm1147, %v918, 0
        %1289 = vmatprep.subr.bf16.mxu0 0
        %1290 = vmatpush1.bf16.msra.mxu0 0
        %1291 = vmatprep.subr.bf16.mxu0 0
        %1292 = vmatpush1.bf16.msra.mxu0 0
        %1293 = vmatprep.subr.bf16.mxu0 0
        %1294 = vmatpush1.bf16.msra.mxu0 0
        %1295 = vmatprep.subr.bf16.mxu0 0
        %1296 = vmatpush1.bf16.msra.mxu0 0
        %1297 = vmatprep.subr.bf16.mxu0 0
        %1298 = vmatpush1.bf16.msra.mxu0 0
        %1299 = vmatprep.subr.bf16.mxu0 0
        %1300 = vmatpush1.bf16.msra.mxu0 0
        %1301 = vmatprep.subr.bf16.mxu0 0
        %1302 = vmatpush1.bf16.msra.mxu0 0
        %1303 = vmatprep.subr.bf16.mxu0 0
        %1304 = vmatpush1.bf16.msra.mxu0 %v1287
        %1305 = vmatprep.subr.bf16.mxu0 0
        %1306 = vmatpush2.bf16.msra.mxu0 0
        %1307 = vmatprep.subr.bf16.mxu0 0
        %1308 = vmatpush2.bf16.msra.mxu0 0
        %1309 = vmatprep.subr.bf16.mxu0 0
        %1310 = vmatpush2.bf16.msra.mxu0 0
        %1311 = vmatprep.subr.bf16.mxu0 0
        %1312 = vmatpush2.bf16.msra.mxu0 0
        %1313 = vmatprep.subr.bf16.mxu0 0
        %1314 = vmatpush2.bf16.msra.mxu0 0
        %1315 = vmatprep.subr.bf16.mxu0 0
        %1316 = vmatpush2.bf16.msra.mxu0 0
        %1317 = vmatprep.subr.bf16.mxu0 0
        %1318 = vmatpush2.bf16.msra.mxu0 0
        %1319 = vmatprep.subr.bf16.mxu0 0
        %1320 = vmatpush2.bf16.msra.mxu0 0
        %1321 = vmatprep.mubr.bf16.mxu0 0
        %1322 = vmatmul.mubr.bf16.gmra.mxu0 %v1284
        %v1323 = vpop.f32.mrf.mxu0
        %v1324 = vadd.f32 0.0, %v1323
        %v1325 = vpop.f32.mrf.mxu0
        %v1326 = vpop.f32.mrf.mxu0
        %v1327 = vpop.f32.mrf.mxu0
        %1328 = vdwg.mxu0
        %v1329 = vrcp.pop %v1130
        %v1330 = vrcp.pop %v1133
        %v1331 = vrcp.pop %v1136
        %v1332 = vrcp.pop %v1139
        %v1333 = vmul.f32 %v1186, %v1329
        %v1334 = vmul.f32 %v1232, %v1330
        %v1335 = vmul.f32 %v1278, %v1331
        %v1336 = vmul.f32 %v1324, %v1332
        %v1337 = vcombine.low %v1333, %v1335
        %v1338 = vcombine.high %v1333, %v1335
        %v1340 = vunpack.c.l.s4 1983009808
        %v1341 = vunpack.c.0.s8 %v1340
        %v1342 = vlaneseq
        %v1343 = vshrl.u32 %v1342, 7
        %v1344 = vsub.s32 %v1341, %v1343
        %v1345 = vrot.slane %v1337, %v1344
        %v1347 = vunpack.c.l.s4 1983009808
        %v1348 = vunpack.c.0.s8 %v1347
        %v1349 = vlaneseq
        %v1350 = vshrl.u32 %v1349, 7
        %v1351 = vsub.s32 %v1348, %v1350
        %v1352 = vrot.slane %v1338, %v1351
        %v1353 = vcombine.low %v1334, %v1336
        %v1354 = vcombine.high %v1334, %v1336
        %v1356 = vunpack.c.l.s4 1983009808
        %v1357 = vunpack.c.0.s8 %v1356
        %v1358 = vlaneseq
        %v1359 = vshrl.u32 %v1358, 7
        %v1360 = vsub.s32 %v1357, %v1359
        %v1361 = vrot.slane %v1353, %v1360
        %v1363 = vunpack.c.l.s4 1983009808
        %v1364 = vunpack.c.0.s8 %v1363
        %v1365 = vlaneseq
        %v1366 = vshrl.u32 %v1365, 7
        %v1367 = vsub.s32 %v1364, %v1366
        %v1368 = vrot.slane %v1354, %v1367
        %v1369 = vcombine.low %v1345, %v1361
        %v1370 = vcombine.high %v1345, %v1361
        %v1372 = vunpack.c.l.s4 1934713408
        %v1373 = vunpack.c.0.s8 %v1372
        %v1374 = vlaneseq
        %v1375 = vshrl.u32 %v1374, 7
        %v1376 = vsub.s32 %v1373, %v1375
        %v1377 = vrot.slane %v1369, %v1376
        %v1379 = vunpack.c.l.s4 1934713408
        %v1380 = vunpack.c.0.s8 %v1379
        %v1381 = vlaneseq
        %v1382 = vshrl.u32 %v1381, 7
        %v1383 = vsub.s32 %v1380, %v1382
        %v1384 = vrot.slane %v1370, %v1383
        %v1385 = vcombine.low %v1352, %v1368
        %v1386 = vcombine.high %v1352, %v1368
        %v1388 = vunpack.c.l.s4 1934713408
        %v1389 = vunpack.c.0.s8 %v1388
        %v1390 = vlaneseq
        %v1391 = vshrl.u32 %v1390, 7
        %v1392 = vsub.s32 %v1389, %v1391
        %v1393 = vrot.slane %v1385, %v1392
        %v1395 = vunpack.c.l.s4 1934713408
        %v1396 = vunpack.c.0.s8 %v1395
        %v1397 = vlaneseq
        %v1398 = vshrl.u32 %v1397, 7
        %v1399 = vsub.s32 %v1396, %v1398
        %v1400 = vrot.slane %v1386, %v1399
        %v1401 = vcombine.high %v1377, 0.0
        %v1402 = vcombine.high %v1384, 0.0
        %v1403 = vcombine.high %v1393, 0.0
        %v1404 = vcombine.high %v1400, 0.0
        %v1405 = vcombine.low %v1377, %v1384
        %v1407 = vunpack.c.l.s4 1983009808
        %v1408 = vunpack.c.0.s8 %v1407
        %v1409 = vlaneseq
        %v1410 = vshrl.u32 %v1409, 7
        %v1411 = vsub.s32 %v1408, %v1410
        %v1412 = vrot.slane %v1405, %v1411
        %v1413 = vcombine.low %v1401, %v1402
        %v1415 = vunpack.c.l.s4 1983009808
        %v1416 = vunpack.c.0.s8 %v1415
        %v1417 = vlaneseq
        %v1418 = vshrl.u32 %v1417, 7
        %v1419 = vsub.s32 %v1416, %v1418
        %v1420 = vrot.slane %v1413, %v1419
        %v1421 = vcombine.low %v1393, %v1400
        %v1423 = vunpack.c.l.s4 1983009808
        %v1424 = vunpack.c.0.s8 %v1423
        %v1425 = vlaneseq
        %v1426 = vshrl.u32 %v1425, 7
        %v1427 = vsub.s32 %v1424, %v1426
        %v1428 = vrot.slane %v1421, %v1427
        %v1429 = vcombine.low %v1403, %v1404
        %v1431 = vunpack.c.l.s4 1983009808
        %v1432 = vunpack.c.0.s8 %v1431
        %v1433 = vlaneseq
        %v1434 = vshrl.u32 %v1433, 7
        %v1435 = vsub.s32 %v1432, %v1434
        %v1436 = vrot.slane %v1429, %v1435
        %v1437 = vcombine.low %v1412, %v1420
        %v1438 = vcombine.high %v1412, %v1420
        %v1440 = vunpack.c.l.s4 1934713408
        %v1441 = vunpack.c.0.s8 %v1440
        %v1442 = vlaneseq
        %v1443 = vshrl.u32 %v1442, 7
        %v1444 = vsub.s32 %v1441, %v1443
        %v1445 = vrot.slane %v1437, %v1444
        %v1447 = vunpack.c.l.s4 1934713408
        %v1448 = vunpack.c.0.s8 %v1447
        %v1449 = vlaneseq
        %v1450 = vshrl.u32 %v1449, 7
        %v1451 = vsub.s32 %v1448, %v1450
        %v1452 = vrot.slane %v1438, %v1451
        %v1453 = vcombine.low %v1428, %v1436
        %v1454 = vcombine.high %v1428, %v1436
        %v1456 = vunpack.c.l.s4 1934713408
        %v1457 = vunpack.c.0.s8 %v1456
        %v1458 = vlaneseq
        %v1459 = vshrl.u32 %v1458, 7
        %v1460 = vsub.s32 %v1457, %v1459
        %v1461 = vrot.slane %v1453, %v1460
        %v1463 = vunpack.c.l.s4 1934713408
        %v1464 = vunpack.c.0.s8 %v1463
        %v1465 = vlaneseq
        %v1466 = vshrl.u32 %v1465, 7
        %v1467 = vsub.s32 %v1464, %v1466
        %v1468 = vrot.slane %v1454, %v1467
        %v1469 = vcombine.low %v1445, %v1461
        %v1470 = vcombine.high %v1445, %v1461
        %v1471 = vcombine.low %v1452, %v1468
        %v1472 = vcombine.high %v1452, %v1468
        %1474 = vrot.lane.b32.xlu0 %v1470, 8
        %v1475 = vpop.permute.xlu0 %1474
        %1478 = vrot.lane.b32.xlu0 %v1471, 16
        %v1479 = vpop.permute.xlu0 %1478
        %1482 = vrot.lane.b32.xlu0 %v1472, 24
        %v1483 = vpop.permute.xlu0 %1482
        %v1485 = vsel %vm919, %v1469, %v1475
        %vm1486 = vcmask 130048
        %v1487 = vsel %vm1486, %v1485, %v1479
        %vm1488 = vcmask 195584
        %v1489 = vsel %vm1488, %v1487, %v1483
        %v1490 = vpack.c.bf16 %v1489, %v1489
        %v1491 = vld [vmem:[%s4] sm:$0xf]
        %v1492 = vld [vmem:[%s4 + $0x4] sm:$0xf]
        %v1493 = vld [vmem:[%s4 + $0x8] sm:$0xf]
        %v1494 = vld [vmem:[%s4 + $0xc] sm:$0xf]
        %v1495 = vld [vmem:[%s5] sm:$0x1]
        %v1497 = vlaneseq
        %v1498 = vshrl.u32 %v1497, 7
        %v1499 = vsub.s32 0, %v1498
        %v1500 = vrot.slane %v1495, %v1499
        %v1506 = vunpack.c.l.b16 %v1491
        %v1507 = vunpack.c.l.b16 %v1492
        %v1508 = vunpack.c.l.b16 %v1493
        %v1509 = vunpack.c.l.b16 %v1494
        %v1510 = vpack.c.b16 %v1507, %v1506
        %v1511 = vpack.c.b16 %v1509, %v1508
        %v1515 = vsel %vm413, %v1490, 0
        %1517 = vmatprep.subr.bf16.mxu0 0
        %1518 = vmatpush1.bf16.msra.mxu0 0
        %1519 = vmatprep.subr.bf16.mxu0 0
        %1520 = vmatpush1.bf16.msra.mxu0 0
        %1521 = vmatprep.subr.bf16.mxu0 0
        %1522 = vmatpush1.bf16.msra.mxu0 0
        %1523 = vmatprep.subr.bf16.mxu0 0
        %1524 = vmatpush1.bf16.msra.mxu0 0
        %1525 = vmatprep.subr.bf16.mxu0 0
        %1526 = vmatpush1.bf16.msra.mxu0 0
        %1527 = vmatprep.subr.bf16.mxu0 0
        %1528 = vmatpush1.bf16.msra.mxu0 0
        %1529 = vmatprep.subr.bf16.mxu0 0
        %1530 = vmatpush1.bf16.msra.mxu0 %v1511
        %1531 = vmatprep.subr.bf16.mxu0 0
        %1532 = vmatpush1.bf16.msra.mxu0 %v1510
        %1533 = vmatprep.subr.bf16.mxu0 0
        %1534 = vmatpush2.bf16.msra.mxu0 0
        %1535 = vmatprep.subr.bf16.mxu0 0
        %1536 = vmatpush2.bf16.msra.mxu0 0
        %1537 = vmatprep.subr.bf16.mxu0 0
        %1538 = vmatpush2.bf16.msra.mxu0 0
        %1539 = vmatprep.subr.bf16.mxu0 0
        %1540 = vmatpush2.bf16.msra.mxu0 0
        %1541 = vmatprep.subr.bf16.mxu0 0
        %1542 = vmatpush2.bf16.msra.mxu0 0
        %1543 = vmatprep.subr.bf16.mxu0 0
        %1544 = vmatpush2.bf16.msra.mxu0 0
        %1545 = vmatprep.subr.bf16.mxu0 0
        %1546 = vmatpush2.bf16.msra.mxu0 0
        %1547 = vmatprep.subr.bf16.mxu0 0
        %1548 = vmatpush2.bf16.msra.mxu0 0
        %1549 = vmatprep.mubr.bf16.mxu0 0
        %1550 = vmatmul.mubr.bf16.gmra.mxu0 %v1515
        %v1551 = vpop.f32.mrf.mxu0
        %v1552 = vadd.f32 %v1500, %v1551
        %v1553 = vpop.f32.mrf.mxu0
        %v1554 = vpop.f32.mrf.mxu0
        %v1555 = vpop.f32.mrf.mxu0
        %1556 = vdwg.mxu0
        %v1557 = vadd.f32 %v410, %v1552
        %v1558 = vld [vmem:[%s6] sm:$0x1]
        %v1559 = vld [vmem:[%s7] sm:$0x1]
        %v1560 = vsel %vm413, %v1557, 0.0
        %1561 = vadd.xlane.f32.xlu0 %v1560
        %v1562 = vpop.xlane.xlu0 %1561
        %v1563 = vmul.f32 %v1562, %v417
        %v1564 = vsub.f32 %v1557, %v1563
        %v1565 = vmul.f32 %v1564, %v1564
        %v1566 = vsel %vm413, %v1565, 0.0
        %1567 = vadd.xlane.f32.xlu0 %v1566
        %v1568 = vpop.xlane.xlu0 %1567
        %v1569 = vmul.f32 %v1568, %v417
        %v1570 = vadd.f32 %v1569, 1e-05
        %v1571 = vrsqrt.pop %v1570
        %v1572 = vmul.f32 %v1564, %v1571
        %v1574 = vlaneseq
        %v1575 = vshrl.u32 %v1574, 7
        %v1576 = vsub.s32 0, %v1575
        %v1577 = vrot.slane %v1558, %v1576
        %v1579 = vmul.f32 %v1572, %v1577
        %v1581 = vlaneseq
        %v1582 = vshrl.u32 %v1581, 7
        %v1583 = vsub.s32 0, %v1582
        %v1584 = vrot.slane %v1559, %v1583
        %v1586 = vadd.f32 %v1579, %v1584
        %v1587 = vpack.c.bf16 %v1586, %v1586
        %v1588 = vld [vmem:[%s8] sm:$0xf]
        %v1589 = vld [vmem:[%s8 + $0x4] sm:$0xf]
        %v1590 = vld [vmem:[%s8 + $0x8] sm:$0xf]
        %v1591 = vld [vmem:[%s8 + $0xc] sm:$0xf]
        %v1592 = vld [vmem:[%s9] sm:$0x1]
        %v1594 = vlaneseq
        %v1595 = vshrl.u32 %v1594, 7
        %v1596 = vsub.s32 0, %v1595
        %v1597 = vrot.slane %v1592, %v1596
        %v1603 = vunpack.c.l.b16 %v1588
        %v1604 = vunpack.c.l.b16 %v1589
        %v1605 = vunpack.c.l.b16 %v1590
        %v1606 = vunpack.c.l.b16 %v1591
        %v1607 = vpack.c.b16 %v1604, %v1603
        %v1608 = vpack.c.b16 %v1606, %v1605
        %v1612 = vsel %vm413, %v1587, 0
        %1614 = vmatprep.subr.bf16.mxu0 0
        %1615 = vmatpush1.bf16.msra.mxu0 0
        %1616 = vmatprep.subr.bf16.mxu0 0
        %1617 = vmatpush1.bf16.msra.mxu0 0
        %1618 = vmatprep.subr.bf16.mxu0 0
        %1619 = vmatpush1.bf16.msra.mxu0 0
        %1620 = vmatprep.subr.bf16.mxu0 0
        %1621 = vmatpush1.bf16.msra.mxu0 0
        %1622 = vmatprep.subr.bf16.mxu0 0
        %1623 = vmatpush1.bf16.msra.mxu0 0
        %1624 = vmatprep.subr.bf16.mxu0 0
        %1625 = vmatpush1.bf16.msra.mxu0 0
        %1626 = vmatprep.subr.bf16.mxu0 0
        %1627 = vmatpush1.bf16.msra.mxu0 %v1608
        %1628 = vmatprep.subr.bf16.mxu0 0
        %1629 = vmatpush1.bf16.msra.mxu0 %v1607
        %1630 = vmatprep.subr.bf16.mxu0 0
        %1631 = vmatpush2.bf16.msra.mxu0 0
        %1632 = vmatprep.subr.bf16.mxu0 0
        %1633 = vmatpush2.bf16.msra.mxu0 0
        %1634 = vmatprep.subr.bf16.mxu0 0
        %1635 = vmatpush2.bf16.msra.mxu0 0
        %1636 = vmatprep.subr.bf16.mxu0 0
        %1637 = vmatpush2.bf16.msra.mxu0 0
        %1638 = vmatprep.subr.bf16.mxu0 0
        %1639 = vmatpush2.bf16.msra.mxu0 0
        %1640 = vmatprep.subr.bf16.mxu0 0
        %1641 = vmatpush2.bf16.msra.mxu0 0
        %1642 = vmatprep.subr.bf16.mxu0 0
        %1643 = vmatpush2.bf16.msra.mxu0 0
        %1644 = vmatprep.subr.bf16.mxu0 0
        %1645 = vmatpush2.bf16.msra.mxu0 0
        %1646 = vmatprep.mubr.bf16.mxu0 0
        %1647 = vmatmul.mubr.bf16.gmra.mxu0 %v1612
        %v1648 = vpop.f32.mrf.mxu0
        %v1649 = vadd.f32 %v1597, %v1648
        %v1650 = vpop.f32.mrf.mxu0
        %v1651 = vpop.f32.mrf.mxu0
        %v1652 = vpop.f32.mrf.mxu0
        %1653 = vdwg.mxu0
        %v1654 = vmul.f32 %v1649, 0.5
        %v1655 = vmul.f32 %v1649, %v1649
        %v1656 = vmul.f32 %v1655, %v1649
        %v1657 = vmul.f32 %v1656, 0.044715
        %v1658 = vadd.f32 %v1649, %v1657
        %v1659 = vmul.f32 %v1658, 0.7978846
        %v1660 = vtanh.pop %v1659
        %v1661 = vadd.f32 %v1660, 1.0
        %v1662 = vmul.f32 %v1654, %v1661
        %v1663 = vpack.c.bf16 %v1662, %v1662
        %v1664 = vld [vmem:[%s10] sm:$0xf]
        %v1665 = vld [vmem:[%s10 + $0x4] sm:$0xf]
        %v1666 = vld [vmem:[%s10 + $0x8] sm:$0xf]
        %v1667 = vld [vmem:[%s10 + $0xc] sm:$0xf]
        %v1668 = vld [vmem:[%s10 + $0x10] sm:$0xf]
        %v1669 = vld [vmem:[%s10 + $0x14] sm:$0xf]
        %v1670 = vld [vmem:[%s10 + $0x18] sm:$0xf]
        %v1671 = vld [vmem:[%s10 + $0x1c] sm:$0xf]
        %v1672 = vld [vmem:[%s10 + $0x20] sm:$0xf]
        %v1673 = vld [vmem:[%s10 + $0x24] sm:$0xf]
        %v1674 = vld [vmem:[%s10 + $0x28] sm:$0xf]
        %v1675 = vld [vmem:[%s10 + $0x2c] sm:$0xf]
        %v1676 = vld [vmem:[%s10 + $0x30] sm:$0xf]
        %v1677 = vld [vmem:[%s10 + $0x34] sm:$0xf]
        %v1678 = vld [vmem:[%s10 + $0x38] sm:$0xf]
        %v1679 = vld [vmem:[%s10 + $0x3c] sm:$0xf]
        %v1680 = vld [vmem:[%s11] sm:$0x1]
        %v1682 = vlaneseq
        %v1683 = vshrl.u32 %v1682, 7
        %v1684 = vsub.s32 0, %v1683
        %v1685 = vrot.slane %v1680, %v1684
        %v1703 = vunpack.c.l.b16 %v1664
        %v1704 = vunpack.c.l.b16 %v1665
        %v1705 = vunpack.c.l.b16 %v1666
        %v1706 = vunpack.c.l.b16 %v1667
        %v1707 = vunpack.c.l.b16 %v1668
        %v1708 = vunpack.c.l.b16 %v1669
        %v1709 = vunpack.c.l.b16 %v1670
        %v1710 = vunpack.c.l.b16 %v1671
        %v1711 = vunpack.c.l.b16 %v1672
        %v1712 = vunpack.c.l.b16 %v1673
        %v1713 = vunpack.c.l.b16 %v1674
        %v1714 = vunpack.c.l.b16 %v1675
        %v1715 = vunpack.c.l.b16 %v1676
        %v1716 = vunpack.c.l.b16 %v1677
        %v1717 = vunpack.c.l.b16 %v1678
        %v1718 = vunpack.c.l.b16 %v1679
        %v1719 = vpack.c.b16 %v1704, %v1703
        %v1720 = vpack.c.b16 %v1706, %v1705
        %v1721 = vpack.c.b16 %v1708, %v1707
        %v1722 = vpack.c.b16 %v1710, %v1709
        %v1723 = vpack.c.b16 %v1712, %v1711
        %v1724 = vpack.c.b16 %v1714, %v1713
        %v1725 = vpack.c.b16 %v1716, %v1715
        %v1726 = vpack.c.b16 %v1718, %v1717
        %1735 = vmatprep.subr.bf16.mxu0 0
        %1736 = vmatpush1.bf16.msra.mxu0 %v1726
        %1737 = vmatprep.subr.bf16.mxu0 0
        %1738 = vmatpush1.bf16.msra.mxu0 %v1725
        %1739 = vmatprep.subr.bf16.mxu0 0
        %1740 = vmatpush1.bf16.msra.mxu0 %v1724
        %1741 = vmatprep.subr.bf16.mxu0 0
        %1742 = vmatpush1.bf16.msra.mxu0 %v1723
        %1743 = vmatprep.subr.bf16.mxu0 0
        %1744 = vmatpush1.bf16.msra.mxu0 %v1722
        %1745 = vmatprep.subr.bf16.mxu0 0
        %1746 = vmatpush1.bf16.msra.mxu0 %v1721
        %1747 = vmatprep.subr.bf16.mxu0 0
        %1748 = vmatpush1.bf16.msra.mxu0 %v1720
        %1749 = vmatprep.subr.bf16.mxu0 0
        %1750 = vmatpush1.bf16.msra.mxu0 %v1719
        %1751 = vmatprep.subr.bf16.mxu0 0
        %1752 = vmatpush2.bf16.msra.mxu0 0
        %1753 = vmatprep.subr.bf16.mxu0 0
        %1754 = vmatpush2.bf16.msra.mxu0 0
        %1755 = vmatprep.subr.bf16.mxu0 0
        %1756 = vmatpush2.bf16.msra.mxu0 0
        %1757 = vmatprep.subr.bf16.mxu0 0
        %1758 = vmatpush2.bf16.msra.mxu0 0
        %1759 = vmatprep.subr.bf16.mxu0 0
        %1760 = vmatpush2.bf16.msra.mxu0 0
        %1761 = vmatprep.subr.bf16.mxu0 0
        %1762 = vmatpush2.bf16.msra.mxu0 0
        %1763 = vmatprep.subr.bf16.mxu0 0
        %1764 = vmatpush2.bf16.msra.mxu0 0
        %1765 = vmatprep.subr.bf16.mxu0 0
        %1766 = vmatpush2.bf16.msra.mxu0 0
        %1767 = vmatprep.mubr.bf16.mxu0 0
        %1768 = vmatmul.mubr.bf16.gmra.mxu0 %v1663
        %v1769 = vpop.f32.mrf.mxu0
        %v1770 = vadd.f32 %v1685, %v1769
        %v1771 = vpop.f32.mrf.mxu0
        %v1772 = vpop.f32.mrf.mxu0
        %v1773 = vpop.f32.mrf.mxu0
        %1774 = vdwg.mxu0
        %v1775 = vadd.f32 %v1557, %v1770
        %1776 = vst.msk [vmem:[%s404] sm:$0xff] %vm413, %v1775
        %s1777 = sand.u32 %s291, 1
        %s1778 = scalar_lea.sflag [#allocation3], %s1777
        %s1779 = sand.u32 %s291, 1
        %s1780 = smul.addr %s1779, 8
        %s1781 = scalar_lea.vmem [#allocation2], %s1780
        // Predicated region
        $region69: #{tpu_custom_call.1} parent=67 // pred_check
          %p1782 = pneg %p301
        $region70: #{tpu_custom_call.1} parent=67 // pred_check_branch
          %1784 = sbr.rel (%p1782) target = $region72
        $region71: #{tpu_custom_call.1} parent=67 // pred_region
          %s1786 = ssub.s32 128, 128
          %1787 = vsyncadd %s1778, %s1786
          %s1788 = smul.addr %s26, 128
          %s1789 = scalar_lea.hbm %s12, %s1788
          %s1791 = sshll.u32 %s1781, 4
          %s1792 = int_to_ptr.vmem [resolvable:$true] %s1791
          %1794 = dma.vmem_to_hbm [thread:$0]  %s1792, 128, %s1789, %s1778
        $region72: #{tpu_custom_call.1} parent=67 // pred_fallthru
          _
      $region68: #{tpu_custom_call.1} parent=5 // pred_fallthru
        _
      %p1795 = scmp.le.s32.totalorder 2, %s21
      // Predicated region
      $region73: #{tpu_custom_call.1} parent=5 // pred_check
        %p1796 = pneg %p1795
      $region74: #{tpu_custom_call.1} parent=5 // pred_check_branch
        %1798 = sbr.rel (%p1796) target = $region76
      $region75: #{tpu_custom_call.1} parent=5 // pred_region
        %s1799 = ssub.s32 %s21, 2
        // Predicated region
        $region77: #{tpu_custom_call.1} parent=75 // pred_check
          %p1800 = pneg %p307
        $region78: #{tpu_custom_call.1} parent=75 // pred_check_branch
          %1802 = sbr.rel (%p1800) target = $region80
        $region79: #{tpu_custom_call.1} parent=75 // pred_region
          %s1803 = sand.u32 %s292, 1
          %s1804 = scalar_lea.sflag [#allocation3], %s1803
          %s1805 = sand.u32 %s292, 1
          %s1806 = smul.addr %s1805, 8
          %s1807 = scalar_lea.vmem [#allocation2], %s1806
          %1808 = dma.done %s1804, 128
        $region80: #{tpu_custom_call.1} parent=75 // pred_fallthru
          _
      $region76: #{tpu_custom_call.1} parent=5 // pred_fallthru
        _
    $region6: #{tpu_custom_call.1} parent=1 // loop_footer
      %s25 = sadd.s32 1, %s21
    $region7: #{tpu_custom_call.1} parent=1 // loop_footer_branch
      %20 = sbr.rel target = $region3
    $region8: #{tpu_custom_call.1} parent=1 // loop_exit
      _
    %1809 = vsyncpa [#allocation3], 1
    %s1810 = scalar_lea.sflag [#allocation3], 1
    %1811 = vsyncpa %s1810, 1

// kernel: tpu_custom_call.1
$region0: #{tpu_custom_call.1}
  #allocation0 [shape = 'u32[]', space=smem, size = 0x4, offset = 0x4, fixed_abs, tag = 'smem constant byte address 0x4 - core index']
  #allocation1 [shape = 'u32[144,128]{1,0:T(1,128)}', space=vmem, size = 0x12000, scoped, tag = 'internal scratch']
  %s0 = inlined_call_operand.vmem [shape: f32[2,8,32], index: 0, kind: input, shape index: {}]
  %s1 = inlined_call_operand.vmem [shape: f32[1,32], index: 1, kind: input, shape index: {}]
  %s2 = inlined_call_operand.vmem [shape: f32[1,32], index: 2, kind: input, shape index: {}]
  %s3 = inlined_call_operand.vmem [shape: bf16[32,96], index: 3, kind: input, shape index: {}]
  %s4 = inlined_call_operand.vmem [shape: bf16[32,32], index: 4, kind: input, shape index: {}]
  %s5 = inlined_call_operand.vmem [shape: f32[1,32], index: 5, kind: input, shape index: {}]
  %s6 = inlined_call_operand.vmem [shape: f32[1,32], index: 6, kind: input, shape index: {}]
  %s7 = inlined_call_operand.vmem [shape: f32[1,32], index: 7, kind: input, shape index: {}]
  %s8 = inlined_call_operand.vmem [shape: bf16[32,128], index: 8, kind: input, shape index: {}]
  %s9 = inlined_call_operand.vmem [shape: f32[1,128], index: 9, kind: input, shape index: {}]
  %s10 = inlined_call_operand.vmem [shape: bf16[128,32], index: 10, kind: input, shape index: {}]
  %s11 = inlined_call_operand.vmem [shape: f32[1,32], index: 11, kind: input, shape index: {}]
  %s12 = inlined_call_operand.hbm [shape: f32[2,8,32], index: 12, kind: output, shape index: {}]
  %s13 = sld [smem:[#allocation0]]
  $region81: #{tpu_custom_call.1} parent=0
    _
  %s15 = ssub.s32 1, %s13
  %s16 = scalar_select 0, %s15, %s13
  $region1: #{tpu_custom_call.1} parent=0
    #allocation2 [shape = 'u8[8192]{0}', space=vmem, size = 0x2000, scoped, tag = 'output window, operand 0']
    #allocation3 [shape = 's32[2]{0}', space=sflag, size = 0x8, scoped, tag = 'scoped memory for tpu_custom_call.1']
    %17 = vsyncpa [#allocation3], 0
    %s18 = scalar_lea.sflag [#allocation3], 1
    %19 = vsyncpa %s18, 0
    loop: start=0, step=1, limit=4
    $region2: #{tpu_custom_call.1} parent=1 // loop_pre_header
      _
    $region3: #{tpu_custom_call.1} parent=1 // loop_header
      %s21 = sphi 0, %s25
      %p22 = scmp.ge.s32.totalorder %s21, 4
      %s31 = sphi 0, %s33
      %s34 = sphi 0, %s31
      %s35 = sphi 0, %s34
      %s51 = sphi 0, %s35
      %s55 = sphi 0, %s55
      %s57 = sphi 0, %s55
      %s58 = sphi 0, %s57
      %s72 = sphi 0, %s58
      %s76 = sphi 0, %s76
      %s78 = sphi 0, %s76
      %s79 = sphi 0, %s78
      %s93 = sphi 0, %s79
      %s97 = sphi 0, %s97
      %s99 = sphi 0, %s97
      %s100 = sphi 0, %s99
      %s114 = sphi 0, %s100
      %s118 = sphi 0, %s118
      %s120 = sphi 0, %s118
      %s121 = sphi 0, %s120
      %s135 = sphi 0, %s121
      %s139 = sphi 0, %s139
      %s141 = sphi 0, %s139
      %s142 = sphi 0, %s141
      %s156 = sphi 0, %s142
      %s160 = sphi 0, %s160
      %s162 = sphi 0, %s160
      %s163 = sphi 0, %s162
      %s177 = sphi 0, %s163
      %s181 = sphi 0, %s181
      %s183 = sphi 0, %s181
      %s184 = sphi 0, %s183
      %s198 = sphi 0, %s184
      %s202 = sphi 0, %s202
      %s204 = sphi 0, %s202
      %s205 = sphi 0, %s204
      %s219 = sphi 0, %s205
      %s223 = sphi 0, %s223
      %s225 = sphi 0, %s223
      %s226 = sphi 0, %s225
      %s240 = sphi 0, %s226
      %s244 = sphi 0, %s244
      %s246 = sphi 0, %s244
      %s247 = sphi 0, %s246
      %s261 = sphi 0, %s247
      %s265 = sphi 0, %s265
      %s267 = sphi 0, %s265
      %s268 = sphi 0, %s267
      %s282 = sphi 0, %s268
      %s288 = sphi 0, %s290
      %s291 = sphi 0, %s288
      %s292 = sphi 0, %s291
      %s308 = sphi 0, %s292
    $region4: #{tpu_custom_call.1} parent=1 // loop_header_branch
      %24 = sbr.rel (%p22) target = $region8
    $region5: #{tpu_custom_call.1} parent=1 // loop_body
      %s26 = ssub.s32 %s21, 1
      %s27 = ssub.s32 %s21, 2
      %s28 = sadd.s32 %s21, 1
      %s29 = ssub.s32 %s21, %s28
      %p30 = scmp.eq.s32.totalorder %s29, 0
      %s32 = sadd.s32 %s31, 1
      %s33 = scalar_select %p30, %s31, %s32
      %p36 = pneg %p30
      %p37 = scmp.eq.s32.totalorder %s21, 1
      %p38 = por %p36, %p37
      %p39 = scmp.ne.s32.totalorder %s31, %s34
      %p40 = scmp.eq.s32.totalorder %s21, 0
      %p41 = por %p39, %p40
      %p42 = scmp.ne.s32.totalorder %s31, %s34
      %p43 = scmp.eq.s32.totalorder %s26, 1
      %p44 = por %p42, %p43
      %p45 = scmp.ne.s32.totalorder %s34, %s35
      %p46 = scmp.eq.s32.totalorder %s26, 0
      %p47 = por %p45, %p46
      %p48 = scmp.ne.s32.totalorder %s34, %s35
      %p49 = scmp.eq.s32.totalorder %s27, 1
      %p50 = por %p48, %p49
      %p52 = scmp.ne.s32.totalorder %s35, %s51
      %p53 = scmp.eq.s32.totalorder %s27, 0
      %p54 = por %p52, %p53
      %s56 = sadd.s32 %s55, 1
      %p59 = scmp.eq.s32.totalorder %s21, 1
      %p60 = scmp.ne.s32.totalorder %s55, %s57
      %p61 = scmp.eq.s32.totalorder %s21, 0
      %p62 = por %p60, %p61
      %p63 = scmp.ne.s32.totalorder %s55, %s57
      %p64 = scmp.eq.s32.totalorder %s26, 1
      %p65 = por %p63, %p64
      %p66 = scmp.ne.s32.totalorder %s57, %s58
      %p67 = scmp.eq.s32.totalorder %s26, 0
      %p68 = por %p66, %p67
      %p69 = scmp.ne.s32.totalorder %s57, %s58
      %p70 = scmp.eq.s32.totalorder %s27, 1
      %p71 = por %p69, %p70
      %p73 = scmp.ne.s32.totalorder %s58, %s72
      %p74 = scmp.eq.s32.totalorder %s27, 0
      %p75 = por %p73, %p74
      %s77 = sadd.s32 %s76, 1
      %p80 = scmp.eq.s32.totalorder %s21, 1
      %p81 = scmp.ne.s32.totalorder %s76, %s78
      %p82 = scmp.eq.s32.totalorder %s21, 0
      %p83 = por %p81, %p82
      %p84 = scmp.ne.s32.totalorder %s76, %s78
      %p85 = scmp.eq.s32.totalorder %s26, 1
      %p86 = por %p84, %p85
      %p87 = scmp.ne.s32.totalorder %s78, %s79
      %p88 = scmp.eq.s32.totalorder %s26, 0
      %p89 = por %p87, %p88
      %p90 = scmp.ne.s32.totalorder %s78, %s79
      %p91 = scmp.eq.s32.totalorder %s27, 1
      %p92 = por %p90, %p91
      %p94 = scmp.ne.s32.totalorder %s79, %s93
      %p95 = scmp.eq.s32.totalorder %s27, 0
      %p96 = por %p94, %p95
      %s98 = sadd.s32 %s97, 1
      %p101 = scmp.eq.s32.totalorder %s21, 1
      %p102 = scmp.ne.s32.totalorder %s97, %s99
      %p103 = scmp.eq.s32.totalorder %s21, 0
      %p104 = por %p102, %p103
      %p105 = scmp.ne.s32.totalorder %s97, %s99
      %p106 = scmp.eq.s32.totalorder %s26, 1
      %p107 = por %p105, %p106
      %p108 = scmp.ne.s32.totalorder %s99, %s100
      %p109 = scmp.eq.s32.totalorder %s26, 0
      %p110 = por %p108, %p109
      %p111 = scmp.ne.s32.totalorder %s99, %s100
      %p112 = scmp.eq.s32.totalorder %s27, 1
      %p113 = por %p111, %p112
      %p115 = scmp.ne.s32.totalorder %s100, %s114
      %p116 = scmp.eq.s32.totalorder %s27, 0
      %p117 = por %p115, %p116
      %s119 = sadd.s32 %s118, 1
      %p122 = scmp.eq.s32.totalorder %s21, 1
      %p123 = scmp.ne.s32.totalorder %s118, %s120
      %p124 = scmp.eq.s32.totalorder %s21, 0
      %p125 = por %p123, %p124
      %p126 = scmp.ne.s32.totalorder %s118, %s120
      %p127 = scmp.eq.s32.totalorder %s26, 1
      %p128 = por %p126, %p127
      %p129 = scmp.ne.s32.totalorder %s120, %s121
      %p130 = scmp.eq.s32.totalorder %s26, 0
      %p131 = por %p129, %p130
      %p132 = scmp.ne.s32.totalorder %s120, %s121
      %p133 = scmp.eq.s32.totalorder %s27, 1
      %p134 = por %p132, %p133
      %p136 = scmp.ne.s32.totalorder %s121, %s135
      %p137 = scmp.eq.s32.totalorder %s27, 0
      %p138 = por %p136, %p137
      %s140 = sadd.s32 %s139, 1
      %p143 = scmp.eq.s32.totalorder %s21, 1
      %p144 = scmp.ne.s32.totalorder %s139, %s141
      %p145 = scmp.eq.s32.totalorder %s21, 0
      %p146 = por %p144, %p145
      %p147 = scmp.ne.s32.totalorder %s139, %s141
      %p148 = scmp.eq.s32.totalorder %s26, 1
      %p149 = por %p147, %p148
      %p150 = scmp.ne.s32.totalorder %s141, %s142
      %p151 = scmp.eq.s32.totalorder %s26, 0
      %p152 = por %p150, %p151
      %p153 = scmp.ne.s32.totalorder %s141, %s142
      %p154 = scmp.eq.s32.totalorder %s27, 1
      %p155 = por %p153, %p154
      %p157 = scmp.ne.s32.totalorder %s142, %s156
      %p158 = scmp.eq.s32.totalorder %s27, 0
      %p159 = por %p157, %p158
      %s161 = sadd.s32 %s160, 1
      %p164 = scmp.eq.s32.totalorder %s21, 1
      %p165 = scmp.ne.s32.totalorder %s160, %s162
      %p166 = scmp.eq.s32.totalorder %s21, 0
      %p167 = por %p165, %p166
      %p168 = scmp.ne.s32.totalorder %s160, %s162
      %p169 = scmp.eq.s32.totalorder %s26, 1
      %p170 = por %p168, %p169
      %p171 = scmp.ne.s32.totalorder %s162, %s163
      %p172 = scmp.eq.s32.totalorder %s26, 0
      %p173 = por %p171, %p172
      %p174 = scmp.ne.s32.totalorder %s162, %s163
      %p175 = scmp.eq.s32.totalorder %s27, 1
      %p176 = por %p174, %p175
      %p178 = scmp.ne.s32.totalorder %s163, %s177
      %p179 = scmp.eq.s32.totalorder %s27, 0
      %p180 = por %p178, %p179
      %s182 = sadd.s32 %s181, 1
      %p185 = scmp.eq.s32.totalorder %s21, 1
      %p186 = scmp.ne.s32.totalorder %s181, %s183
      %p187 = scmp.eq.s32.totalorder %s21, 0
      %p188 = por %p186, %p187
      %p189 = scmp.ne.s32.totalorder %s181, %s183
      %p190 = scmp.eq.s32.totalorder %s26, 1
      %p191 = por %p189, %p190
      %p192 = scmp.ne.s32.totalorder %s183, %s184
      %p193 = scmp.eq.s32.totalorder %s26, 0
      %p194 = por %p192, %p193
      %p195 = scmp.ne.s32.totalorder %s183, %s184
      %p196 = scmp.eq.s32.totalorder %s27, 1
      %p197 = por %p195, %p196
      %p199 = scmp.ne.s32.totalorder %s184, %s198
      %p200 = scmp.eq.s32.totalorder %s27, 0
      %p201 = por %p199, %p200
      %s203 = sadd.s32 %s202, 1
      %p206 = scmp.eq.s32.totalorder %s21, 1
      %p207 = scmp.ne.s32.totalorder %s202, %s204
      %p208 = scmp.eq.s32.totalorder %s21, 0
      %p209 = por %p207, %p208
      %p210 = scmp.ne.s32.totalorder %s202, %s204
      %p211 = scmp.eq.s32.totalorder %s26, 1
      %p212 = por %p210, %p211
      %p213 = scmp.ne.s32.totalorder %s204, %s205
      %p214 = scmp.eq.s32.totalorder %s26, 0
      %p215 = por %p213, %p214
      %p216 = scmp.ne.s32.totalorder %s204, %s205
      %p217 = scmp.eq.s32.totalorder %s27, 1
      %p218 = por %p216, %p217
      %p220 = scmp.ne.s32.totalorder %s205, %s219
      %p221 = scmp.eq.s32.totalorder %s27, 0
      %p222 = por %p220, %p221
      %s224 = sadd.s32 %s223, 1
      %p227 = scmp.eq.s32.totalorder %s21, 1
      %p228 = scmp.ne.s32.totalorder %s223, %s225
      %p229 = scmp.eq.s32.totalorder %s21, 0
      %p230 = por %p228, %p229
      %p231 = scmp.ne.s32.totalorder %s223, %s225
      %p232 = scmp.eq.s32.totalorder %s26, 1
      %p233 = por %p231, %p232
      %p234 = scmp.ne.s32.totalorder %s225, %s226
      %p235 = scmp.eq.s32.totalorder %s26, 0
      %p236 = por %p234, %p235
      %p237 = scmp.ne.s32.totalorder %s225, %s226
      %p238 = scmp.eq.s32.totalorder %s27, 1
      %p239 = por %p237, %p238
      %p241 = scmp.ne.s32.totalorder %s226, %s240
      %p242 = scmp.eq.s32.totalorder %s27, 0
      %p243 = por %p241, %p242
      %s245 = sadd.s32 %s244, 1
      %p248 = scmp.eq.s32.totalorder %s21, 1
      %p249 = scmp.ne.s32.totalorder %s244, %s246
      %p250 = scmp.eq.s32.totalorder %s21, 0
      %p251 = por %p249, %p250
      %p252 = scmp.ne.s32.totalorder %s244, %s246
      %p253 = scmp.eq.s32.totalorder %s26, 1
      %p254 = por %p252, %p253
      %p255 = scmp.ne.s32.totalorder %s246, %s247
      %p256 = scmp.eq.s32.totalorder %s26, 0
      %p257 = por %p255, %p256
      %p258 = scmp.ne.s32.totalorder %s246, %s247
      %p259 = scmp.eq.s32.totalorder %s27, 1
      %p260 = por %p258, %p259
      %p262 = scmp.ne.s32.totalorder %s247, %s261
      %p263 = scmp.eq.s32.totalorder %s27, 0
      %p264 = por %p262, %p263
      %s266 = sadd.s32 %s265, 1
      %p269 = scmp.eq.s32.totalorder %s21, 1
      %p270 = scmp.ne.s32.totalorder %s265, %s267
      %p271 = scmp.eq.s32.totalorder %s21, 0
      %p272 = por %p270, %p271
      %p273 = scmp.ne.s32.totalorder %s265, %s267
      %p274 = scmp.eq.s32.totalorder %s26, 1
      %p275 = por %p273, %p274
      %p276 = scmp.ne.s32.totalorder %s267, %s268
      %p277 = scmp.eq.s32.totalorder %s26, 0
      %p278 = por %p276, %p277
      %p279 = scmp.ne.s32.totalorder %s267, %s268
      %p280 = scmp.eq.s32.totalorder %s27, 1
      %p281 = por %p279, %p280
      %p283 = scmp.ne.s32.totalorder %s268, %s282
      %p284 = scmp.eq.s32.totalorder %s27, 0
      %p285 = por %p283, %p284
      %s286 = ssub.s32 %s21, %s28
      %p287 = scmp.eq.s32.totalorder %s286, 0
      %s289 = sadd.s32 %s288, 1
      %s290 = scalar_select %p287, %s288, %s289
      %p293 = pneg %p287
      %p294 = scmp.eq.s32.totalorder %s21, 1
      %p295 = por %p293, %p294
      %p296 = scmp.ne.s32.totalorder %s288, %s291
      %p297 = scmp.eq.s32.totalorder %s21, 0
      %p298 = por %p296, %p297
      %p299 = scmp.ne.s32.totalorder %s288, %s291
      %p300 = scmp.eq.s32.totalorder %s26, 1
      %p301 = por %p299, %p300
      %p302 = scmp.ne.s32.totalorder %s291, %s292
      %p303 = scmp.eq.s32.totalorder %s26, 0
      %p304 = por %p302, %p303
      %p305 = scmp.ne.s32.totalorder %s291, %s292
      %p306 = scmp.eq.s32.totalorder %s27, 1
      %p307 = por %p305, %p306
      %p309 = scmp.ne.s32.totalorder %s292, %s308
      %p310 = scmp.eq.s32.totalorder %s27, 0
      %p311 = por %p309, %p310
      %p312 = scmp.le.s32.totalorder 1, %s21
      %p313 = scmp.lt.s32.totalorder %s21, 3
      %p314 = pnand %p312, %p313
      %p315 = pneg %p314
      // Predicated region
      $region9: #{tpu_custom_call.1} parent=5 // pred_check
        _
      $region10: #{tpu_custom_call.1} parent=5 // pred_check_branch
        %317 = sbr.rel (%p314) target = $region12
      $region11: #{tpu_custom_call.1} parent=5 // pred_region
        %s318 = ssub.s32 %s21, 1
        // Predicated region
        $region13: #{tpu_custom_call.1} parent=11 // pred_check
          %p319 = pneg %p68
        $region14: #{tpu_custom_call.1} parent=11 // pred_check_branch
          %321 = sbr.rel (%p319) target = $region16
        $region15: #{tpu_custom_call.1} parent=11 // pred_region
          _
        $region16: #{tpu_custom_call.1} parent=11 // pred_fallthru
          _
        // Predicated region
        $region17: #{tpu_custom_call.1} parent=11 // pred_check
          %p322 = pneg %p89
        $region18: #{tpu_custom_call.1} parent=11 // pred_check_branch
          %324 = sbr.rel (%p322) target = $region20
        $region19: #{tpu_custom_call.1} parent=11 // pred_region
          _
        $region20: #{tpu_custom_call.1} parent=11 // pred_fallthru
          _
        // Predicated region
        $region21: #{tpu_custom_call.1} parent=11 // pred_check
          %p325 = pneg %p110
        $region22: #{tpu_custom_call.1} parent=11 // pred_check_branch
          %327 = sbr.rel (%p325) target = $region24
        $region23: #{tpu_custom_call.1} parent=11 // pred_region
          _
        $region24: #{tpu_custom_call.1} parent=11 // pred_fallthru
          _
        // Predicated region
        $region25: #{tpu_custom_call.1} parent=11 // pred_check
          %p328 = pneg %p131
        $region26: #{tpu_custom_call.1} parent=11 // pred_check_branch
          %330 = sbr.rel (%p328) target = $region28
        $region27: #{tpu_custom_call.1} parent=11 // pred_region
          _
        $region28: #{tpu_custom_call.1} parent=11 // pred_fallthru
          _
        // Predicated region
        $region29: #{tpu_custom_call.1} parent=11 // pred_check
          %p331 = pneg %p152
        $region30: #{tpu_custom_call.1} parent=11 // pred_check_branch
          %333 = sbr.rel (%p331) target = $region32
        $region31: #{tpu_custom_call.1} parent=11 // pred_region
          _
        $region32: #{tpu_custom_call.1} parent=11 // pred_fallthru
          _
        // Predicated region
        $region33: #{tpu_custom_call.1} parent=11 // pred_check
          %p334 = pneg %p173
        $region34: #{tpu_custom_call.1} parent=11 // pred_check_branch
          %336 = sbr.rel (%p334) target = $region36
        $region35: #{tpu_custom_call.1} parent=11 // pred_region
          _
        $region36: #{tpu_custom_call.1} parent=11 // pred_fallthru
          _
        // Predicated region
        $region37: #{tpu_custom_call.1} parent=11 // pred_check
          %p337 = pneg %p194
        $region38: #{tpu_custom_call.1} parent=11 // pred_check_branch
          %339 = sbr.rel (%p337) target = $region40
        $region39: #{tpu_custom_call.1} parent=11 // pred_region
          _
        $region40: #{tpu_custom_call.1} parent=11 // pred_fallthru
          _
        // Predicated region
        $region41: #{tpu_custom_call.1} parent=11 // pred_check
          %p340 = pneg %p215
        $region42: #{tpu_custom_call.1} parent=11 // pred_check_branch
          %342 = sbr.rel (%p340) target = $region44
        $region43: #{tpu_custom_call.1} parent=11 // pred_region
          _
        $region44: #{tpu_custom_call.1} parent=11 // pred_fallthru
          _
        // Predicated region
        $region45: #{tpu_custom_call.1} parent=11 // pred_check
          %p343 = pneg %p236
        $region46: #{tpu_custom_call.1} parent=11 // pred_check_branch
          %345 = sbr.rel (%p343) target = $region48
        $region47: #{tpu_custom_call.1} parent=11 // pred_region
          _
        $region48: #{tpu_custom_call.1} parent=11 // pred_fallthru
          _
        // Predicated region
        $region49: #{tpu_custom_call.1} parent=11 // pred_check
          %p346 = pneg %p257
        $region50: #{tpu_custom_call.1} parent=11 // pred_check_branch
          %348 = sbr.rel (%p346) target = $region52
        $region51: #{tpu_custom_call.1} parent=11 // pred_region
          _
        $region52: #{tpu_custom_call.1} parent=11 // pred_fallthru
          _
        // Predicated region
        $region53: #{tpu_custom_call.1} parent=11 // pred_check
          %p349 = pneg %p278
        $region54: #{tpu_custom_call.1} parent=11 // pred_check_branch
          %351 = sbr.rel (%p349) target = $region56
        $region55: #{tpu_custom_call.1} parent=11 // pred_region
          _
        $region56: #{tpu_custom_call.1} parent=11 // pred_fallthru
          _
      $region12: #{tpu_custom_call.1} parent=5 // pred_fallthru
        _
      %p352 = scmp.lt.s32.totalorder %s21, 2
      // Predicated region
      $region57: #{tpu_custom_call.1} parent=5 // pred_check
        %p353 = pneg %p352
      $region58: #{tpu_custom_call.1} parent=5 // pred_check_branch
        %355 = sbr.rel (%p353) target = $region60
      $region59: #{tpu_custom_call.1} parent=5 // pred_region
        // Predicated region
        $region61: #{tpu_custom_call.1} parent=59 // pred_check
          %p356 = pneg %p41
        $region62: #{tpu_custom_call.1} parent=59 // pred_check_branch
          %358 = sbr.rel (%p356) target = $region64
        $region63: #{tpu_custom_call.1} parent=59 // pred_region
          %p359 = scmp.lt.s32.totalorder %s21, 1
          %s360 = scalar_select %p359, %s21, 1
          %s361 = smul.addr %s360, 8
          %s362 = scalar_lea.vmem %s0, %s361
        $region64: #{tpu_custom_call.1} parent=59 // pred_fallthru
          _
      $region60: #{tpu_custom_call.1} parent=5 // pred_fallthru
        _
      %p363 = scmp.le.s32.totalorder 1, %s21
      %p364 = scmp.lt.s32.totalorder %s21, 3
      %p365 = pnand %p363, %p364
      %p366 = pneg %p365
      // Predicated region
      $region65: #{tpu_custom_call.1} parent=5 // pred_check
        _
      $region66: #{tpu_custom_call.1} parent=5 // pred_check_branch
        %368 = sbr.rel (%p365) target = $region68
      $region67: #{tpu_custom_call.1} parent=5 // pred_region
        %s369 = ssub.s32 %s21, 1
        %p370 = scmp.lt.s32.totalorder %s26, 1
        %s371 = scalar_select %p370, %s26, 1
        %s372 = smul.addr %s371, 8
        %s373 = scalar_lea.vmem %s0, %s372
        %p374 = pneg %p47
        %p375 = pneg %p44
        %p376 = pneg %p68
        %p377 = pneg %p65
        %p378 = pneg %p89
        %p379 = pneg %p86
        %p380 = pneg %p110
        %p381 = pneg %p107
        %p382 = pneg %p131
        %p383 = pneg %p128
        %p384 = pneg %p152
        %p385 = pneg %p149
        %p386 = pneg %p173
        %p387 = pneg %p170
        %p388 = pneg %p194
        %p389 = pneg %p191
        %p390 = pneg %p215
        %p391 = pneg %p212
        %p392 = pneg %p236
        %p393 = pneg %p233
        %p394 = pneg %p257
        %p395 = pneg %p254
        %p396 = pneg %p278
        %p397 = pneg %p275
        %p398 = pneg %p304
        %p399 = pneg %p301
        %s400 = sand.u32 %s291, 1
        %s401 = scalar_lea.sflag [#allocation3], %s400
        %s402 = sand.u32 %s291, 1
        %s403 = smul.addr %s402, 8
        %s404 = scalar_lea.vmem [#allocation2], %s403
        %p405 = scmp.lt.s32.totalorder %s26, 1
        %s406 = scalar_select %p405, %s26, 1
        %s407 = smul.addr %s406, 8
        %s408 = scalar_lea.vmem %s0, %s407
        %v410 = vld [vmem:[%s408] sm:$0xff]
        %v411 = vld [vmem:[%s1] sm:$0x1]
        %v412 = vld [vmem:[%s2] sm:$0x1]
        %vm413 = vcmask 261120
        %v414 = vsel %vm413, %v410, 0.0
        %415 = vadd.xlane.f32.xlu0 %v414
        %v416 = vpop.xlane.xlu0 %415
        %v417 = vrcp.pop 32.0
        %v418 = vmul.f32 %v416, %v417
        %v419 = vsub.f32 %v410, %v418
        %v420 = vmul.f32 %v419, %v419
        %v421 = vsel %vm413, %v420, 0.0
        %422 = vadd.xlane.f32.xlu0 %v421
        %v423 = vpop.xlane.xlu0 %422
        %v424 = vmul.f32 %v423, %v417
        %v425 = vadd.f32 %v424, 1e-05
        %v426 = vrsqrt.pop %v425
        %v427 = vmul.f32 %v419, %v426
        %v429 = vlaneseq
        %v430 = vshrl.u32 %v429, 7
        %v431 = vsub.s32 0, %v430
        %v432 = vrot.slane %v411, %v431
        %v434 = vmul.f32 %v427, %v432
        %v436 = vlaneseq
        %v437 = vshrl.u32 %v436, 7
        %v438 = vsub.s32 0, %v437
        %v439 = vrot.slane %v412, %v438
        %v441 = vadd.f32 %v434, %v439
        %v442 = vpack.c.bf16 %v441, %v441
        %v443 = vld [vmem:[%s3] sm:$0xf]
        %v444 = vld [vmem:[%s3 + $0x4] sm:$0xf]
        %v445 = vld [vmem:[%s3 + $0x8] sm:$0xf]
        %v446 = vld [vmem:[%s3 + $0xc] sm:$0xf]
        %v451 = vunpack.c.l.b16 %v443
        %v452 = vunpack.c.l.b16 %v444
        %v453 = vunpack.c.l.b16 %v445
        %v454 = vunpack.c.l.b16 %v446
        %v455 = vpack.c.b16 %v452, %v451
        %v456 = vpack.c.b16 %v454, %v453
        %v460 = vsel %vm413, %v442, 0
        %462 = vmatprep.subr.bf16.mxu0 0
        %463 = vmatpush1.bf16.msra.mxu0 0
        %464 = vmatprep.subr.bf16.mxu0 0
        %465 = vmatpush1.bf16.msra.mxu0 0
        %466 = vmatprep.subr.bf16.mxu0 0
        %467 = vmatpush1.bf16.msra.mxu0 0
        %468 = vmatprep.subr.bf16.mxu0 0
        %469 = vmatpush1.bf16.msra.mxu0 0
        %470 = vmatprep.subr.bf16.mxu0 0
        %471 = vmatpush1.bf16.msra.mxu0 0
        %472 = vmatprep.subr.bf16.mxu0 0
        %473 = vmatpush1.bf16.msra.mxu0 0
        %474 = vmatprep.subr.bf16.mxu0 0
        %475 = vmatpush1.bf16.msra.mxu0 %v456
        %476 = vmatprep.subr.bf16.mxu0 0
        %477 = vmatpush1.bf16.msra.mxu0 %v455
        %478 = vmatprep.subr.bf16.mxu0 0
        %479 = vmatpush2.bf16.msra.mxu0 0
        %480 = vmatprep.subr.bf16.mxu0 0
        %481 = vmatpush2.bf16.msra.mxu0 0
        %482 = vmatprep.subr.bf16.mxu0 0
        %483 = vmatpush2.bf16.msra.mxu0 0
        %484 = vmatprep.subr.bf16.mxu0 0
        %485 = vmatpush2.bf16.msra.mxu0 0
        %486 = vmatprep.subr.bf16.mxu0 0
        %487 = vmatpush2.bf16.msra.mxu0 0
        %488 = vmatprep.subr.bf16.mxu0 0
        %489 = vmatpush2.bf16.msra.mxu0 0
        %490 = vmatprep.subr.bf16.mxu0 0
        %491 = vmatpush2.bf16.msra.mxu0 0
        %492 = vmatprep.subr.bf16.mxu0 0
        %493 = vmatpush2.bf16.msra.mxu0 0
        %494 = vmatprep.mubr.bf16.mxu0 0
        %495 = vmatmul.mubr.bf16.gmra.mxu0 %v460
        %v496 = vpop.f32.mrf.mxu0
        %v497 = vadd.f32 0.0, %v496
        %v498 = vpop.f32.mrf.mxu0
        %v499 = vpop.f32.mrf.mxu0
        %v500 = vpop.f32.mrf.mxu0
        %501 = vdwg.mxu0
        %v502 = vpack.c.bf16 %v497, %v497
        %504 = vrot.lane.b32.xlu0 %v502, 120
        %v505 = vpop.permute.xlu0 %504
        %507 = vrot.lane.b32.xlu0 %v502, 112
        %v508 = vpop.permute.xlu0 %507
        %510 = vrot.lane.b32.xlu0 %v502, 104
        %v511 = vpop.permute.xlu0 %510
        %513 = vrot.lane.b32.xlu0 %v502, 96
        %v514 = vpop.permute.xlu0 %513
        %516 = vrot.lane.b32.xlu0 %v502, 88
        %v517 = vpop.permute.xlu0 %516
        %519 = vrot.lane.b32.xlu0 %v502, 80
        %v520 = vpop.permute.xlu0 %519
        %522 = vrot.lane.b32.xlu0 %v502, 72
        %v523 = vpop.permute.xlu0 %522
        %525 = vrot.lane.b32.xlu0 %v502, 64
        %v526 = vpop.permute.xlu0 %525
        %527 = vrot.lane.b32.xlu0 %v502, 56
        %v528 = vpop.permute.xlu0 %527
        %529 = vrot.lane.b32.xlu0 %v502, 48
        %v530 = vpop.permute.xlu0 %529
        %531 = vrot.lane.b32.xlu0 %v502, 40
        %v532 = vpop.permute.xlu0 %531
        %v533 = vcombine.low %v502, %v514
        %v535 = vunpack.c.l.s4 1983009808
        %v536 = vunpack.c.0.s8 %v535
        %v537 = vlaneseq
        %v538 = vshrl.u32 %v537, 7
        %v539 = vsub.s32 %v536, %v538
        %v540 = vrot.slane %v533, %v539
        %v541 = vcombine.low %v508, %v520
        %v543 = vunpack.c.l.s4 1983009808
        %v544 = vunpack.c.0.s8 %v543
        %v545 = vlaneseq
        %v546 = vshrl.u32 %v545, 7
        %v547 = vsub.s32 %v544, %v546
        %v548 = vrot.slane %v541, %v547
        %v551 = vunpack.c.l.s4 1983009808
        %v552 = vunpack.c.0.s8 %v551
        %v553 = vlaneseq
        %v554 = vshrl.u32 %v553, 7
        %v555 = vsub.s32 %v552, %v554
        %v556 = vrot.slane %v526, %v555
        %v559 = vunpack.c.l.s4 1983009808
        %v560 = vunpack.c.0.s8 %v559
        %v561 = vlaneseq
        %v562 = vshrl.u32 %v561, 7
        %v563 = vsub.s32 %v560, %v562
        %v564 = vrot.slane %v530, %v563
        %v565 = vcombine.low %v540, %v548
        %v566 = vcombine.high %v540, %v548
        %v568 = vunpack.c.l.s4 1934713408
        %v569 = vunpack.c.0.s8 %v568
        %v570 = vlaneseq
        %v571 = vshrl.u32 %v570, 7
        %v572 = vsub.s32 %v569, %v571
        %v573 = vrot.slane %v565, %v572
        %v575 = vunpack.c.l.s4 1934713408
        %v576 = vunpack.c.0.s8 %v575
        %v577 = vlaneseq
        %v578 = vshrl.u32 %v577, 7
        %v579 = vsub.s32 %v576, %v578
        %v580 = vrot.slane %v566, %v579
        %v581 = vcombine.low %v556, %v564
        %v582 = vcombine.high %v556, %v564
        %v584 = vunpack.c.l.s4 1934713408
        %v585 = vunpack.c.0.s8 %v584
        %v586 = vlaneseq
        %v587 = vshrl.u32 %v586, 7
        %v588 = vsub.s32 %v585, %v587
        %v589 = vrot.slane %v581, %v588
        %v591 = vunpack.c.l.s4 1934713408
        %v592 = vunpack.c.0.s8 %v591
        %v593 = vlaneseq
        %v594 = vshrl.u32 %v593, 7
        %v595 = vsub.s32 %v592, %v594
        %v596 = vrot.slane %v582, %v595
        %v597 = vcombine.low %v573, %v589
        %v598 = vcombine.high %v573, %v589
        %v599 = vcombine.low %v580, %v596
        %v600 = vcombine.high %v580, %v596
        %v601 = vcombine.low %v505, %v517
        %v603 = vunpack.c.l.s4 1983009808
        %v604 = vunpack.c.0.s8 %v603
        %v605 = vlaneseq
        %v606 = vshrl.u32 %v605, 7
        %v607 = vsub.s32 %v604, %v606
        %v608 = vrot.slane %v601, %v607
        %v609 = vcombine.low %v511, %v523
        %v611 = vunpack.c.l.s4 1983009808
        %v612 = vunpack.c.0.s8 %v611
        %v613 = vlaneseq
        %v614 = vshrl.u32 %v613, 7
        %v615 = vsub.s32 %v612, %v614
        %v616 = vrot.slane %v609, %v615
        %v619 = vunpack.c.l.s4 1983009808
        %v620 = vunpack.c.0.s8 %v619
        %v621 = vlaneseq
        %v622 = vshrl.u32 %v621, 7
        %v623 = vsub.s32 %v620, %v622
        %v624 = vrot.slane %v528, %v623
        %v627 = vunpack.c.l.s4 1983009808
        %v628 = vunpack.c.0.s8 %v627
        %v629 = vlaneseq
        %v630 = vshrl.u32 %v629, 7
        %v631 = vsub.s32 %v628, %v630
        %v632 = vrot.slane %v532, %v631
        %v633 = vcombine.low %v608, %v616
        %v634 = vcombine.high %v608, %v616
        %v636 = vunpack.c.l.s4 1934713408
        %v637 = vunpack.c.0.s8 %v636
        %v638 = vlaneseq
        %v639 = vshrl.u32 %v638, 7
        %v640 = vsub.s32 %v637, %v639
        %v641 = vrot.slane %v633, %v640
        %v643 = vunpack.c.l.s4 1934713408
        %v644 = vunpack.c.0.s8 %v643
        %v645 = vlaneseq
        %v646 = vshrl.u32 %v645, 7
        %v647 = vsub.s32 %v644, %v646
        %v648 = vrot.slane %v634, %v647
        %v649 = vcombine.low %v624, %v632
        %v650 = vcombine.high %v624, %v632
        %v652 = vunpack.c.l.s4 1934713408
        %v653 = vunpack.c.0.s8 %v652
        %v654 = vlaneseq
        %v655 = vshrl.u32 %v654, 7
        %v656 = vsub.s32 %v653, %v655
        %v657 = vrot.slane %v649, %v656
        %v659 = vunpack.c.l.s4 1934713408
        %v660 = vunpack.c.0.s8 %v659
        %v661 = vlaneseq
        %v662 = vshrl.u32 %v661, 7
        %v663 = vsub.s32 %v660, %v662
        %v664 = vrot.slane %v650, %v663
        %v665 = vcombine.low %v641, %v657
        %v666 = vcombine.high %v641, %v657
        %v667 = vcombine.low %v648, %v664
        %v668 = vcombine.high %v648, %v664
        %v671 = vpack.i.b16 %v665, %v597
        %v673 = vshrl.u32 %v597, 16
        %v674 = vshrl.u32 %v665, 16
        %v675 = vpack.i.b16 %v674, %v673
        %v679 = vpack.i.b16 %v666, %v598
        %v681 = vshrl.u32 %v598, 16
        %v682 = vshrl.u32 %v666, 16
        %v683 = vpack.i.b16 %v682, %v681
        %v687 = vpack.i.b16 %v667, %v599
        %v689 = vshrl.u32 %v599, 16
        %v690 = vshrl.u32 %v667, 16
        %v691 = vpack.i.b16 %v690, %v689
        %v695 = vpack.i.b16 %v668, %v600
        %v697 = vshrl.u32 %v600, 16
        %v698 = vshrl.u32 %v668, 16
        %v699 = vpack.i.b16 %v698, %v697
        %v701 = vcombine.low %v671, %v687
        %v703 = vunpack.c.l.s4 1983009808
        %v704 = vunpack.c.0.s8 %v703
        %v705 = vlaneseq
        %v706 = vshrl.u32 %v705, 7
        %v707 = vsub.s32 %v704, %v706
        %v708 = vrot.slane %v701, %v707
        %v709 = vcombine.low %v679, %v695
        %v711 = vunpack.c.l.s4 1983009808
        %v712 = vunpack.c.0.s8 %v711
        %v713 = vlaneseq
        %v714 = vshrl.u32 %v713, 7
        %v715 = vsub.s32 %v712, %v714
        %v716 = vrot.slane %v709, %v715
        %v717 = vcombine.low %v708, %v716
        %v719 = vunpack.c.l.s4 1934713408
        %v720 = vunpack.c.0.s8 %v719
        %v721 = vlaneseq
        %v722 = vshrl.u32 %v721, 7
        %v723 = vsub.s32 %v720, %v722
        %v724 = vrot.slane %v717, %v723
        %v725 = vcombine.high %v724, 0
        %v726 = vcombine.low %v675, %v691
        %v728 = vunpack.c.l.s4 1983009808
        %v729 = vunpack.c.0.s8 %v728
        %v730 = vlaneseq
        %v731 = vshrl.u32 %v730, 7
        %v732 = vsub.s32 %v729, %v731
        %v733 = vrot.slane %v726, %v732
        %v734 = vcombine.low %v683, %v699
        %v736 = vunpack.c.l.s4 1983009808
        %v737 = vunpack.c.0.s8 %v736
        %v738 = vlaneseq
        %v739 = vshrl.u32 %v738, 7
        %v740 = vsub.s32 %v737, %v739
        %v741 = vrot.slane %v734, %v740
        %v742 = vcombine.low %v733, %v741
        %v744 = vunpack.c.l.s4 1934713408
        %v745 = vunpack.c.0.s8 %v744
        %v746 = vlaneseq
        %v747 = vshrl.u32 %v746, 7
        %v748 = vsub.s32 %v745, %v747
        %v749 = vrot.slane %v742, %v748
        %v750 = vcombine.high %v749, 0
        %v753 = vpack.i.b16 %v749, %v724
        %v754 = vshrl.u32 %v724, 16
        %v755 = vshrl.u32 %v749, 16
        %v756 = vpack.i.b16 %v755, %v754
        %v759 = vpack.i.b16 %v750, %v725
        %v760 = vshrl.u32 %v725, 16
        %v761 = vshrl.u32 %v750, 16
        %v762 = vpack.i.b16 %v761, %v760
        %v763 = vrot.slane %v671, 2
        %v764 = vrot.slane %v675, 2
        %v765 = vrot.slane %v679, 2
        %v766 = vrot.slane %v683, 2
        %v767 = vrot.slane %v687, 2
        %v768 = vrot.slane %v691, 2
        %v769 = vrot.slane %v695, 2
        %v770 = vrot.slane %v699, 2
        %v779 = vcombine.low %v763, %v767
        %v781 = vunpack.c.l.s4 1983009808
        %v782 = vunpack.c.0.s8 %v781
        %v783 = vlaneseq
        %v784 = vshrl.u32 %v783, 7
        %v785 = vsub.s32 %v782, %v784
        %v786 = vrot.slane %v779, %v785
        %v787 = vcombine.low %v765, %v769
        %v789 = vunpack.c.l.s4 1983009808
        %v790 = vunpack.c.0.s8 %v789
        %v791 = vlaneseq
        %v792 = vshrl.u32 %v791, 7
        %v793 = vsub.s32 %v790, %v792
        %v794 = vrot.slane %v787, %v793
        %v795 = vcombine.low %v786, %v794
        %v797 = vunpack.c.l.s4 1934713408
        %v798 = vunpack.c.0.s8 %v797
        %v799 = vlaneseq
        %v800 = vshrl.u32 %v799, 7
        %v801 = vsub.s32 %v798, %v800
        %v802 = vrot.slane %v795, %v801
        %v803 = vcombine.high %v802, 0
        %v804 = vcombine.low %v764, %v768
        %v806 = vunpack.c.l.s4 1983009808
        %v807 = vunpack.c.0.s8 %v806
        %v808 = vlaneseq
        %v809 = vshrl.u32 %v808, 7
        %v810 = vsub.s32 %v807, %v809
        %v811 = vrot.slane %v804, %v810
        %v812 = vcombine.low %v766, %v770
        %v814 = vunpack.c.l.s4 1983009808
        %v815 = vunpack.c.0.s8 %v814
        %v816 = vlaneseq
        %v817 = vshrl.u32 %v816, 7
        %v818 = vsub.s32 %v815, %v817
        %v819 = vrot.slane %v812, %v818
        %v820 = vcombine.low %v811, %v819
        %v822 = vunpack.c.l.s4 1934713408
        %v823 = vunpack.c.0.s8 %v822
        %v824 = vlaneseq
        %v825 = vshrl.u32 %v824, 7
        %v826 = vsub.s32 %v823, %v825
        %v827 = vrot.slane %v820, %v826
        %v828 = vcombine.high %v827, 0
        %v831 = vpack.i.b16 %v827, %v802
        %v832 = vshrl.u32 %v802, 16
        %v833 = vshrl.u32 %v827, 16
        %v834 = vpack.i.b16 %v833, %v832
        %v837 = vpack.i.b16 %v828, %v803
        %v838 = vshrl.u32 %v803, 16
        %v839 = vshrl.u32 %v828, 16
        %v840 = vpack.i.b16 %v839, %v838
        %v841 = vrot.slane %v671, 4
        %v842 = vrot.slane %v675, 4
        %v843 = vrot.slane %v679, 4
        %v844 = vrot.slane %v683, 4
        %v845 = vrot.slane %v687, 4
        %v846 = vrot.slane %v691, 4
        %v847 = vrot.slane %v695, 4
        %v848 = vrot.slane %v699, 4
        %v857 = vcombine.low %v841, %v845
        %v859 = vunpack.c.l.s4 1983009808
        %v860 = vunpack.c.0.s8 %v859
        %v861 = vlaneseq
        %v862 = vshrl.u32 %v861, 7
        %v863 = vsub.s32 %v860, %v862
        %v864 = vrot.slane %v857, %v863
        %v865 = vcombine.low %v843, %v847
        %v867 = vunpack.c.l.s4 1983009808
        %v868 = vunpack.c.0.s8 %v867
        %v869 = vlaneseq
        %v870 = vshrl.u32 %v869, 7
        %v871 = vsub.s32 %v868, %v870
        %v872 = vrot.slane %v865, %v871
        %v873 = vcombine.low %v864, %v872
        %v875 = vunpack.c.l.s4 1934713408
        %v876 = vunpack.c.0.s8 %v875
        %v877 = vlaneseq
        %v878 = vshrl.u32 %v877, 7
        %v879 = vsub.s32 %v876, %v878
        %v880 = vrot.slane %v873, %v879
        %v881 = vcombine.high %v880, 0
        %v882 = vcombine.low %v842, %v846
        %v884 = vunpack.c.l.s4 1983009808
        %v885 = vunpack.c.0.s8 %v884
        %v886 = vlaneseq
        %v887 = vshrl.u32 %v886, 7
        %v888 = vsub.s32 %v885, %v887
        %v889 = vrot.slane %v882, %v888
        %v890 = vcombine.low %v844, %v848
        %v892 = vunpack.c.l.s4 1983009808
        %v893 = vunpack.c.0.s8 %v892
        %v894 = vlaneseq
        %v895 = vshrl.u32 %v894, 7
        %v896 = vsub.s32 %v893, %v895
        %v897 = vrot.slane %v890, %v896
        %v898 = vcombine.low %v889, %v897
        %v900 = vunpack.c.l.s4 1934713408
        %v901 = vunpack.c.0.s8 %v900
        %v902 = vlaneseq
        %v903 = vshrl.u32 %v902, 7
        %v904 = vsub.s32 %v901, %v903
        %v905 = vrot.slane %v898, %v904
        %v906 = vcombine.high %v905, 0
        %v909 = vpack.i.b16 %v905, %v880
        %v910 = vshrl.u32 %v880, 16
        %v911 = vshrl.u32 %v905, 16
        %v912 = vpack.i.b16 %v911, %v910
        %v915 = vpack.i.b16 %v906, %v881
        %v916 = vshrl.u32 %v881, 16
        %v917 = vshrl.u32 %v906, 16
        %v918 = vpack.i.b16 %v917, %v916
        %vm919 = vcmask 64512
        %v921 = vsel %vm919, %v753, 0
        %v924 = vsel %vm919, %v831, 0
        %926 = vmatprep.subr.bf16.mxu0 0
        %927 = vmatpush1.bf16.xpose.msra.mxu0 0
        %928 = vmatprep.subr.bf16.mxu0 0
        %929 = vmatpush1.bf16.xpose.msra.mxu0 0
        %930 = vmatprep.subr.bf16.mxu0 0
        %931 = vmatpush1.bf16.xpose.msra.mxu0 0
        %932 = vmatprep.subr.bf16.mxu0 0
        %933 = vmatpush1.bf16.xpose.msra.mxu0 0
        %934 = vmatprep.subr.bf16.mxu0 0
        %935 = vmatpush1.bf16.xpose.msra.mxu0 0
        %936 = vmatprep.subr.bf16.mxu0 0
        %937 = vmatpush1.bf16.xpose.msra.mxu0 0
        %938 = vmatprep.subr.bf16.mxu0 0
        %939 = vmatpush1.bf16.xpose.msra.mxu0 0
        %940 = vmatprep.subr.bf16.mxu0 0
        %941 = vmatpush1.bf16.xpose.msra.mxu0 %v924
        %942 = vmatprep.subr.bf16.mxu0 0
        %943 = vmatpush2.bf16.xpose.msra.mxu0 0
        %944 = vmatprep.subr.bf16.mxu0 0
        %945 = vmatpush2.bf16.xpose.msra.mxu0 0
        %946 = vmatprep.subr.bf16.mxu0 0
        %947 = vmatpush2.bf16.xpose.msra.mxu0 0
        %948 = vmatprep.subr.bf16.mxu0 0
        %949 = vmatpush2.bf16.xpose.msra.mxu0 0
        %950 = vmatprep.subr.bf16.mxu0 0
        %951 = vmatpush2.bf16.xpose.msra.mxu0 0
        %952 = vmatprep.subr.bf16.mxu0 0
        %953 = vmatpush2.bf16.xpose.msra.mxu0 0
        %954 = vmatprep.subr.bf16.mxu0 0
        %955 = vmatpush2.bf16.xpose.msra.mxu0 0
        %956 = vmatprep.subr.bf16.mxu0 0
        %957 = vmatpush2.bf16.xpose.msra.mxu0 0
        %958 = vmatprep.mubr.bf16.mxu0 0
        %959 = vmatmul.mubr.bf16.gmra.mxu0 %v921
        %v960 = vpop.f32.mrf.mxu0
        %v961 = vadd.f32 0.0, %v960
        %v962 = vpop.f32.mrf.mxu0
        %v963 = vpop.f32.mrf.mxu0
        %v964 = vpop.f32.mrf.mxu0
        %965 = vdwg.mxu0
        %v967 = vsel %vm919, %v756, 0
        %v970 = vsel %vm919, %v834, 0
        %972 = vmatprep.subr.bf16.mxu0 0
        %973 = vmatpush1.bf16.xpose.msra.mxu0 0
        %974 = vmatprep.subr.bf16.mxu0 0
        %975 = vmatpush1.bf16.xpose.msra.mxu0 0
        %976 = vmatprep.subr.bf16.mxu0 0
        %977 = vmatpush1.bf16.xpose.msra.mxu0 0
        %978 = vmatprep.subr.bf16.mxu0 0
        %979 = vmatpush1.bf16.xpose.msra.mxu0 0
        %980 = vmatprep.subr.bf16.mxu0 0
        %981 = vmatpush1.bf16.xpose.msra.mxu0 0
        %982 = vmatprep.subr.bf16.mxu0 0
        %983 = vmatpush1.bf16.xpose.msra.mxu0 0
        %984 = vmatprep.subr.bf16.mxu0 0
        %985 = vmatpush1.bf16.xpose.msra.mxu0 0
        %986 = vmatprep.subr.bf16.mxu0 0
        %987 = vmatpush1.bf16.xpose.msra.mxu0 %v970
        %988 = vmatprep.subr.bf16.mxu0 0
        %989 = vmatpush2.bf16.xpose.msra.mxu0 0
        %990 = vmatprep.subr.bf16.mxu0 0
        %991 = vmatpush2.bf16.xpose.msra.mxu0 0
        %992 = vmatprep.subr.bf16.mxu0 0
        %993 = vmatpush2.bf16.xpose.msra.mxu0 0
        %994 = vmatprep.subr.bf16.mxu0 0
        %995 = vmatpush2.bf16.xpose.msra.mxu0 0
        %996 = vmatprep.subr.bf16.mxu0 0
        %997 = vmatpush2.bf16.xpose.msra.mxu0 0
        %998 = vmatprep.subr.bf16.mxu0 0
        %999 = vmatpush2.bf16.xpose.msra.mxu0 0
        %1000 = vmatprep.subr.bf16.mxu0 0
        %1001 = vmatpush2.bf16.xpose.msra.mxu0 0
        %1002 = vmatprep.subr.bf16.mxu0 0
        %1003 = vmatpush2.bf16.xpose.msra.mxu0 0
        %1004 = vmatprep.mubr.bf16.mxu0 0
        %1005 = vmatmul.mubr.bf16.gmra.mxu0 %v967
        %v1006 = vpop.f32.mrf.mxu0
        %v1007 = vadd.f32 0.0, %v1006
        %v1008 = vpop.f32.mrf.mxu0
        %v1009 = vpop.f32.mrf.mxu0
        %v1010 = vpop.f32.mrf.mxu0
        %1011 = vdwg.mxu0
        %v1013 = vsel %vm919, %v759, 0
        %v1016 = vsel %vm919, %v837, 0
        %1018 = vmatprep.subr.bf16.mxu0 0
        %1019 = vmatpush1.bf16.xpose.msra.mxu0 0
        %1020 = vmatprep.subr.bf16.mxu0 0
        %1021 = vmatpush1.bf16.xpose.msra.mxu0 0
        %1022 = vmatprep.subr.bf16.mxu0 0
        %1023 = vmatpush1.bf16.xpose.msra.mxu0 0
        %1024 = vmatprep.subr.bf16.mxu0 0
        %1025 = vmatpush1.bf16.xpose.msra.mxu0 0
        %1026 = vmatprep.subr.bf16.mxu0 0
        %1027 = vmatpush1.bf16.xpose.msra.mxu0 0
        %1028 = vmatprep.subr.bf16.mxu0 0
        %1029 = vmatpush1.bf16.xpose.msra.mxu0 0
        %1030 = vmatprep.subr.bf16.mxu0 0
        %1031 = vmatpush1.bf16.xpose.msra.mxu0 0
        %1032 = vmatprep.subr.bf16.mxu0 0
        %1033 = vmatpush1.bf16.xpose.msra.mxu0 %v1016
        %1034 = vmatprep.subr.bf16.mxu0 0
        %1035 = vmatpush2.bf16.xpose.msra.mxu0 0
        %1036 = vmatprep.subr.bf16.mxu0 0
        %1037 = vmatpush2.bf16.xpose.msra.mxu0 0
        %1038 = vmatprep.subr.bf16.mxu0 0
        %1039 = vmatpush2.bf16.xpose.msra.mxu0 0
        %1040 = vmatprep.subr.bf16.mxu0 0
        %1041 = vmatpush2.bf16.xpose.msra.mxu0 0
        %1042 = vmatprep.subr.bf16.mxu0 0
        %1043 = vmatpush2.bf16.xpose.msra.mxu0 0
        %1044 = vmatprep.subr.bf16.mxu0 0
        %1045 = vmatpush2.bf16.xpose.msra.mxu0 0
        %1046 = vmatprep.subr.bf16.mxu0 0
        %1047 = vmatpush2.bf16.xpose.msra.mxu0 0
        %1048 = vmatprep.subr.bf16.mxu0 0
        %1049 = vmatpush2.bf16.xpose.msra.mxu0 0
        %1050 = vmatprep.mubr.bf16.mxu0 0
        %1051 = vmatmul.mubr.bf16.gmra.mxu0 %v1013
        %v1052 = vpop.f32.mrf.mxu0
        %v1053 = vadd.f32 0.0, %v1052
        %v1054 = vpop.f32.mrf.mxu0
        %v1055 = vpop.f32.mrf.mxu0
        %v1056 = vpop.f32.mrf.mxu0
        %1057 = vdwg.mxu0
        %v1059 = vsel %vm919, %v762, 0
        %v1062 = vsel %vm919, %v840, 0
        %1064 = vmatprep.subr.bf16.mxu0 0
        %1065 = vmatpush1.bf16.xpose.msra.mxu0 0
        %1066 = vmatprep.subr.bf16.mxu0 0
        %1067 = vmatpush1.bf16.xpose.msra.mxu0 0
        %1068 = vmatprep.subr.bf16.mxu0 0
        %1069 = vmatpush1.bf16.xpose.msra.mxu0 0
        %1070 = vmatprep.subr.bf16.mxu0 0
        %1071 = vmatpush1.bf16.xpose.msra.mxu0 0
        %1072 = vmatprep.subr.bf16.mxu0 0
        %1073 = vmatpush1.bf16.xpose.msra.mxu0 0
        %1074 = vmatprep.subr.bf16.mxu0 0
        %1075 = vmatpush1.bf16.xpose.msra.mxu0 0
        %1076 = vmatprep.subr.bf16.mxu0 0
        %1077 = vmatpush1.bf16.xpose.msra.mxu0 0
        %1078 = vmatprep.subr.bf16.mxu0 0
        %1079 = vmatpush1.bf16.xpose.msra.mxu0 %v1062
        %1080 = vmatprep.subr.bf16.mxu0 0
        %1081 = vmatpush2.bf16.xpose.msra.mxu0 0
        %1082 = vmatprep.subr.bf16.mxu0 0
        %1083 = vmatpush2.bf16.xpose.msra.mxu0 0
        %1084 = vmatprep.subr.bf16.mxu0 0
        %1085 = vmatpush2.bf16.xpose.msra.mxu0 0
        %1086 = vmatprep.subr.bf16.mxu0 0
        %1087 = vmatpush2.bf16.xpose.msra.mxu0 0
        %1088 = vmatprep.subr.bf16.mxu0 0
        %1089 = vmatpush2.bf16.xpose.msra.mxu0 0
        %1090 = vmatprep.subr.bf16.mxu0 0
        %1091 = vmatpush2.bf16.xpose.msra.mxu0 0
        %1092 = vmatprep.subr.bf16.mxu0 0
        %1093 = vmatpush2.bf16.xpose.msra.mxu0 0
        %1094 = vmatprep.subr.bf16.mxu0 0
        %1095 = vmatpush2.bf16.xpose.msra.mxu0 0
        %1096 = vmatprep.mubr.bf16.mxu0 0
        %1097 = vmatmul.mubr.bf16.gmra.mxu0 %v1059
        %v1098 = vpop.f32.mrf.mxu0
        %v1099 = vadd.f32 0.0, %v1098
        %v1100 = vpop.f32.mrf.mxu0
        %v1101 = vpop.f32.mrf.mxu0
        %v1102 = vpop.f32.mrf.mxu0
        %1103 = vdwg.mxu0
        %v1104 = vsel %vm919, %v961, -inf
        %1105 = vmax.xlane.f32.xlu0 %v1104
        %v1106 = vpop.xlane.xlu0 %1105
        %v1107 = vsel %vm919, %v1007, -inf
        %1108 = vmax.xlane.f32.xlu0 %v1107
        %v1109 = vpop.xlane.xlu0 %1108
        %v1110 = vsel %vm919, %v1053, -inf
        %1111 = vmax.xlane.f32.xlu0 %v1110
        %v1112 = vpop.xlane.xlu0 %1111
        %v1113 = vsel %vm919, %v1099, -inf
        %1114 = vmax.xlane.f32.xlu0 %v1113
        %v1115 = vpop.xlane.xlu0 %1114
        %v1116 = vsub.f32 %v961, %v1106
        %v1117 = vsub.f32 %v1007, %v1109
        %v1118 = vsub.f32 %v1053, %v1112
        %v1119 = vsub.f32 %v1099, %v1115
        %v1120 = vmul.f32 %v1116, 1.442695
        %v1121 = vpow.pop %v1120
        %v1122 = vmul.f32 %v1117, 1.442695
        %v1123 = vpow.pop %v1122
        %v1124 = vmul.f32 %v1118, 1.442695
        %v1125 = vpow.pop %v1124
        %v1126 = vmul.f32 %v1119, 1.442695
        %v1127 = vpow.pop %v1126
        %v1128 = vsel %vm919, %v1121, 0.0
        %1129 = vadd.xlane.f32.xlu0 %v1128
        %v1130 = vpop.xlane.xlu0 %1129
        %v1131 = vsel %vm919, %v1123, 0.0
        %1132 = vadd.xlane.f32.xlu0 %v1131
        %v1133 = vpop.xlane.xlu0 %1132
        %v1134 = vsel %vm919, %v1125, 0.0
        %1135 = vadd.xlane.f32.xlu0 %v1134
        %v1136 = vpop.xlane.xlu0 %1135
        %v1137 = vsel %vm919, %v1127, 0.0
        %1138 = vadd.xlane.f32.xlu0 %v1137
        %v1139 = vpop.xlane.xlu0 %1138
        %v1140 = vpack.c.bf16 %v1121, %v1121
        %v1141 = vpack.c.bf16 %v1123, %v1123
        %v1142 = vpack.c.bf16 %v1125, %v1125
        %v1143 = vpack.c.bf16 %v1127, %v1127
        %v1145 = vsel %vm919, %v1140, 0
        %vm1147 = vcmask 1043456
        %v1149 = vsel %vm1147, %v909, 0
        %1151 = vmatprep.subr.bf16.mxu0 0
        %1152 = vmatpush1.bf16.msra.mxu0 0
        %1153 = vmatprep.subr.bf16.mxu0 0
        %1154 = vmatpush1.bf16.msra.mxu0 0
        %1155 = vmatprep.subr.bf16.mxu0 0
        %1156 = vmatpush1.bf16.msra.mxu0 0
        %1157 = vmatprep.subr.bf16.mxu0 0
        %1158 = vmatpush1.bf16.msra.mxu0 0
        %1159 = vmatprep.subr.bf16.mxu0 0
        %1160 = vmatpush1.bf16.msra.mxu0 0
        %1161 = vmatprep.subr.bf16.mxu0 0
        %1162 = vmatpush1.bf16.msra.mxu0 0
        %1163 = vmatprep.subr.bf16.mxu0 0
        %1164 = vmatpush1.bf16.msra.mxu0 0
        %1165 = vmatprep.subr.bf16.mxu0 0
        %1166 = vmatpush1.bf16.msra.mxu0 %v1149
        %1167 = vmatprep.subr.bf16.mxu0 0
        %1168 = vmatpush2.bf16.msra.mxu0 0
        %1169 = vmatprep.subr.bf16.mxu0 0
        %1170 = vmatpush2.bf16.msra.mxu0 0
        %1171 = vmatprep.subr.bf16.mxu0 0
        %1172 = vmatpush2.bf16.msra.mxu0 0
        %1173 = vmatprep.subr.bf16.mxu0 0
        %1174 = vmatpush2.bf16.msra.mxu0 0
        %1175 = vmatprep.subr.bf16.mxu0 0
        %1176 = vmatpush2.bf16.msra.mxu0 0
        %1177 = vmatprep.subr.bf16.mxu0 0
        %1178 = vmatpush2.bf16.msra.mxu0 0
        %1179 = vmatprep.subr.bf16.mxu0 0
        %1180 = vmatpush2.bf16.msra.mxu0 0
        %1181 = vmatprep.subr.bf16.mxu0 0
        %1182 = vmatpush2.bf16.msra.mxu0 0
        %1183 = vmatprep.mubr.bf16.mxu0 0
        %1184 = vmatmul.mubr.bf16.gmra.mxu0 %v1145
        %v1185 = vpop.f32.mrf.mxu0
        %v1186 = vadd.f32 0.0, %v1185
        %v1187 = vpop.f32.mrf.mxu0
        %v1188 = vpop.f32.mrf.mxu0
        %v1189 = vpop.f32.mrf.mxu0
        %1190 = vdwg.mxu0
        %v1192 = vsel %vm919, %v1141, 0
        %v1195 = vsel %vm1147, %v912, 0
        %1197 = vmatprep.subr.bf16.mxu0 0
        %1198 = vmatpush1.bf16.msra.mxu0 0
        %1199 = vmatprep.subr.bf16.mxu0 0
        %1200 = vmatpush1.bf16.msra.mxu0 0
        %1201 = vmatprep.subr.bf16.mxu0 0
        %1202 = vmatpush1.bf16.msra.mxu0 0
        %1203 = vmatprep.subr.bf16.mxu0 0
        %1204 = vmatpush1.bf16.msra.mxu0 0
        %1205 = vmatprep.subr.bf16.mxu0 0
        %1206 = vmatpush1.bf16.msra.mxu0 0
        %1207 = vmatprep.subr.bf16.mxu0 0
        %1208 = vmatpush1.bf16.msra.mxu0 0
        %1209 = vmatprep.subr.bf16.mxu0 0
        %1210 = vmatpush1.bf16.msra.mxu0 0
        %1211 = vmatprep.subr.bf16.mxu0 0
        %1212 = vmatpush1.bf16.msra.mxu0 %v1195
        %1213 = vmatprep.subr.bf16.mxu0 0
        %1214 = vmatpush2.bf16.msra.mxu0 0
        %1215 = vmatprep.subr.bf16.mxu0 0
        %1216 = vmatpush2.bf16.msra.mxu0 0
        %1217 = vmatprep.subr.bf16.mxu0 0
        %1218 = vmatpush2.bf16.msra.mxu0 0
        %1219 = vmatprep.subr.bf16.mxu0 0
        %1220 = vmatpush2.bf16.msra.mxu0 0
        %1221 = vmatprep.subr.bf16.mxu0 0
        %1222 = vmatpush2.bf16.msra.mxu0 0
        %1223 = vmatprep.subr.bf16.mxu0 0
        %1224 = vmatpush2.bf16.msra.mxu0 0
        %1225 = vmatprep.subr.bf16.mxu0 0
        %1226 = vmatpush2.bf16.msra.mxu0 0
        %1227 = vmatprep.subr.bf16.mxu0 0
        %1228 = vmatpush2.bf16.msra.mxu0 0
        %1229 = vmatprep.mubr.bf16.mxu0 0
        %1230 = vmatmul.mubr.bf16.gmra.mxu0 %v1192
        %v1231 = vpop.f32.mrf.mxu0
        %v1232 = vadd.f32 0.0, %v1231
        %v1233 = vpop.f32.mrf.mxu0
        %v1234 = vpop.f32.mrf.mxu0
        %v1235 = vpop.f32.mrf.mxu0
        %1236 = vdwg.mxu0
        %v1238 = vsel %vm919, %v1142, 0
        %v1241 = vsel %vm1147, %v915, 0
        %1243 = vmatprep.subr.bf16.mxu0 0
        %1244 = vmatpush1.bf16.msra.mxu0 0
        %1245 = vmatprep.subr.bf16.mxu0 0
        %1246 = vmatpush1.bf16.msra.mxu0 0
        %1247 = vmatprep.subr.bf16.mxu0 0
        %1248 = vmatpush1.bf16.msra.mxu0 0
        %1249 = vmatprep.subr.bf16.mxu0 0
        %1250 = vmatpush1.bf16.msra.mxu0 0
        %1251 = vmatprep.subr.bf16.mxu0 0
        %1252 = vmatpush1.bf16.msra.mxu0 0
        %1253 = vmatprep.subr.bf16.mxu0 0
        %1254 = vmatpush1.bf16.msra.mxu0 0
        %1255 = vmatprep.subr.bf16.mxu0 0
        %1256 = vmatpush1.bf16.msra.mxu0 0
        %1257 = vmatprep.subr.bf16.mxu0 0
        %1258 = vmatpush1.bf16.msra.mxu0 %v1241
        %1259 = vmatprep.subr.bf16.mxu0 0
        %1260 = vmatpush2.bf16.msra.mxu0 0
        %1261 = vmatprep.subr.bf16.mxu0 0
        %1262 = vmatpush2.bf16.msra.mxu0 0
        %1263 = vmatprep.subr.bf16.mxu0 0
        %1264 = vmatpush2.bf16.msra.mxu0 0
        %1265 = vmatprep.subr.bf16.mxu0 0
        %1266 = vmatpush2.bf16.msra.mxu0 0
        %1267 = vmatprep.subr.bf16.mxu0 0
        %1268 = vmatpush2.bf16.msra.mxu0 0
        %1269 = vmatprep.subr.bf16.mxu0 0
        %1270 = vmatpush2.bf16.msra.mxu0 0
        %1271 = vmatprep.subr.bf16.mxu0 0
        %1272 = vmatpush2.bf16.msra.mxu0 0
        %1273 = vmatprep.subr.bf16.mxu0 0
        %1274 = vmatpush2.bf16.msra.mxu0 0
        %1275 = vmatprep.mubr.bf16.mxu0 0
        %1276 = vmatmul.mubr.bf16.gmra.mxu0 %v1238
        %v1277 = vpop.f32.mrf.mxu0
        %v1278 = vadd.f32 0.0, %v1277
        %v1279 = vpop.f32.mrf.mxu0
        %v1280 = vpop.f32.mrf.mxu0
        %v1281 = vpop.f32.mrf.mxu0
        %1282 = vdwg.mxu0
        %v1284 = vsel %vm919, %v1143, 0
        %v1287 = vsel %vm1147, %v918, 0
        %1289 = vmatprep.subr.bf16.mxu0 0
        %1290 = vmatpush1.bf16.msra.mxu0 0
        %1291 = vmatprep.subr.bf16.mxu0 0
        %1292 = vmatpush1.bf16.msra.mxu0 0
        %1293 = vmatprep.subr.bf16.mxu0 0
        %1294 = vmatpush1.bf16.msra.mxu0 0
        %1295 = vmatprep.subr.bf16.mxu0 0
        %1296 = vmatpush1.bf16.msra.mxu0 0
        %1297 = vmatprep.subr.bf16.mxu0 0
        %1298 = vmatpush1.bf16.msra.mxu0 0
        %1299 = vmatprep.subr.bf16.mxu0 0
        %1300 = vmatpush1.bf16.msra.mxu0 0
        %1301 = vmatprep.subr.bf16.mxu0 0
        %1302 = vmatpush1.bf16.msra.mxu0 0
        %1303 = vmatprep.subr.bf16.mxu0 0
        %1304 = vmatpush1.bf16.msra.mxu0 %v1287
        %1305 = vmatprep.subr.bf16.mxu0 0
        %1306 = vmatpush2.bf16.msra.mxu0 0
        %1307 = vmatprep.subr.bf16.mxu0 0
        %1308 = vmatpush2.bf16.msra.mxu0 0
        %1309 = vmatprep.subr.bf16.mxu0 0
        %1310 = vmatpush2.bf16.msra.mxu0 0
        %1311 = vmatprep.subr.bf16.mxu0 0
        %1312 = vmatpush2.bf16.msra.mxu0 0
        %1313 = vmatprep.subr.bf16.mxu0 0
        %1314 = vmatpush2.bf16.msra.mxu0 0
        %1315 = vmatprep.subr.bf16.mxu0 0
        %1316 = vmatpush2.bf16.msra.mxu0 0
        %1317 = vmatprep.subr.bf16.mxu0 0
        %1318 = vmatpush2.bf16.msra.mxu0 0
        %1319 = vmatprep.subr.bf16.mxu0 0
        %1320 = vmatpush2.bf16.msra.mxu0 0
        %1321 = vmatprep.mubr.bf16.mxu0 0
        %1322 = vmatmul.mubr.bf16.gmra.mxu0 %v1284
        %v1323 = vpop.f32.mrf.mxu0
        %v1324 = vadd.f32 0.0, %v1323
        %v1325 = vpop.f32.mrf.mxu0
        %v1326 = vpop.f32.mrf.mxu0
        %v1327 = vpop.f32.mrf.mxu0
        %1328 = vdwg.mxu0
        %v1329 = vrcp.pop %v1130
        %v1330 = vrcp.pop %v1133
        %v1331 = vrcp.pop %v1136
        %v1332 = vrcp.pop %v1139
        %v1333 = vmul.f32 %v1186, %v1329
        %v1334 = vmul.f32 %v1232, %v1330
        %v1335 = vmul.f32 %v1278, %v1331
        %v1336 = vmul.f32 %v1324, %v1332
        %v1337 = vcombine.low %v1333, %v1335
        %v1338 = vcombine.high %v1333, %v1335
        %v1340 = vunpack.c.l.s4 1983009808
        %v1341 = vunpack.c.0.s8 %v1340
        %v1342 = vlaneseq
        %v1343 = vshrl.u32 %v1342, 7
        %v1344 = vsub.s32 %v1341, %v1343
        %v1345 = vrot.slane %v1337, %v1344
        %v1347 = vunpack.c.l.s4 1983009808
        %v1348 = vunpack.c.0.s8 %v1347
        %v1349 = vlaneseq
        %v1350 = vshrl.u32 %v1349, 7
        %v1351 = vsub.s32 %v1348, %v1350
        %v1352 = vrot.slane %v1338, %v1351
        %v1353 = vcombine.low %v1334, %v1336
        %v1354 = vcombine.high %v1334, %v1336
        %v1356 = vunpack.c.l.s4 1983009808
        %v1357 = vunpack.c.0.s8 %v1356
        %v1358 = vlaneseq
        %v1359 = vshrl.u32 %v1358, 7
        %v1360 = vsub.s32 %v1357, %v1359
        %v1361 = vrot.slane %v1353, %v1360
        %v1363 = vunpack.c.l.s4 1983009808
        %v1364 = vunpack.c.0.s8 %v1363
        %v1365 = vlaneseq
        %v1366 = vshrl.u32 %v1365, 7
        %v1367 = vsub.s32 %v1364, %v1366
        %v1368 = vrot.slane %v1354, %v1367
        %v1369 = vcombine.low %v1345, %v1361
        %v1370 = vcombine.high %v1345, %v1361
        %v1372 = vunpack.c.l.s4 1934713408
        %v1373 = vunpack.c.0.s8 %v1372
        %v1374 = vlaneseq
        %v1375 = vshrl.u32 %v1374, 7
        %v1376 = vsub.s32 %v1373, %v1375
        %v1377 = vrot.slane %v1369, %v1376
        %v1379 = vunpack.c.l.s4 1934713408
        %v1380 = vunpack.c.0.s8 %v1379
        %v1381 = vlaneseq
        %v1382 = vshrl.u32 %v1381, 7
        %v1383 = vsub.s32 %v1380, %v1382
        %v1384 = vrot.slane %v1370, %v1383
        %v1385 = vcombine.low %v1352, %v1368
        %v1386 = vcombine.high %v1352, %v1368
        %v1388 = vunpack.c.l.s4 1934713408
        %v1389 = vunpack.c.0.s8 %v1388
        %v1390 = vlaneseq
        %v1391 = vshrl.u32 %v1390, 7
        %v1392 = vsub.s32 %v1389, %v1391
        %v1393 = vrot.slane %v1385, %v1392
        %v1395 = vunpack.c.l.s4 1934713408
        %v1396 = vunpack.c.0.s8 %v1395
        %v1397 = vlaneseq
        %v1398 = vshrl.u32 %v1397, 7
        %v1399 = vsub.s32 %v1396, %v1398
        %v1400 = vrot.slane %v1386, %v1399
        %v1401 = vcombine.high %v1377, 0.0
        %v1402 = vcombine.high %v1384, 0.0
        %v1403 = vcombine.high %v1393, 0.0
        %v1404 = vcombine.high %v1400, 0.0
        %v1405 = vcombine.low %v1377, %v1384
        %v1407 = vunpack.c.l.s4 1983009808
        %v1408 = vunpack.c.0.s8 %v1407
        %v1409 = vlaneseq
        %v1410 = vshrl.u32 %v1409, 7
        %v1411 = vsub.s32 %v1408, %v1410
        %v1412 = vrot.slane %v1405, %v1411
        %v1413 = vcombine.low %v1401, %v1402
        %v1415 = vunpack.c.l.s4 1983009808
        %v1416 = vunpack.c.0.s8 %v1415
        %v1417 = vlaneseq
        %v1418 = vshrl.u32 %v1417, 7
        %v1419 = vsub.s32 %v1416, %v1418
        %v1420 = vrot.slane %v1413, %v1419
        %v1421 = vcombine.low %v1393, %v1400
        %v1423 = vunpack.c.l.s4 1983009808
        %v1424 = vunpack.c.0.s8 %v1423
        %v1425 = vlaneseq
        %v1426 = vshrl.u32 %v1425, 7
        %v1427 = vsub.s32 %v1424, %v1426
        %v1428 = vrot.slane %v1421, %v1427
        %v1429 = vcombine.low %v1403, %v1404
        %v1431 = vunpack.c.l.s4 1983009808
        %v1432 = vunpack.c.0.s8 %v1431
        %v1433 = vlaneseq
        %v1434 = vshrl.u32 %v1433, 7
        %v1435 = vsub.s32 %v1432, %v1434
        %v1436 = vrot.slane %v1429, %v1435
        %v1437 = vcombine.low %v1412, %v1420
        %v1438 = vcombine.high %v1412, %v1420
        %v1440 = vunpack.c.l.s4 1934713408
        %v1441 = vunpack.c.0.s8 %v1440
        %v1442 = vlaneseq
        %v1443 = vshrl.u32 %v1442, 7
        %v1444 = vsub.s32 %v1441, %v1443
        %v1445 = vrot.slane %v1437, %v1444
        %v1447 = vunpack.c.l.s4 1934713408
        %v1448 = vunpack.c.0.s8 %v1447
        %v1449 = vlaneseq
        %v1450 = vshrl.u32 %v1449, 7
        %v1451 = vsub.s32 %v1448, %v1450
        %v1452 = vrot.slane %v1438, %v1451
        %v1453 = vcombine.low %v1428, %v1436
        %v1454 = vcombine.high %v1428, %v1436
        %v1456 = vunpack.c.l.s4 1934713408
        %v1457 = vunpack.c.0.s8 %v1456
        %v1458 = vlaneseq
        %v1459 = vshrl.u32 %v1458, 7
        %v1460 = vsub.s32 %v1457, %v1459
        %v1461 = vrot.slane %v1453, %v1460
        %v1463 = vunpack.c.l.s4 1934713408
        %v1464 = vunpack.c.0.s8 %v1463
        %v1465 = vlaneseq
        %v1466 = vshrl.u32 %v1465, 7
        %v1467 = vsub.s32 %v1464, %v1466
        %v1468 = vrot.slane %v1454, %v1467
        %v1469 = vcombine.low %v1445, %v1461
        %v1470 = vcombine.high %v1445, %v1461
        %v1471 = vcombine.low %v1452, %v1468
        %v1472 = vcombine.high %v1452, %v1468
        %1474 = vrot.lane.b32.xlu0 %v1470, 8
        %v1475 = vpop.permute.xlu0 %1474
        %1478 = vrot.lane.b32.xlu0 %v1471, 16
        %v1479 = vpop.permute.xlu0 %1478
        %1482 = vrot.lane.b32.xlu0 %v1472, 24
        %v1483 = vpop.permute.xlu0 %1482
        %v1485 = vsel %vm919, %v1469, %v1475
        %vm1486 = vcmask 130048
        %v1487 = vsel %vm1486, %v1485, %v1479
        %vm1488 = vcmask 195584
        %v1489 = vsel %vm1488, %v1487, %v1483
        %v1490 = vpack.c.bf16 %v1489, %v1489
        %v1491 = vld [vmem:[%s4] sm:$0xf]
        %v1492 = vld [vmem:[%s4 + $0x4] sm:$0xf]
        %v1493 = vld [vmem:[%s4 + $0x8] sm:$0xf]
        %v1494 = vld [vmem:[%s4 + $0xc] sm:$0xf]
        %v1495 = vld [vmem:[%s5] sm:$0x1]
        %v1497 = vlaneseq
        %v1498 = vshrl.u32 %v1497, 7
        %v1499 = vsub.s32 0, %v1498
        %v1500 = vrot.slane %v1495, %v1499
        %v1506 = vunpack.c.l.b16 %v1491
        %v1507 = vunpack.c.l.b16 %v1492
        %v1508 = vunpack.c.l.b16 %v1493
        %v1509 = vunpack.c.l.b16 %v1494
        %v1510 = vpack.c.b16 %v1507, %v1506
        %v1511 = vpack.c.b16 %v1509, %v1508
        %v1515 = vsel %vm413, %v1490, 0
        %1517 = vmatprep.subr.bf16.mxu0 0
        %1518 = vmatpush1.bf16.msra.mxu0 0
        %1519 = vmatprep.subr.bf16.mxu0 0
        %1520 = vmatpush1.bf16.msra.mxu0 0
        %1521 = vmatprep.subr.bf16.mxu0 0
        %1522 = vmatpush1.bf16.msra.mxu0 0
        %1523 = vmatprep.subr.bf16.mxu0 0
        %1524 = vmatpush1.bf16.msra.mxu0 0
        %1525 = vmatprep.subr.bf16.mxu0 0
        %1526 = vmatpush1.bf16.msra.mxu0 0
        %1527 = vmatprep.subr.bf16.mxu0 0
        %1528 = vmatpush1.bf16.msra.mxu0 0
        %1529 = vmatprep.subr.bf16.mxu0 0
        %1530 = vmatpush1.bf16.msra.mxu0 %v1511
        %1531 = vmatprep.subr.bf16.mxu0 0
        %1532 = vmatpush1.bf16.msra.mxu0 %v1510
        %1533 = vmatprep.subr.bf16.mxu0 0
        %1534 = vmatpush2.bf16.msra.mxu0 0
        %1535 = vmatprep.subr.bf16.mxu0 0
        %1536 = vmatpush2.bf16.msra.mxu0 0
        %1537 = vmatprep.subr.bf16.mxu0 0
        %1538 = vmatpush2.bf16.msra.mxu0 0
        %1539 = vmatprep.subr.bf16.mxu0 0
        %1540 = vmatpush2.bf16.msra.mxu0 0
        %1541 = vmatprep.subr.bf16.mxu0 0
        %1542 = vmatpush2.bf16.msra.mxu0 0
        %1543 = vmatprep.subr.bf16.mxu0 0
        %1544 = vmatpush2.bf16.msra.mxu0 0
        %1545 = vmatprep.subr.bf16.mxu0 0
        %1546 = vmatpush2.bf16.msra.mxu0 0
        %1547 = vmatprep.subr.bf16.mxu0 0
        %1548 = vmatpush2.bf16.msra.mxu0 0
        %1549 = vmatprep.mubr.bf16.mxu0 0
        %1550 = vmatmul.mubr.bf16.gmra.mxu0 %v1515
        %v1551 = vpop.f32.mrf.mxu0
        %v1552 = vadd.f32 %v1500, %v1551
        %v1553 = vpop.f32.mrf.mxu0
        %v1554 = vpop.f32.mrf.mxu0
        %v1555 = vpop.f32.mrf.mxu0
        %1556 = vdwg.mxu0
        %v1557 = vadd.f32 %v410, %v1552
        %v1558 = vld [vmem:[%s6] sm:$0x1]
        %v1559 = vld [vmem:[%s7] sm:$0x1]
        %v1560 = vsel %vm413, %v1557, 0.0
        %1561 = vadd.xlane.f32.xlu0 %v1560
        %v1562 = vpop.xlane.xlu0 %1561
        %v1563 = vmul.f32 %v1562, %v417
        %v1564 = vsub.f32 %v1557, %v1563
        %v1565 = vmul.f32 %v1564, %v1564
        %v1566 = vsel %vm413, %v1565, 0.0
        %1567 = vadd.xlane.f32.xlu0 %v1566
        %v1568 = vpop.xlane.xlu0 %1567
        %v1569 = vmul.f32 %v1568, %v417
        %v1570 = vadd.f32 %v1569, 1e-05
        %v1571 = vrsqrt.pop %v1570
        %v1572 = vmul.f32 %v1564, %v1571
        %v1574 = vlaneseq
        %v1575 = vshrl.u32 %v1574, 7
        %v1576 = vsub.s32 0, %v1575
        %v1577 = vrot.slane %v1558, %v1576
        %v1579 = vmul.f32 %v1572, %v1577
        %v1581 = vlaneseq
        %v1582 = vshrl.u32 %v1581, 7
        %v1583 = vsub.s32 0, %v1582
        %v1584 = vrot.slane %v1559, %v1583
        %v1586 = vadd.f32 %v1579, %v1584
        %v1587 = vpack.c.bf16 %v1586, %v1586
        %v1588 = vld [vmem:[%s8] sm:$0xf]
        %v1589 = vld [vmem:[%s8 + $0x4] sm:$0xf]
        %v1590 = vld [vmem:[%s8 + $0x8] sm:$0xf]
        %v1591 = vld [vmem:[%s8 + $0xc] sm:$0xf]
        %v1592 = vld [vmem:[%s9] sm:$0x1]
        %v1594 = vlaneseq
        %v1595 = vshrl.u32 %v1594, 7
        %v1596 = vsub.s32 0, %v1595
        %v1597 = vrot.slane %v1592, %v1596
        %v1603 = vunpack.c.l.b16 %v1588
        %v1604 = vunpack.c.l.b16 %v1589
        %v1605 = vunpack.c.l.b16 %v1590
        %v1606 = vunpack.c.l.b16 %v1591
        %v1607 = vpack.c.b16 %v1604, %v1603
        %v1608 = vpack.c.b16 %v1606, %v1605
        %v1612 = vsel %vm413, %v1587, 0
        %1614 = vmatprep.subr.bf16.mxu0 0
        %1615 = vmatpush1.bf16.msra.mxu0 0
        %1616 = vmatprep.subr.bf16.mxu0 0
        %1617 = vmatpush1.bf16.msra.mxu0 0
        %1618 = vmatprep.subr.bf16.mxu0 0
        %1619 = vmatpush1.bf16.msra.mxu0 0
        %1620 = vmatprep.subr.bf16.mxu0 0
        %1621 = vmatpush1.bf16.msra.mxu0 0
        %1622 = vmatprep.subr.bf16.mxu0 0
        %1623 = vmatpush1.bf16.msra.mxu0 0
        %1624 = vmatprep.subr.bf16.mxu0 0
        %1625 = vmatpush1.bf16.msra.mxu0 0
        %1626 = vmatprep.subr.bf16.mxu0 0
        %1627 = vmatpush1.bf16.msra.mxu0 %v1608
        %1628 = vmatprep.subr.bf16.mxu0 0
        %1629 = vmatpush1.bf16.msra.mxu0 %v1607
        %1630 = vmatprep.subr.bf16.mxu0 0
        %1631 = vmatpush2.bf16.msra.mxu0 0
        %1632 = vmatprep.subr.bf16.mxu0 0
        %1633 = vmatpush2.bf16.msra.mxu0 0
        %1634 = vmatprep.subr.bf16.mxu0 0
        %1635 = vmatpush2.bf16.msra.mxu0 0
        %1636 = vmatprep.subr.bf16.mxu0 0
        %1637 = vmatpush2.bf16.msra.mxu0 0
        %1638 = vmatprep.subr.bf16.mxu0 0
        %1639 = vmatpush2.bf16.msra.mxu0 0
        %1640 = vmatprep.subr.bf16.mxu0 0
        %1641 = vmatpush2.bf16.msra.mxu0 0
        %1642 = vmatprep.subr.bf16.mxu0 0
        %1643 = vmatpush2.bf16.msra.mxu0 0
        %1644 = vmatprep.subr.bf16.mxu0 0
        %1645 = vmatpush2.bf16.msra.mxu0 0
        %1646 = vmatprep.mubr.bf16.mxu0 0
        %1647 = vmatmul.mubr.bf16.gmra.mxu0 %v1612
        %v1648 = vpop.f32.mrf.mxu0
        %v1649 = vadd.f32 %v1597, %v1648
        %v1650 = vpop.f32.mrf.mxu0
        %v1651 = vpop.f32.mrf.mxu0
        %v1652 = vpop.f32.mrf.mxu0
        %1653 = vdwg.mxu0
        %v1654 = vmul.f32 %v1649, 0.5
        %v1655 = vmul.f32 %v1649, %v1649
        %v1656 = vmul.f32 %v1655, %v1649
        %v1657 = vmul.f32 %v1656, 0.044715
        %v1658 = vadd.f32 %v1649, %v1657
        %v1659 = vmul.f32 %v1658, 0.7978846
        %v1660 = vtanh.pop %v1659
        %v1661 = vadd.f32 %v1660, 1.0
        %v1662 = vmul.f32 %v1654, %v1661
        %v1663 = vpack.c.bf16 %v1662, %v1662
        %v1664 = vld [vmem:[%s10] sm:$0xf]
        %v1665 = vld [vmem:[%s10 + $0x4] sm:$0xf]
        %v1666 = vld [vmem:[%s10 + $0x8] sm:$0xf]
        %v1667 = vld [vmem:[%s10 + $0xc] sm:$0xf]
        %v1668 = vld [vmem:[%s10 + $0x10] sm:$0xf]
        %v1669 = vld [vmem:[%s10 + $0x14] sm:$0xf]
        %v1670 = vld [vmem:[%s10 + $0x18] sm:$0xf]
        %v1671 = vld [vmem:[%s10 + $0x1c] sm:$0xf]
        %v1672 = vld [vmem:[%s10 + $0x20] sm:$0xf]
        %v1673 = vld [vmem:[%s10 + $0x24] sm:$0xf]
        %v1674 = vld [vmem:[%s10 + $0x28] sm:$0xf]
        %v1675 = vld [vmem:[%s10 + $0x2c] sm:$0xf]
        %v1676 = vld [vmem:[%s10 + $0x30] sm:$0xf]
        %v1677 = vld [vmem:[%s10 + $0x34] sm:$0xf]
        %v1678 = vld [vmem:[%s10 + $0x38] sm:$0xf]
        %v1679 = vld [vmem:[%s10 + $0x3c] sm:$0xf]
        %v1680 = vld [vmem:[%s11] sm:$0x1]
        %v1682 = vlaneseq
        %v1683 = vshrl.u32 %v1682, 7
        %v1684 = vsub.s32 0, %v1683
        %v1685 = vrot.slane %v1680, %v1684
        %v1703 = vunpack.c.l.b16 %v1664
        %v1704 = vunpack.c.l.b16 %v1665
        %v1705 = vunpack.c.l.b16 %v1666
        %v1706 = vunpack.c.l.b16 %v1667
        %v1707 = vunpack.c.l.b16 %v1668
        %v1708 = vunpack.c.l.b16 %v1669
        %v1709 = vunpack.c.l.b16 %v1670
        %v1710 = vunpack.c.l.b16 %v1671
        %v1711 = vunpack.c.l.b16 %v1672
        %v1712 = vunpack.c.l.b16 %v1673
        %v1713 = vunpack.c.l.b16 %v1674
        %v1714 = vunpack.c.l.b16 %v1675
        %v1715 = vunpack.c.l.b16 %v1676
        %v1716 = vunpack.c.l.b16 %v1677
        %v1717 = vunpack.c.l.b16 %v1678
        %v1718 = vunpack.c.l.b16 %v1679
        %v1719 = vpack.c.b16 %v1704, %v1703
        %v1720 = vpack.c.b16 %v1706, %v1705
        %v1721 = vpack.c.b16 %v1708, %v1707
        %v1722 = vpack.c.b16 %v1710, %v1709
        %v1723 = vpack.c.b16 %v1712, %v1711
        %v1724 = vpack.c.b16 %v1714, %v1713
        %v1725 = vpack.c.b16 %v1716, %v1715
        %v1726 = vpack.c.b16 %v1718, %v1717
        %1735 = vmatprep.subr.bf16.mxu0 0
        %1736 = vmatpush1.bf16.msra.mxu0 %v1726
        %1737 = vmatprep.subr.bf16.mxu0 0
        %1738 = vmatpush1.bf16.msra.mxu0 %v1725
        %1739 = vmatprep.subr.bf16.mxu0 0
        %1740 = vmatpush1.bf16.msra.mxu0 %v1724
        %1741 = vmatprep.subr.bf16.mxu0 0
        %1742 = vmatpush1.bf16.msra.mxu0 %v1723
        %1743 = vmatprep.subr.bf16.mxu0 0
        %1744 = vmatpush1.bf16.msra.mxu0 %v1722
        %1745 = vmatprep.subr.bf16.mxu0 0
        %1746 = vmatpush1.bf16.msra.mxu0 %v1721
        %1747 = vmatprep.subr.bf16.mxu0 0
        %1748 = vmatpush1.bf16.msra.mxu0 %v1720
        %1749 = vmatprep.subr.bf16.mxu0 0
        %1750 = vmatpush1.bf16.msra.mxu0 %v1719
        %1751 = vmatprep.subr.bf16.mxu0 0
        %1752 = vmatpush2.bf16.msra.mxu0 0
        %1753 = vmatprep.subr.bf16.mxu0 0
        %1754 = vmatpush2.bf16.msra.mxu0 0
        %1755 = vmatprep.subr.bf16.mxu0 0
        %1756 = vmatpush2.bf16.msra.mxu0 0
        %1757 = vmatprep.subr.bf16.mxu0 0
        %1758 = vmatpush2.bf16.msra.mxu0 0
        %1759 = vmatprep.subr.bf16.mxu0 0
        %1760 = vmatpush2.bf16.msra.mxu0 0
        %1761 = vmatprep.subr.bf16.mxu0 0
        %1762 = vmatpush2.bf16.msra.mxu0 0
        %1763 = vmatprep.subr.bf16.mxu0 0
        %1764 = vmatpush2.bf16.msra.mxu0 0
        %1765 = vmatprep.subr.bf16.mxu0 0
        %1766 = vmatpush2.bf16.msra.mxu0 0
        %1767 = vmatprep.mubr.bf16.mxu0 0
        %1768 = vmatmul.mubr.bf16.gmra.mxu0 %v1663
        %v1769 = vpop.f32.mrf.mxu0
        %v1770 = vadd.f32 %v1685, %v1769
        %v1771 = vpop.f32.mrf.mxu0
        %v1772 = vpop.f32.mrf.mxu0
        %v1773 = vpop.f32.mrf.mxu0
        %1774 = vdwg.mxu0
        %v1775 = vadd.f32 %v1557, %v1770
        %1776 = vst.msk [vmem:[%s404] sm:$0xff] %vm413, %v1775
        %s1777 = sand.u32 %s291, 1
        %s1778 = scalar_lea.sflag [#allocation3], %s1777
        %s1779 = sand.u32 %s291, 1
        %s1780 = smul.addr %s1779, 8
        %s1781 = scalar_lea.vmem [#allocation2], %s1780
        // Predicated region
        $region69: #{tpu_custom_call.1} parent=67 // pred_check
          %p1782 = pneg %p301
        $region70: #{tpu_custom_call.1} parent=67 // pred_check_branch
          %1784 = sbr.rel (%p1782) target = $region72
        $region71: #{tpu_custom_call.1} parent=67 // pred_region
          %s1786 = ssub.s32 128, 128
          %1787 = vsyncadd %s1778, %s1786
          %s1788 = smul.addr %s26, 128
          %s1789 = scalar_lea.hbm %s12, %s1788
          %s1791 = sshll.u32 %s1781, 4
          %s1792 = int_to_ptr.vmem [resolvable:$true] %s1791
          %1794 = dma.vmem_to_hbm [thread:$0]  %s1792, 128, %s1789, %s1778
        $region72: #{tpu_custom_call.1} parent=67 // pred_fallthru
          _
      $region68: #{tpu_custom_call.1} parent=5 // pred_fallthru
        _
      %p1795 = scmp.le.s32.totalorder 2, %s21
      // Predicated region
      $region73: #{tpu_custom_call.1} parent=5 // pred_check
        %p1796 = pneg %p1795
      $region74: #{tpu_custom_call.1} parent=5 // pred_check_branch
        %1798 = sbr.rel (%p1796) target = $region76
      $region75: #{tpu_custom_call.1} parent=5 // pred_region
        %s1799 = ssub.s32 %s21, 2
        // Predicated region
        $region77: #{tpu_custom_call.1} parent=75 // pred_check
          %p1800 = pneg %p307
        $region78: #{tpu_custom_call.1} parent=75 // pred_check_branch
          %1802 = sbr.rel (%p1800) target = $region80
        $region79: #{tpu_custom_call.1} parent=75 // pred_region
          %s1803 = sand.u32 %s292, 1
          %s1804 = scalar_lea.sflag [#allocation3], %s1803
          %s1805 = sand.u32 %s292, 1
          %s1806 = smul.addr %s1805, 8
          %s1807 = scalar_lea.vmem [#allocation2], %s1806
          %1808 = dma.done %s1804, 128
        $region80: #{tpu_custom_call.1} parent=75 // pred_fallthru
          _
      $region76: #{tpu_custom_call.1} parent=5 // pred_fallthru
        _
    $region6: #{tpu_custom_call.1} parent=1 // loop_footer
      %s25 = sadd.s32 1, %s21
    $region7: #{tpu_custom_call.1} parent=1 // loop_footer_branch
      %20 = sbr.rel target = $region3
    $region8: #{tpu_custom_call.1} parent=1 // loop_exit
      _
    %1809 = vsyncpa [#allocation3], 1
    %s1810 = scalar_lea.sflag [#allocation3], 1
    %1811 = vsyncpa %s1810, 1

</llo_original>
